<compile_context>
chip_gen: v5e
topology: v5e:2x2
jax: 0.10.0
libtpu: 0.0.40
codegen_flags: <defaults>
</compile_context>

<pallas_src>
import functools
import math

import jax
import jax.numpy as jnp
from jax.experimental import pallas as pl
from jax.experimental.pallas import tpu as pltpu


# ----------------------------------------------------------------------------- helpers

def _erf(x):
    # Abramowitz & Stegun 7.1.26 rational approximation (max abs err ~1.5e-7).
    a1, a2, a3, a4, a5 = 0.254829592, -0.284496736, 1.421413741, -1.453152027, 1.061405429
    p = 0.3275911
    sgn = jnp.sign(x)
    ax = jnp.abs(x)
    t = 1.0 / (1.0 + p * ax)
    poly = ((((a5 * t + a4) * t + a3) * t + a2) * t + a1) * t
    return sgn * (1.0 - poly * jnp.exp(-ax * ax))


_SQRT_2_OVER_PI = math.sqrt(2.0 / math.pi)


def _gelu(x, approx):
    if approx:
        # tanh approximation: routes through the EUP (bf16-capable on v6e/v7x); ~1e-3 max
        # absolute deviation vs exact erf-GELU.
        return 0.5 * x * (1.0 + jnp.tanh(_SQRT_2_OVER_PI * (x + 0.044715 * x * x * x)))
    # Exact erf-based GELU (matches torch.nn.GELU() to ~1.5e-7).
    return 0.5 * x * (1.0 + _erf(x * (1.0 / math.sqrt(2.0))))


def _layer_norm(x, gamma, beta, eps):
    # PyTorch LayerNorm: biased variance over the last dim, f32 math.
    mean = jnp.mean(x, axis=-1, keepdims=True)
    xc = x - mean
    var = jnp.mean(xc * xc, axis=-1, keepdims=True)
    inv = jax.lax.rsqrt(var + eps)
    return xc * inv * gamma + beta


# ----------------------------------------------------------------------------- kernel

def _encoder_layer_kernel(x_q_ref, x_kv_ref, mask_ref,
                          wq_ref, wk_ref, wv_ref, bq_ref, bk_ref, bv_ref,
                          wo_ref, bo_ref, wff1_ref, bff1_ref, wff2_ref, bff2_ref, ln_ref,
                          o_ref, k_scr, v_scr,
                          *, num_heads, eps, approx_gelu):
    H = num_heads
    TQ, C = x_q_ref.shape
    T = x_kv_ref.shape[0]
    Dh = C // H
    scale = 1.0 / math.sqrt(Dh)
    qi = pl.program_id(1)

    # --- K/V projection: computed once per batch element (first query tile), cached in
    #     bf16 VMEM scratch laid out per-head so later reads are leading-dim indexed.
    @pl.when(qi == 0)
    def _compute_kv():
        x_kv = x_kv_ref[...].astype(jnp.bfloat16)                       # (T, C)
        for h in range(H):
            kh = jnp.dot(x_kv, wk_ref[h], preferred_element_type=jnp.float32) + bk_ref[h]
            vh = jnp.dot(x_kv, wv_ref[h], preferred_element_type=jnp.float32) + bv_ref[h]
            k_scr[h] = kh.astype(jnp.bfloat16)                          # (T, Dh)
            v_scr[h] = vh.astype(jnp.bfloat16)

    x_q = x_q_ref[...]                                                   # (TQ, C) f32
    x_q_bf = x_q.astype(jnp.bfloat16)

    # Additive mask bias, hoisted out of the head loop (1.0 = valid key position).
    mask_bias = jnp.where(mask_ref[...] > 0.0, 0.0, -1e9)               # (1, T) f32

    # --- multi-head attention with per-head accumulation through Wo (no concat).
    acc = jnp.zeros((TQ, C), jnp.float32)
    for h in range(H):
        qh = (jnp.dot(x_q_bf, wq_ref[h], preferred_element_type=jnp.float32)
              + bq_ref[h]) * scale                                       # (TQ, Dh) f32
        kh = k_scr[h]                                                    # (T, Dh) bf16
        vh = v_scr[h]
        s = jax.lax.dot_general(qh.astype(jnp.bfloat16), kh,
                                (((1,), (1,)), ((), ())),
                                preferred_element_type=jnp.float32)      # (TQ, T) f32
        s = s + mask_bias
        m = jnp.max(s, axis=-1, keepdims=True)
        e = jnp.exp(s - m)
        p = e * pl.reciprocal(jnp.sum(e, axis=-1, keepdims=True), approx=True)
        ctx = jnp.dot(p.astype(jnp.bfloat16), vh,
                      preferred_element_type=jnp.float32)                # (TQ, Dh)
        acc = acc + jnp.dot(ctx.astype(jnp.bfloat16), wo_ref[h],
                            preferred_element_type=jnp.float32)          # (TQ, C)
    attn = acc + bo_ref[...]

    # --- residual + post-LN (dropout is identity at inference), f32 math.
    g1, b1 = ln_ref[0:1, :], ln_ref[1:2, :]
    g2, b2 = ln_ref[2:3, :], ln_ref[3:4, :]
    y = _layer_norm(x_q + attn, g1, b1, eps)

    # --- FFN: up-project, GELU, down-project (bf16 matmuls, f32 accumulation).
    h1 = jnp.dot(y.astype(jnp.bfloat16), wff1_ref[...],
                 preferred_element_type=jnp.float32) + bff1_ref[...]     # (TQ, F)
    h1 = _gelu(h1, approx_gelu)
    ff = jnp.dot(h1.astype(jnp.bfloat16), wff2_ref[...],
                 preferred_element_type=jnp.float32) + bff2_ref[...]     # (TQ, C)

    o_ref[...] = _layer_norm(y + ff, g2, b2, eps)


# ----------------------------------------------------------------------------- wrapper

def _pick_tq(T):
    if T <= 256:
        return T
    for tq in (256, 192, 128, 64, 32, 16, 8):
        if T % tq == 0:
            return tq
    return T


def _ceil_to(n, m):
    return -(-n // m) * m


def _padded_bytes(shape, elt_bytes):
    if len(shape) == 1:
        lead, r, c = 1, 1, shape[0]
    else:
        lead = 1
        for d in shape[:-2]:
            lead *= d
        r, c = shape[-2], shape[-1]
    return lead * _ceil_to(r, 8) * _ceil_to(c, 128) * elt_bytes


def _vmem_limit_bytes(T, TQ, C, F, H, Dh):
    # Single-buffered bf16 weights.
    w = sum(_padded_bytes(s, 2) for s in [(H, C, Dh)] * 3 + [(H, Dh, C), (C, F), (F, C)])
    b = sum(_padded_bytes(s, 4) for s in [(H, 1, Dh)] * 3 + [(1, C), (1, F), (1, C), (4, C)])
    # Double-buffered activation blocks (query tile, full x, mask, output tile).
    blk = 2 * (_padded_bytes((TQ, C), 4) + _padded_bytes((T, C), 4)
               + _padded_bytes((1, T), 4) + _padded_bytes((TQ, C), 4))
    # K/V scratch + transient working set (scores/softmax, FFN hidden, accumulators).
    scr = 2 * _padded_bytes((H, T, Dh), 2)
    work = (3 * _padded_bytes((TQ, T), 4) + 2 * _padded_bytes((TQ, F), 4)
            + 6 * _padded_bytes((TQ, C), 4))
    total = w + b + blk + scr + work
    return int(min(100 * 2 ** 20, max(24 * 2 ** 20, 3 * total // 2)))


def transformer_encoder_layer(x, mask, params, *, num_heads, eps=1e-12,
                              approx_gelu=True, tq=None):
    """x: (B, T, C) f32;  mask: (B, 1, T), >0 (True) where the key position is valid."""
    B, T, C = x.shape
    assert C % num_heads == 0, "hidden_size must be divisible by num_heads"
    H = num_heads
    Dh = C // H
    F = params["wff1"].shape[1]
    TQ = tq if tq is not None else _pick_tq(T)
    assert T % TQ == 0, "sequence length must be divisible by the query tile"
    NQ = T // TQ

    x = x.astype(jnp.float32)
    mask = mask.astype(jnp.float32)

    # bf16 weights for the MXU (kernel accumulates in f32); biases / LayerNorm stay f32.
    bf = jnp.bfloat16
    wq, wk, wv = params["wq"].astype(bf), params["wk"].astype(bf), params["wv"].astype(bf)
    wo, wff1, wff2 = params["wo"].astype(bf), params["wff1"].astype(bf), params["wff2"].astype(bf)

    kernel = functools.partial(_encoder_layer_kernel, num_heads=H, eps=eps,
                               approx_gelu=approx_gelu)
    operands = (x, x, mask,
                wq, wk, wv, params["bq"], params["bk"], params["bv"],
                wo, params["bo"], wff1, params["bff1"], wff2, params["bff2"], params["ln"])

    def _run(single_buffer_weights):
        def const_spec(shape):
            nd = len(shape)
            idx = lambda b, qi, _nd=nd: (0,) * _nd
            if single_buffer_weights:
                # Constant index map -> single-buffer the weights (halves their VMEM).
                return pl.BlockSpec(shape, idx, pipeline_mode=pl.Buffered(1))
            return pl.BlockSpec(shape, idx)

        grid_spec = pltpu.PrefetchScalarGridSpec(
            num_scalar_prefetch=0,
            grid=(B, NQ),
            in_specs=[
                pl.BlockSpec((None, TQ, C), lambda b, qi: (b, qi, 0)),   # x: query tile
                pl.BlockSpec((None, T, C), lambda b, qi: (b, 0, 0)),     # x: full seq (K/V)
                pl.BlockSpec((None, 1, T), lambda b, qi: (b, 0, 0)),     # mask
                const_spec((H, C, Dh)),    # wq (per-head)
                const_spec((H, C, Dh)),    # wk
                const_spec((H, C, Dh)),    # wv
                const_spec((H, 1, Dh)),    # bq
                const_spec((H, 1, Dh)),    # bk
                const_spec((H, 1, Dh)),    # bv
                const_spec((H, Dh, C)),    # wo (per-head)
                const_spec((1, C)),        # bo
                const_spec((C, F)),        # wff1
                const_spec((1, F)),        # bff1
                const_spec((F, C)),        # wff2
                const_spec((1, C)),        # bff2
                const_spec((4, C)),        # ln: gamma1, beta1, gamma2, beta2
            ],
            out_specs=pl.BlockSpec((None, TQ, C), lambda b, qi: (b, qi, 0)),
            scratch_shapes=[pltpu.VMEM((H, T, Dh), bf),     # cached K heads
                            pltpu.VMEM((H, T, Dh), bf)],    # cached V heads
        )
        return pl.pallas_call(
            kernel,
            out_shape=jax.ShapeDtypeStruct((B, T, C), jnp.float32),
            grid_spec=grid_spec,
            compiler_params=pltpu.CompilerParams(
                dimension_semantics=("parallel", "arbitrary"),
                vmem_limit_bytes=_vmem_limit_bytes(T, TQ, C, F, H, Dh)),
        )(*operands)

    try:
        return _run(single_buffer_weights=True)
    except Exception:
        # Fall back to default double-buffering if pl.Buffered(1) isn't supported by this
        # jax/Mosaic combination (same math, only more weight VMEM).
        return _run(single_buffer_weights=False)


# ----------------------------------------------------------------------------- reference

def reference_forward(x, mask, params, *, num_heads, eps=1e-12):
    """Pure-JAX f32 reference with exact erf-GELU (PyTorch semantics)."""
    Dh = params["wq"].shape[-1]
    q = jnp.einsum("btc,hcd->bhtd", x, params["wq"]) + params["bq"][None]
    k = jnp.einsum("btc,hcd->bhtd", x, params["wk"]) + params["bk"][None]
    v = jnp.einsum("btc,hcd->bhtd", x, params["wv"]) + params["bv"][None]
    s = jnp.einsum("bhqd,bhkd->bhqk", q, k) / math.sqrt(Dh)
    s = jnp.where(mask[:, :, None, :] > 0, s, -1e9)
    p = jax.nn.softmax(s, axis=-1)
    ctx = jnp.einsum("bhqk,bhkd->bhqd", p, v)
    attn = jnp.einsum("bhqd,hdc->bqc", ctx, params["wo"]) + params["bo"]

    ln = params["ln"]

    def layer_norm(u, g, b):
        mu = u.mean(-1, keepdims=True)
        var = ((u - mu) ** 2).mean(-1, keepdims=True)
        return (u - mu) * jax.lax.rsqrt(var + eps) * g + b

    y = layer_norm(x + attn, ln[0], ln[1])
    h1 = jax.nn.gelu(y @ params["wff1"] + params["bff1"], approximate=False)
    ff = h1 @ params["wff2"] + params["bff2"]
    return layer_norm(y + ff, ln[2], ln[3])


def init_params(key, hidden_size, num_heads, feed_forward_size=None):
    C = hidden_size
    H = num_heads
    F = feed_forward_size if feed_forward_size is not None else 4 * C
    Dh = C // H
    ks = jax.random.split(key, 12)
    std = 0.02

    def dense(k, shape):
        return jax.random.normal(k, shape, jnp.float32) * std

    # Standard (C, C) projections reshaped into per-head layout (same math as torch MHA).
    wq = dense(ks[0], (C, C)).reshape(C, H, Dh).transpose(1, 0, 2)   # (H, C, Dh)
    wk = dense(ks[1], (C, C)).reshape(C, H, Dh).transpose(1, 0, 2)
    wv = dense(ks[2], (C, C)).reshape(C, H, Dh).transpose(1, 0, 2)
    wo = dense(ks[3], (C, C)).reshape(H, Dh, C)                      # (H, Dh, C)
    return {
        "wq": wq, "wk": wk, "wv": wv,
        "bq": dense(ks[4], (H, 1, Dh)),
        "bk": dense(ks[5], (H, 1, Dh)),
        "bv": dense(ks[6], (H, 1, Dh)),
        "wo": wo, "bo": dense(ks[7], (1, C)),
        "wff1": dense(ks[8], (C, F)), "bff1": dense(ks[9], (1, F)),
        "wff2": dense(ks[10], (F, C)), "bff2": dense(ks[11], (1, C)),
        # LayerNorm affine params rows: [gamma1, beta1, gamma2, beta2]
        "ln": jnp.stack([jnp.ones((C,), jnp.float32), jnp.zeros((C,), jnp.float32),
                         jnp.ones((C,), jnp.float32), jnp.zeros((C,), jnp.float32)], 0),
    }


# ----------------------------------------------------------------------------- demo

if __name__ == "__main__":
    B, T, C = 2, 8, 32
    NUM_HEADS = 4
    D_FF = 4 * C          # default feed_forward_size = 4 * hidden_size
    EPS = 1e-12           # module default layer_norm_eps

    root = jax.random.PRNGKey(0)
    kx, kp = jax.random.split(root)
    x = jax.random.normal(kx, (B, T, C), jnp.float32)
    mask = jnp.ones((B, 1, T), jnp.float32)   # all key positions valid (True)
    params = init_params(kp, C, NUM_HEADS, D_FF)

    out = transformer_encoder_layer(x, mask, params, num_heads=NUM_HEADS, eps=EPS)
    jax.block_until_ready(out)

    ref = reference_forward(x, mask, params, num_heads=NUM_HEADS, eps=EPS)
    assert out.shape == (B, T, C) and out.dtype == jnp.float32
    assert bool(jnp.isfinite(out).all())
    # bf16 matmuls + approx reciprocal/tanh-GELU vs exact-f32 reference -> loose tolerance.
    assert float(jnp.max(jnp.abs(out - ref))) < 5e-2
    print("KERNEL_OK")
</pallas_src>

<mosaic_0001>
module attributes {stable_mosaic.version = 11 : i64} {
  func.func @_encoder_layer_kernel(%arg0: i32, %arg1: i32, %arg2: memref<1x8x32xf32, #tpu.memory_space<vmem>>, %arg3: memref<1x8x32xf32, #tpu.memory_space<vmem>>, %arg4: memref<1x1x8xf32, #tpu.memory_space<vmem>>, %arg5: memref<4x32x8xbf16, #tpu.memory_space<vmem>>, %arg6: memref<4x32x8xbf16, #tpu.memory_space<vmem>>, %arg7: memref<4x32x8xbf16, #tpu.memory_space<vmem>>, %arg8: memref<4x1x8xf32, #tpu.memory_space<vmem>>, %arg9: memref<4x1x8xf32, #tpu.memory_space<vmem>>, %arg10: memref<4x1x8xf32, #tpu.memory_space<vmem>>, %arg11: memref<4x8x32xbf16, #tpu.memory_space<vmem>>, %arg12: memref<1x32xf32, #tpu.memory_space<vmem>>, %arg13: memref<32x128xbf16, #tpu.memory_space<vmem>>, %arg14: memref<1x128xf32, #tpu.memory_space<vmem>>, %arg15: memref<128x32xbf16, #tpu.memory_space<vmem>>, %arg16: memref<1x32xf32, #tpu.memory_space<vmem>>, %arg17: memref<4x32xf32, #tpu.memory_space<vmem>>, %arg18: memref<1x8x32xf32, #tpu.memory_space<vmem>>, %arg19: memref<4x8x8xbf16, #tpu.memory_space<vmem>>, %arg20: memref<4x8x8xbf16, #tpu.memory_space<vmem>>) attributes {dimension_semantics = [#tpu.dimension_semantics<parallel>, #tpu.dimension_semantics<arbitrary>], iteration_bounds = array<i64: 2, 1>, scalar_prefetch = 0 : i64, scratch_operands = 2 : i64, tpu.core_type = #tpu.core_type<tc>, window_params = [{transform_indices = @transform_0, window_bounds = array<i64: 1, 8, 32>}, {transform_indices = @transform_1, window_bounds = array<i64: 1, 8, 32>}, {transform_indices = @transform_2, window_bounds = array<i64: 1, 1, 8>}, {pipeline_mode = #tpu.pipeline_mode<synchronous>, transform_indices = @transform_3, window_bounds = array<i64: 4, 32, 8>}, {pipeline_mode = #tpu.pipeline_mode<synchronous>, transform_indices = @transform_4, window_bounds = array<i64: 4, 32, 8>}, {pipeline_mode = #tpu.pipeline_mode<synchronous>, transform_indices = @transform_5, window_bounds = array<i64: 4, 32, 8>}, {pipeline_mode = #tpu.pipeline_mode<synchronous>, transform_indices = @transform_6, window_bounds = array<i64: 4, 1, 8>}, {pipeline_mode = #tpu.pipeline_mode<synchronous>, transform_indices = @transform_7, window_bounds = array<i64: 4, 1, 8>}, {pipeline_mode = #tpu.pipeline_mode<synchronous>, transform_indices = @transform_8, window_bounds = array<i64: 4, 1, 8>}, {pipeline_mode = #tpu.pipeline_mode<synchronous>, transform_indices = @transform_9, window_bounds = array<i64: 4, 8, 32>}, {pipeline_mode = #tpu.pipeline_mode<synchronous>, transform_indices = @transform_10, window_bounds = array<i64: 1, 32>}, {pipeline_mode = #tpu.pipeline_mode<synchronous>, transform_indices = @transform_11, window_bounds = array<i64: 32, 128>}, {pipeline_mode = #tpu.pipeline_mode<synchronous>, transform_indices = @transform_12, window_bounds = array<i64: 1, 128>}, {pipeline_mode = #tpu.pipeline_mode<synchronous>, transform_indices = @transform_13, window_bounds = array<i64: 128, 32>}, {pipeline_mode = #tpu.pipeline_mode<synchronous>, transform_indices = @transform_14, window_bounds = array<i64: 1, 32>}, {pipeline_mode = #tpu.pipeline_mode<synchronous>, transform_indices = @transform_15, window_bounds = array<i64: 4, 32>}, {transform_indices = @transform_16, window_bounds = array<i64: 1, 8, 32>}]} {
    %c0_i32 = arith.constant 0 : i32
    %0 = arith.cmpi eq, %arg1, %c0_i32 : i32
    %1 = arith.extui %0 : i1 to i32
    %c0_i32_0 = arith.constant 0 : i32
    %2 = arith.cmpi ne, %1, %c0_i32_0 : i32
    scf.if %2 {
      %c0_131 = arith.constant 0 : index
      %c0_132 = arith.constant 0 : index
      %c0_133 = arith.constant 0 : index
      %227 = vector.load %arg3[%c0_131, %c0_132, %c0_133] : memref<1x8x32xf32, #tpu.memory_space<vmem>>, vector<1x8x32xf32>
      %228 = vector.shape_cast %227 : vector<1x8x32xf32> to vector<8x32xf32>
      %229 = arith.truncf %228 : vector<8x32xf32> to vector<8x32xbf16>
      %c0_134 = arith.constant 0 : index
      %c0_135 = arith.constant 0 : index
      %c0_136 = arith.constant 0 : index
      %230 = vector.load %arg6[%c0_134, %c0_135, %c0_136] : memref<4x32x8xbf16, #tpu.memory_space<vmem>>, vector<1x32x8xbf16>
      %231 = vector.shape_cast %230 : vector<1x32x8xbf16> to vector<32x8xbf16>
      %cst_137 = arith.constant dense<0.000000e+00> : vector<8x8xf32>
      %232 = tpu.matmul %229, %231, %cst_137 {dimension_numbers = #tpu.dot_dimension_numbers<[1], [0], [0], [1], [0, 0, 1, 1], [], []>} : vector<8x32xbf16>, vector<32x8xbf16>, vector<8x8xf32> -> vector<8x8xf32>
      %c0_138 = arith.constant 0 : index
      %c0_139 = arith.constant 0 : index
      %c0_140 = arith.constant 0 : index
      %233 = vector.load %arg9[%c0_138, %c0_139, %c0_140] : memref<4x1x8xf32, #tpu.memory_space<vmem>>, vector<1x1x8xf32>
      %234 = vector.shape_cast %233 : vector<1x1x8xf32> to vector<1x8xf32>
      %235 = vector.broadcast %234 : vector<1x8xf32> to vector<8x8xf32>
      %236 = arith.addf %232, %235 : vector<8x8xf32>
      %c0_141 = arith.constant 0 : index
      %c0_142 = arith.constant 0 : index
      %c0_143 = arith.constant 0 : index
      %237 = vector.load %arg7[%c0_141, %c0_142, %c0_143] : memref<4x32x8xbf16, #tpu.memory_space<vmem>>, vector<1x32x8xbf16>
      %238 = vector.shape_cast %237 : vector<1x32x8xbf16> to vector<32x8xbf16>
      %cst_144 = arith.constant dense<0.000000e+00> : vector<8x8xf32>
      %239 = tpu.matmul %229, %238, %cst_144 {dimension_numbers = #tpu.dot_dimension_numbers<[1], [0], [0], [1], [0, 0, 1, 1], [], []>} : vector<8x32xbf16>, vector<32x8xbf16>, vector<8x8xf32> -> vector<8x8xf32>
      %c0_145 = arith.constant 0 : index
      %c0_146 = arith.constant 0 : index
      %c0_147 = arith.constant 0 : index
      %240 = vector.load %arg10[%c0_145, %c0_146, %c0_147] : memref<4x1x8xf32, #tpu.memory_space<vmem>>, vector<1x1x8xf32>
      %241 = vector.shape_cast %240 : vector<1x1x8xf32> to vector<1x8xf32>
      %242 = vector.broadcast %241 : vector<1x8xf32> to vector<8x8xf32>
      %243 = arith.addf %239, %242 : vector<8x8xf32>
      %244 = arith.truncf %236 : vector<8x8xf32> to vector<8x8xbf16>
      %c0_148 = arith.constant 0 : index
      %c0_149 = arith.constant 0 : index
      %c0_150 = arith.constant 0 : index
      %245 = vector.load %arg19[%c0_148, %c0_149, %c0_150] : memref<4x8x8xbf16, #tpu.memory_space<vmem>>, vector<1x8x8xbf16>
      %246 = vector.shape_cast %245 : vector<1x8x8xbf16> to vector<8x8xbf16>
      %247 = vector.shape_cast %244 : vector<8x8xbf16> to vector<1x8x8xbf16>
      tpu.vector_store %arg19[%c0_148, %c0_149, %c0_150], %247 {strides = array<i32>} : memref<4x8x8xbf16, #tpu.memory_space<vmem>>, vector<1x8x8xbf16>,
      %248 = arith.truncf %243 : vector<8x8xf32> to vector<8x8xbf16>
      %c0_151 = arith.constant 0 : index
      %c0_152 = arith.constant 0 : index
      %c0_153 = arith.constant 0 : index
      %249 = vector.load %arg20[%c0_151, %c0_152, %c0_153] : memref<4x8x8xbf16, #tpu.memory_space<vmem>>, vector<1x8x8xbf16>
      %250 = vector.shape_cast %249 : vector<1x8x8xbf16> to vector<8x8xbf16>
      %251 = vector.shape_cast %248 : vector<8x8xbf16> to vector<1x8x8xbf16>
      tpu.vector_store %arg20[%c0_151, %c0_152, %c0_153], %251 {strides = array<i32>} : memref<4x8x8xbf16, #tpu.memory_space<vmem>>, vector<1x8x8xbf16>,
      %c1_154 = arith.constant 1 : index
      %c0_155 = arith.constant 0 : index
      %c0_156 = arith.constant 0 : index
      %252 = vector.load %arg6[%c1_154, %c0_155, %c0_156] : memref<4x32x8xbf16, #tpu.memory_space<vmem>>, vector<1x32x8xbf16>
      %253 = vector.shape_cast %252 : vector<1x32x8xbf16> to vector<32x8xbf16>
      %cst_157 = arith.constant dense<0.000000e+00> : vector<8x8xf32>
      %254 = tpu.matmul %229, %253, %cst_157 {dimension_numbers = #tpu.dot_dimension_numbers<[1], [0], [0], [1], [0, 0, 1, 1], [], []>} : vector<8x32xbf16>, vector<32x8xbf16>, vector<8x8xf32> -> vector<8x8xf32>
      %c1_158 = arith.constant 1 : index
      %c0_159 = arith.constant 0 : index
      %c0_160 = arith.constant 0 : index
      %255 = vector.load %arg9[%c1_158, %c0_159, %c0_160] : memref<4x1x8xf32, #tpu.memory_space<vmem>>, vector<1x1x8xf32>
      %256 = vector.shape_cast %255 : vector<1x1x8xf32> to vector<1x8xf32>
      %257 = vector.broadcast %256 : vector<1x8xf32> to vector<8x8xf32>
      %258 = arith.addf %254, %257 : vector<8x8xf32>
      %c1_161 = arith.constant 1 : index
      %c0_162 = arith.constant 0 : index
      %c0_163 = arith.constant 0 : index
      %259 = vector.load %arg7[%c1_161, %c0_162, %c0_163] : memref<4x32x8xbf16, #tpu.memory_space<vmem>>, vector<1x32x8xbf16>
      %260 = vector.shape_cast %259 : vector<1x32x8xbf16> to vector<32x8xbf16>
      %cst_164 = arith.constant dense<0.000000e+00> : vector<8x8xf32>
      %261 = tpu.matmul %229, %260, %cst_164 {dimension_numbers = #tpu.dot_dimension_numbers<[1], [0], [0], [1], [0, 0, 1, 1], [], []>} : vector<8x32xbf16>, vector<32x8xbf16>, vector<8x8xf32> -> vector<8x8xf32>
      %c1_165 = arith.constant 1 : index
      %c0_166 = arith.constant 0 : index
      %c0_167 = arith.constant 0 : index
      %262 = vector.load %arg10[%c1_165, %c0_166, %c0_167] : memref<4x1x8xf32, #tpu.memory_space<vmem>>, vector<1x1x8xf32>
      %263 = vector.shape_cast %262 : vector<1x1x8xf32> to vector<1x8xf32>
      %264 = vector.broadcast %263 : vector<1x8xf32> to vector<8x8xf32>
      %265 = arith.addf %261, %264 : vector<8x8xf32>
      %266 = arith.truncf %258 : vector<8x8xf32> to vector<8x8xbf16>
      %c1_168 = arith.constant 1 : index
      %c0_169 = arith.constant 0 : index
      %c0_170 = arith.constant 0 : index
      %267 = vector.load %arg19[%c1_168, %c0_169, %c0_170] : memref<4x8x8xbf16, #tpu.memory_space<vmem>>, vector<1x8x8xbf16>
      %268 = vector.shape_cast %267 : vector<1x8x8xbf16> to vector<8x8xbf16>
      %269 = vector.shape_cast %266 : vector<8x8xbf16> to vector<1x8x8xbf16>
      tpu.vector_store %arg19[%c1_168, %c0_169, %c0_170], %269 {strides = array<i32>} : memref<4x8x8xbf16, #tpu.memory_space<vmem>>, vector<1x8x8xbf16>,
      %270 = arith.truncf %265 : vector<8x8xf32> to vector<8x8xbf16>
      %c1_171 = arith.constant 1 : index
      %c0_172 = arith.constant 0 : index
      %c0_173 = arith.constant 0 : index
      %271 = vector.load %arg20[%c1_171, %c0_172, %c0_173] : memref<4x8x8xbf16, #tpu.memory_space<vmem>>, vector<1x8x8xbf16>
      %272 = vector.shape_cast %271 : vector<1x8x8xbf16> to vector<8x8xbf16>
      %273 = vector.shape_cast %270 : vector<8x8xbf16> to vector<1x8x8xbf16>
      tpu.vector_store %arg20[%c1_171, %c0_172, %c0_173], %273 {strides = array<i32>} : memref<4x8x8xbf16, #tpu.memory_space<vmem>>, vector<1x8x8xbf16>,
      %c2_174 = arith.constant 2 : index
      %c0_175 = arith.constant 0 : index
      %c0_176 = arith.constant 0 : index
      %274 = vector.load %arg6[%c2_174, %c0_175, %c0_176] : memref<4x32x8xbf16, #tpu.memory_space<vmem>>, vector<1x32x8xbf16>
      %275 = vector.shape_cast %274 : vector<1x32x8xbf16> to vector<32x8xbf16>
      %cst_177 = arith.constant dense<0.000000e+00> : vector<8x8xf32>
      %276 = tpu.matmul %229, %275, %cst_177 {dimension_numbers = #tpu.dot_dimension_numbers<[1], [0], [0], [1], [0, 0, 1, 1], [], []>} : vector<8x32xbf16>, vector<32x8xbf16>, vector<8x8xf32> -> vector<8x8xf32>
      %c2_178 = arith.constant 2 : index
      %c0_179 = arith.constant 0 : index
      %c0_180 = arith.constant 0 : index
      %277 = vector.load %arg9[%c2_178, %c0_179, %c0_180] : memref<4x1x8xf32, #tpu.memory_space<vmem>>, vector<1x1x8xf32>
      %278 = vector.shape_cast %277 : vector<1x1x8xf32> to vector<1x8xf32>
      %279 = vector.broadcast %278 : vector<1x8xf32> to vector<8x8xf32>
      %280 = arith.addf %276, %279 : vector<8x8xf32>
      %c2_181 = arith.constant 2 : index
      %c0_182 = arith.constant 0 : index
      %c0_183 = arith.constant 0 : index
      %281 = vector.load %arg7[%c2_181, %c0_182, %c0_183] : memref<4x32x8xbf16, #tpu.memory_space<vmem>>, vector<1x32x8xbf16>
      %282 = vector.shape_cast %281 : vector<1x32x8xbf16> to vector<32x8xbf16>
      %cst_184 = arith.constant dense<0.000000e+00> : vector<8x8xf32>
      %283 = tpu.matmul %229, %282, %cst_184 {dimension_numbers = #tpu.dot_dimension_numbers<[1], [0], [0], [1], [0, 0, 1, 1], [], []>} : vector<8x32xbf16>, vector<32x8xbf16>, vector<8x8xf32> -> vector<8x8xf32>
      %c2_185 = arith.constant 2 : index
      %c0_186 = arith.constant 0 : index
      %c0_187 = arith.constant 0 : index
      %284 = vector.load %arg10[%c2_185, %c0_186, %c0_187] : memref<4x1x8xf32, #tpu.memory_space<vmem>>, vector<1x1x8xf32>
      %285 = vector.shape_cast %284 : vector<1x1x8xf32> to vector<1x8xf32>
      %286 = vector.broadcast %285 : vector<1x8xf32> to vector<8x8xf32>
      %287 = arith.addf %283, %286 : vector<8x8xf32>
      %288 = arith.truncf %280 : vector<8x8xf32> to vector<8x8xbf16>
      %c2_188 = arith.constant 2 : index
      %c0_189 = arith.constant 0 : index
      %c0_190 = arith.constant 0 : index
      %289 = vector.load %arg19[%c2_188, %c0_189, %c0_190] : memref<4x8x8xbf16, #tpu.memory_space<vmem>>, vector<1x8x8xbf16>
      %290 = vector.shape_cast %289 : vector<1x8x8xbf16> to vector<8x8xbf16>
      %291 = vector.shape_cast %288 : vector<8x8xbf16> to vector<1x8x8xbf16>
      tpu.vector_store %arg19[%c2_188, %c0_189, %c0_190], %291 {strides = array<i32>} : memref<4x8x8xbf16, #tpu.memory_space<vmem>>, vector<1x8x8xbf16>,
      %292 = arith.truncf %287 : vector<8x8xf32> to vector<8x8xbf16>
      %c2_191 = arith.constant 2 : index
      %c0_192 = arith.constant 0 : index
      %c0_193 = arith.constant 0 : index
      %293 = vector.load %arg20[%c2_191, %c0_192, %c0_193] : memref<4x8x8xbf16, #tpu.memory_space<vmem>>, vector<1x8x8xbf16>
      %294 = vector.shape_cast %293 : vector<1x8x8xbf16> to vector<8x8xbf16>
      %295 = vector.shape_cast %292 : vector<8x8xbf16> to vector<1x8x8xbf16>
      tpu.vector_store %arg20[%c2_191, %c0_192, %c0_193], %295 {strides = array<i32>} : memref<4x8x8xbf16, #tpu.memory_space<vmem>>, vector<1x8x8xbf16>,
      %c3_194 = arith.constant 3 : index
      %c0_195 = arith.constant 0 : index
      %c0_196 = arith.constant 0 : index
      %296 = vector.load %arg6[%c3_194, %c0_195, %c0_196] : memref<4x32x8xbf16, #tpu.memory_space<vmem>>, vector<1x32x8xbf16>
      %297 = vector.shape_cast %296 : vector<1x32x8xbf16> to vector<32x8xbf16>
      %cst_197 = arith.constant dense<0.000000e+00> : vector<8x8xf32>
      %298 = tpu.matmul %229, %297, %cst_197 {dimension_numbers = #tpu.dot_dimension_numbers<[1], [0], [0], [1], [0, 0, 1, 1], [], []>} : vector<8x32xbf16>, vector<32x8xbf16>, vector<8x8xf32> -> vector<8x8xf32>
      %c3_198 = arith.constant 3 : index
      %c0_199 = arith.constant 0 : index
      %c0_200 = arith.constant 0 : index
      %299 = vector.load %arg9[%c3_198, %c0_199, %c0_200] : memref<4x1x8xf32, #tpu.memory_space<vmem>>, vector<1x1x8xf32>
      %300 = vector.shape_cast %299 : vector<1x1x8xf32> to vector<1x8xf32>
      %301 = vector.broadcast %300 : vector<1x8xf32> to vector<8x8xf32>
      %302 = arith.addf %298, %301 : vector<8x8xf32>
      %c3_201 = arith.constant 3 : index
      %c0_202 = arith.constant 0 : index
      %c0_203 = arith.constant 0 : index
      %303 = vector.load %arg7[%c3_201, %c0_202, %c0_203] : memref<4x32x8xbf16, #tpu.memory_space<vmem>>, vector<1x32x8xbf16>
      %304 = vector.shape_cast %303 : vector<1x32x8xbf16> to vector<32x8xbf16>
      %cst_204 = arith.constant dense<0.000000e+00> : vector<8x8xf32>
      %305 = tpu.matmul %229, %304, %cst_204 {dimension_numbers = #tpu.dot_dimension_numbers<[1], [0], [0], [1], [0, 0, 1, 1], [], []>} : vector<8x32xbf16>, vector<32x8xbf16>, vector<8x8xf32> -> vector<8x8xf32>
      %c3_205 = arith.constant 3 : index
      %c0_206 = arith.constant 0 : index
      %c0_207 = arith.constant 0 : index
      %306 = vector.load %arg10[%c3_205, %c0_206, %c0_207] : memref<4x1x8xf32, #tpu.memory_space<vmem>>, vector<1x1x8xf32>
      %307 = vector.shape_cast %306 : vector<1x1x8xf32> to vector<1x8xf32>
      %308 = vector.broadcast %307 : vector<1x8xf32> to vector<8x8xf32>
      %309 = arith.addf %305, %308 : vector<8x8xf32>
      %310 = arith.truncf %302 : vector<8x8xf32> to vector<8x8xbf16>
      %c3_208 = arith.constant 3 : index
      %c0_209 = arith.constant 0 : index
      %c0_210 = arith.constant 0 : index
      %311 = vector.load %arg19[%c3_208, %c0_209, %c0_210] : memref<4x8x8xbf16, #tpu.memory_space<vmem>>, vector<1x8x8xbf16>
      %312 = vector.shape_cast %311 : vector<1x8x8xbf16> to vector<8x8xbf16>
      %313 = vector.shape_cast %310 : vector<8x8xbf16> to vector<1x8x8xbf16>
      tpu.vector_store %arg19[%c3_208, %c0_209, %c0_210], %313 {strides = array<i32>} : memref<4x8x8xbf16, #tpu.memory_space<vmem>>, vector<1x8x8xbf16>,
      %314 = arith.truncf %309 : vector<8x8xf32> to vector<8x8xbf16>
      %c3_211 = arith.constant 3 : index
      %c0_212 = arith.constant 0 : index
      %c0_213 = arith.constant 0 : index
      %315 = vector.load %arg20[%c3_211, %c0_212, %c0_213] : memref<4x8x8xbf16, #tpu.memory_space<vmem>>, vector<1x8x8xbf16>
      %316 = vector.shape_cast %315 : vector<1x8x8xbf16> to vector<8x8xbf16>
      %317 = vector.shape_cast %314 : vector<8x8xbf16> to vector<1x8x8xbf16>
      tpu.vector_store %arg20[%c3_211, %c0_212, %c0_213], %317 {strides = array<i32>} : memref<4x8x8xbf16, #tpu.memory_space<vmem>>, vector<1x8x8xbf16>,
    } else {
    }
    %c0 = arith.constant 0 : index
    %c0_1 = arith.constant 0 : index
    %c0_2 = arith.constant 0 : index
    %3 = vector.load %arg2[%c0, %c0_1, %c0_2] : memref<1x8x32xf32, #tpu.memory_space<vmem>>, vector<1x8x32xf32>
    %4 = vector.shape_cast %3 : vector<1x8x32xf32> to vector<8x32xf32>
    %5 = arith.truncf %4 : vector<8x32xf32> to vector<8x32xbf16>
    %c0_3 = arith.constant 0 : index
    %c0_4 = arith.constant 0 : index
    %c0_5 = arith.constant 0 : index
    %6 = vector.load %arg4[%c0_3, %c0_4, %c0_5] : memref<1x1x8xf32, #tpu.memory_space<vmem>>, vector<1x1x8xf32>
    %7 = vector.shape_cast %6 : vector<1x1x8xf32> to vector<1x8xf32>
    %cst = arith.constant 0.000000e+00 : f32
    %8 = vector.broadcast %cst : f32 to vector<1x8xf32>
    %9 = arith.cmpf ogt, %7, %8 : vector<1x8xf32>
    %cst_6 = arith.constant 0.000000e+00 : f32
    %cst_7 = arith.constant -1.000000e+09 : f32
    %10 = vector.broadcast %cst_6 : f32 to vector<1x8xf32>
    %11 = vector.broadcast %cst_7 : f32 to vector<1x8xf32>
    %12 = arith.select %9, %10, %11 : vector<1x8xi1>, vector<1x8xf32>
    %cst_8 = arith.constant 0.000000e+00 : f32
    %13 = vector.broadcast %cst_8 : f32 to vector<8x32xf32>
    %c0_9 = arith.constant 0 : index
    %c0_10 = arith.constant 0 : index
    %c0_11 = arith.constant 0 : index
    %14 = vector.load %arg5[%c0_9, %c0_10, %c0_11] : memref<4x32x8xbf16, #tpu.memory_space<vmem>>, vector<1x32x8xbf16>
    %15 = vector.shape_cast %14 : vector<1x32x8xbf16> to vector<32x8xbf16>
    %cst_12 = arith.constant dense<0.000000e+00> : vector<8x8xf32>
    %16 = tpu.matmul %5, %15, %cst_12 {dimension_numbers = #tpu.dot_dimension_numbers<[1], [0], [0], [1], [0, 0, 1, 1], [], []>} : vector<8x32xbf16>, vector<32x8xbf16>, vector<8x8xf32> -> vector<8x8xf32>
    %c0_13 = arith.constant 0 : index
    %c0_14 = arith.constant 0 : index
    %c0_15 = arith.constant 0 : index
    %17 = vector.load %arg8[%c0_13, %c0_14, %c0_15] : memref<4x1x8xf32, #tpu.memory_space<vmem>>, vector<1x1x8xf32>
    %18 = vector.shape_cast %17 : vector<1x1x8xf32> to vector<1x8xf32>
    %19 = vector.broadcast %18 : vector<1x8xf32> to vector<8x8xf32>
    %20 = arith.addf %16, %19 : vector<8x8xf32>
    %cst_16 = arith.constant 0.353553385 : f32
    %21 = vector.broadcast %cst_16 : f32 to vector<8x8xf32>
    %22 = arith.mulf %20, %21 : vector<8x8xf32>
    %c0_17 = arith.constant 0 : index
    %c0_18 = arith.constant 0 : index
    %c0_19 = arith.constant 0 : index
    %23 = vector.load %arg19[%c0_17, %c0_18, %c0_19] : memref<4x8x8xbf16, #tpu.memory_space<vmem>>, vector<1x8x8xbf16>
    %24 = vector.shape_cast %23 : vector<1x8x8xbf16> to vector<8x8xbf16>
    %c0_20 = arith.constant 0 : index
    %c0_21 = arith.constant 0 : index
    %c0_22 = arith.constant 0 : index
    %25 = vector.load %arg20[%c0_20, %c0_21, %c0_22] : memref<4x8x8xbf16, #tpu.memory_space<vmem>>, vector<1x8x8xbf16>
    %26 = vector.shape_cast %25 : vector<1x8x8xbf16> to vector<8x8xbf16>
    %27 = arith.truncf %22 : vector<8x8xf32> to vector<8x8xbf16>
    %cst_23 = arith.constant dense<0.000000e+00> : vector<8x8xf32>
    %28 = tpu.matmul %27, %24, %cst_23 {dimension_numbers = #tpu.dot_dimension_numbers<[1], [1], [0], [0], [0, 0, 1, 0], [], []>} : vector<8x8xbf16>, vector<8x8xbf16>, vector<8x8xf32> -> vector<8x8xf32>
    %29 = vector.broadcast %12 : vector<1x8xf32> to vector<8x8xf32>
    %30 = arith.addf %28, %29 : vector<8x8xf32>
    %cst_24 = arith.constant dense<0xFF800000> : vector<8xf32>
    %31 = vector.multi_reduction <maximumf>, %30, %cst_24 [1] : vector<8x8xf32> to vector<8xf32>
    %32 = vector.shape_cast %31 : vector<8xf32> to vector<8x1xf32>
    %33 = vector.broadcast %32 : vector<8x1xf32> to vector<8x8xf32>
    %34 = arith.subf %30, %33 : vector<8x8xf32>
    %35 = math.exp %34 : vector<8x8xf32>
    %cst_25 = arith.constant dense<0.000000e+00> : vector<8xf32>
    %36 = vector.multi_reduction <add>, %35, %cst_25 [1] : vector<8x8xf32> to vector<8xf32>
    %37 = vector.shape_cast %36 : vector<8xf32> to vector<8x1xf32>
    %38 = tpu.reciprocal %37 {approx = true} : vector<8x1xf32> -> vector<8x1xf32>
    %39 = vector.broadcast %38 : vector<8x1xf32> to vector<8x8xf32>
    %40 = arith.mulf %35, %39 : vector<8x8xf32>
    %41 = arith.truncf %40 : vector<8x8xf32> to vector<8x8xbf16>
    %cst_26 = arith.constant dense<0.000000e+00> : vector<8x8xf32>
    %42 = tpu.matmul %41, %26, %cst_26 {dimension_numbers = #tpu.dot_dimension_numbers<[1], [0], [0], [1], [0, 0, 1, 1], [], []>} : vector<8x8xbf16>, vector<8x8xbf16>, vector<8x8xf32> -> vector<8x8xf32>
    %43 = arith.truncf %42 : vector<8x8xf32> to vector<8x8xbf16>
    %c0_27 = arith.constant 0 : index
    %c0_28 = arith.constant 0 : index
    %c0_29 = arith.constant 0 : index
    %44 = vector.load %arg11[%c0_27, %c0_28, %c0_29] : memref<4x8x32xbf16, #tpu.memory_space<vmem>>, vector<1x8x32xbf16>
    %45 = vector.shape_cast %44 : vector<1x8x32xbf16> to vector<8x32xbf16>
    %cst_30 = arith.constant dense<0.000000e+00> : vector<8x32xf32>
    %46 = tpu.matmul %43, %45, %cst_30 {dimension_numbers = #tpu.dot_dimension_numbers<[1], [0], [0], [1], [0, 0, 1, 1], [], []>} : vector<8x8xbf16>, vector<8x32xbf16>, vector<8x32xf32> -> vector<8x32xf32>
    %47 = arith.addf %13, %46 : vector<8x32xf32>
    %c1 = arith.constant 1 : index
    %c0_31 = arith.constant 0 : index
    %c0_32 = arith.constant 0 : index
    %48 = vector.load %arg5[%c1, %c0_31, %c0_32] : memref<4x32x8xbf16, #tpu.memory_space<vmem>>, vector<1x32x8xbf16>
    %49 = vector.shape_cast %48 : vector<1x32x8xbf16> to vector<32x8xbf16>
    %cst_33 = arith.constant dense<0.000000e+00> : vector<8x8xf32>
    %50 = tpu.matmul %5, %49, %cst_33 {dimension_numbers = #tpu.dot_dimension_numbers<[1], [0], [0], [1], [0, 0, 1, 1], [], []>} : vector<8x32xbf16>, vector<32x8xbf16>, vector<8x8xf32> -> vector<8x8xf32>
    %c1_34 = arith.constant 1 : index
    %c0_35 = arith.constant 0 : index
    %c0_36 = arith.constant 0 : index
    %51 = vector.load %arg8[%c1_34, %c0_35, %c0_36] : memref<4x1x8xf32, #tpu.memory_space<vmem>>, vector<1x1x8xf32>
    %52 = vector.shape_cast %51 : vector<1x1x8xf32> to vector<1x8xf32>
    %53 = vector.broadcast %52 : vector<1x8xf32> to vector<8x8xf32>
    %54 = arith.addf %50, %53 : vector<8x8xf32>
    %cst_37 = arith.constant 0.353553385 : f32
    %55 = vector.broadcast %cst_37 : f32 to vector<8x8xf32>
    %56 = arith.mulf %54, %55 : vector<8x8xf32>
    %c1_38 = arith.constant 1 : index
    %c0_39 = arith.constant 0 : index
    %c0_40 = arith.constant 0 : index
    %57 = vector.load %arg19[%c1_38, %c0_39, %c0_40] : memref<4x8x8xbf16, #tpu.memory_space<vmem>>, vector<1x8x8xbf16>
    %58 = vector.shape_cast %57 : vector<1x8x8xbf16> to vector<8x8xbf16>
    %c1_41 = arith.constant 1 : index
    %c0_42 = arith.constant 0 : index
    %c0_43 = arith.constant 0 : index
    %59 = vector.load %arg20[%c1_41, %c0_42, %c0_43] : memref<4x8x8xbf16, #tpu.memory_space<vmem>>, vector<1x8x8xbf16>
    %60 = vector.shape_cast %59 : vector<1x8x8xbf16> to vector<8x8xbf16>
    %61 = arith.truncf %56 : vector<8x8xf32> to vector<8x8xbf16>
    %cst_44 = arith.constant dense<0.000000e+00> : vector<8x8xf32>
    %62 = tpu.matmul %61, %58, %cst_44 {dimension_numbers = #tpu.dot_dimension_numbers<[1], [1], [0], [0], [0, 0, 1, 0], [], []>} : vector<8x8xbf16>, vector<8x8xbf16>, vector<8x8xf32> -> vector<8x8xf32>
    %63 = vector.broadcast %12 : vector<1x8xf32> to vector<8x8xf32>
    %64 = arith.addf %62, %63 : vector<8x8xf32>
    %cst_45 = arith.constant dense<0xFF800000> : vector<8xf32>
    %65 = vector.multi_reduction <maximumf>, %64, %cst_45 [1] : vector<8x8xf32> to vector<8xf32>
    %66 = vector.shape_cast %65 : vector<8xf32> to vector<8x1xf32>
    %67 = vector.broadcast %66 : vector<8x1xf32> to vector<8x8xf32>
    %68 = arith.subf %64, %67 : vector<8x8xf32>
    %69 = math.exp %68 : vector<8x8xf32>
    %cst_46 = arith.constant dense<0.000000e+00> : vector<8xf32>
    %70 = vector.multi_reduction <add>, %69, %cst_46 [1] : vector<8x8xf32> to vector<8xf32>
    %71 = vector.shape_cast %70 : vector<8xf32> to vector<8x1xf32>
    %72 = tpu.reciprocal %71 {approx = true} : vector<8x1xf32> -> vector<8x1xf32>
    %73 = vector.broadcast %72 : vector<8x1xf32> to vector<8x8xf32>
    %74 = arith.mulf %69, %73 : vector<8x8xf32>
    %75 = arith.truncf %74 : vector<8x8xf32> to vector<8x8xbf16>
    %cst_47 = arith.constant dense<0.000000e+00> : vector<8x8xf32>
    %76 = tpu.matmul %75, %60, %cst_47 {dimension_numbers = #tpu.dot_dimension_numbers<[1], [0], [0], [1], [0, 0, 1, 1], [], []>} : vector<8x8xbf16>, vector<8x8xbf16>, vector<8x8xf32> -> vector<8x8xf32>
    %77 = arith.truncf %76 : vector<8x8xf32> to vector<8x8xbf16>
    %c1_48 = arith.constant 1 : index
    %c0_49 = arith.constant 0 : index
    %c0_50 = arith.constant 0 : index
    %78 = vector.load %arg11[%c1_48, %c0_49, %c0_50] : memref<4x8x32xbf16, #tpu.memory_space<vmem>>, vector<1x8x32xbf16>
    %79 = vector.shape_cast %78 : vector<1x8x32xbf16> to vector<8x32xbf16>
    %cst_51 = arith.constant dense<0.000000e+00> : vector<8x32xf32>
    %80 = tpu.matmul %77, %79, %cst_51 {dimension_numbers = #tpu.dot_dimension_numbers<[1], [0], [0], [1], [0, 0, 1, 1], [], []>} : vector<8x8xbf16>, vector<8x32xbf16>, vector<8x32xf32> -> vector<8x32xf32>
    %81 = arith.addf %47, %80 : vector<8x32xf32>
    %c2 = arith.constant 2 : index
    %c0_52 = arith.constant 0 : index
    %c0_53 = arith.constant 0 : index
    %82 = vector.load %arg5[%c2, %c0_52, %c0_53] : memref<4x32x8xbf16, #tpu.memory_space<vmem>>, vector<1x32x8xbf16>
    %83 = vector.shape_cast %82 : vector<1x32x8xbf16> to vector<32x8xbf16>
    %cst_54 = arith.constant dense<0.000000e+00> : vector<8x8xf32>
    %84 = tpu.matmul %5, %83, %cst_54 {dimension_numbers = #tpu.dot_dimension_numbers<[1], [0], [0], [1], [0, 0, 1, 1], [], []>} : vector<8x32xbf16>, vector<32x8xbf16>, vector<8x8xf32> -> vector<8x8xf32>
    %c2_55 = arith.constant 2 : index
    %c0_56 = arith.constant 0 : index
    %c0_57 = arith.constant 0 : index
    %85 = vector.load %arg8[%c2_55, %c0_56, %c0_57] : memref<4x1x8xf32, #tpu.memory_space<vmem>>, vector<1x1x8xf32>
    %86 = vector.shape_cast %85 : vector<1x1x8xf32> to vector<1x8xf32>
    %87 = vector.broadcast %86 : vector<1x8xf32> to vector<8x8xf32>
    %88 = arith.addf %84, %87 : vector<8x8xf32>
    %cst_58 = arith.constant 0.353553385 : f32
    %89 = vector.broadcast %cst_58 : f32 to vector<8x8xf32>
    %90 = arith.mulf %88, %89 : vector<8x8xf32>
    %c2_59 = arith.constant 2 : index
    %c0_60 = arith.constant 0 : index
    %c0_61 = arith.constant 0 : index
    %91 = vector.load %arg19[%c2_59, %c0_60, %c0_61] : memref<4x8x8xbf16, #tpu.memory_space<vmem>>, vector<1x8x8xbf16>
    %92 = vector.shape_cast %91 : vector<1x8x8xbf16> to vector<8x8xbf16>
    %c2_62 = arith.constant 2 : index
    %c0_63 = arith.constant 0 : index
    %c0_64 = arith.constant 0 : index
    %93 = vector.load %arg20[%c2_62, %c0_63, %c0_64] : memref<4x8x8xbf16, #tpu.memory_space<vmem>>, vector<1x8x8xbf16>
    %94 = vector.shape_cast %93 : vector<1x8x8xbf16> to vector<8x8xbf16>
    %95 = arith.truncf %90 : vector<8x8xf32> to vector<8x8xbf16>
    %cst_65 = arith.constant dense<0.000000e+00> : vector<8x8xf32>
    %96 = tpu.matmul %95, %92, %cst_65 {dimension_numbers = #tpu.dot_dimension_numbers<[1], [1], [0], [0], [0, 0, 1, 0], [], []>} : vector<8x8xbf16>, vector<8x8xbf16>, vector<8x8xf32> -> vector<8x8xf32>
    %97 = vector.broadcast %12 : vector<1x8xf32> to vector<8x8xf32>
    %98 = arith.addf %96, %97 : vector<8x8xf32>
    %cst_66 = arith.constant dense<0xFF800000> : vector<8xf32>
    %99 = vector.multi_reduction <maximumf>, %98, %cst_66 [1] : vector<8x8xf32> to vector<8xf32>
    %100 = vector.shape_cast %99 : vector<8xf32> to vector<8x1xf32>
    %101 = vector.broadcast %100 : vector<8x1xf32> to vector<8x8xf32>
    %102 = arith.subf %98, %101 : vector<8x8xf32>
    %103 = math.exp %102 : vector<8x8xf32>
    %cst_67 = arith.constant dense<0.000000e+00> : vector<8xf32>
    %104 = vector.multi_reduction <add>, %103, %cst_67 [1] : vector<8x8xf32> to vector<8xf32>
    %105 = vector.shape_cast %104 : vector<8xf32> to vector<8x1xf32>
    %106 = tpu.reciprocal %105 {approx = true} : vector<8x1xf32> -> vector<8x1xf32>
    %107 = vector.broadcast %106 : vector<8x1xf32> to vector<8x8xf32>
    %108 = arith.mulf %103, %107 : vector<8x8xf32>
    %109 = arith.truncf %108 : vector<8x8xf32> to vector<8x8xbf16>
    %cst_68 = arith.constant dense<0.000000e+00> : vector<8x8xf32>
    %110 = tpu.matmul %109, %94, %cst_68 {dimension_numbers = #tpu.dot_dimension_numbers<[1], [0], [0], [1], [0, 0, 1, 1], [], []>} : vector<8x8xbf16>, vector<8x8xbf16>, vector<8x8xf32> -> vector<8x8xf32>
    %111 = arith.truncf %110 : vector<8x8xf32> to vector<8x8xbf16>
    %c2_69 = arith.constant 2 : index
    %c0_70 = arith.constant 0 : index
    %c0_71 = arith.constant 0 : index
    %112 = vector.load %arg11[%c2_69, %c0_70, %c0_71] : memref<4x8x32xbf16, #tpu.memory_space<vmem>>, vector<1x8x32xbf16>
    %113 = vector.shape_cast %112 : vector<1x8x32xbf16> to vector<8x32xbf16>
    %cst_72 = arith.constant dense<0.000000e+00> : vector<8x32xf32>
    %114 = tpu.matmul %111, %113, %cst_72 {dimension_numbers = #tpu.dot_dimension_numbers<[1], [0], [0], [1], [0, 0, 1, 1], [], []>} : vector<8x8xbf16>, vector<8x32xbf16>, vector<8x32xf32> -> vector<8x32xf32>
    %115 = arith.addf %81, %114 : vector<8x32xf32>
    %c3 = arith.constant 3 : index
    %c0_73 = arith.constant 0 : index
    %c0_74 = arith.constant 0 : index
    %116 = vector.load %arg5[%c3, %c0_73, %c0_74] : memref<4x32x8xbf16, #tpu.memory_space<vmem>>, vector<1x32x8xbf16>
    %117 = vector.shape_cast %116 : vector<1x32x8xbf16> to vector<32x8xbf16>
    %cst_75 = arith.constant dense<0.000000e+00> : vector<8x8xf32>
    %118 = tpu.matmul %5, %117, %cst_75 {dimension_numbers = #tpu.dot_dimension_numbers<[1], [0], [0], [1], [0, 0, 1, 1], [], []>} : vector<8x32xbf16>, vector<32x8xbf16>, vector<8x8xf32> -> vector<8x8xf32>
    %c3_76 = arith.constant 3 : index
    %c0_77 = arith.constant 0 : index
    %c0_78 = arith.constant 0 : index
    %119 = vector.load %arg8[%c3_76, %c0_77, %c0_78] : memref<4x1x8xf32, #tpu.memory_space<vmem>>, vector<1x1x8xf32>
    %120 = vector.shape_cast %119 : vector<1x1x8xf32> to vector<1x8xf32>
    %121 = vector.broadcast %120 : vector<1x8xf32> to vector<8x8xf32>
    %122 = arith.addf %118, %121 : vector<8x8xf32>
    %cst_79 = arith.constant 0.353553385 : f32
    %123 = vector.broadcast %cst_79 : f32 to vector<8x8xf32>
    %124 = arith.mulf %122, %123 : vector<8x8xf32>
    %c3_80 = arith.constant 3 : index
    %c0_81 = arith.constant 0 : index
    %c0_82 = arith.constant 0 : index
    %125 = vector.load %arg19[%c3_80, %c0_81, %c0_82] : memref<4x8x8xbf16, #tpu.memory_space<vmem>>, vector<1x8x8xbf16>
    %126 = vector.shape_cast %125 : vector<1x8x8xbf16> to vector<8x8xbf16>
    %c3_83 = arith.constant 3 : index
    %c0_84 = arith.constant 0 : index
    %c0_85 = arith.constant 0 : index
    %127 = vector.load %arg20[%c3_83, %c0_84, %c0_85] : memref<4x8x8xbf16, #tpu.memory_space<vmem>>, vector<1x8x8xbf16>
    %128 = vector.shape_cast %127 : vector<1x8x8xbf16> to vector<8x8xbf16>
    %129 = arith.truncf %124 : vector<8x8xf32> to vector<8x8xbf16>
    %cst_86 = arith.constant dense<0.000000e+00> : vector<8x8xf32>
    %130 = tpu.matmul %129, %126, %cst_86 {dimension_numbers = #tpu.dot_dimension_numbers<[1], [1], [0], [0], [0, 0, 1, 0], [], []>} : vector<8x8xbf16>, vector<8x8xbf16>, vector<8x8xf32> -> vector<8x8xf32>
    %131 = vector.broadcast %12 : vector<1x8xf32> to vector<8x8xf32>
    %132 = arith.addf %130, %131 : vector<8x8xf32>
    %cst_87 = arith.constant dense<0xFF800000> : vector<8xf32>
    %133 = vector.multi_reduction <maximumf>, %132, %cst_87 [1] : vector<8x8xf32> to vector<8xf32>
    %134 = vector.shape_cast %133 : vector<8xf32> to vector<8x1xf32>
    %135 = vector.broadcast %134 : vector<8x1xf32> to vector<8x8xf32>
    %136 = arith.subf %132, %135 : vector<8x8xf32>
    %137 = math.exp %136 : vector<8x8xf32>
    %cst_88 = arith.constant dense<0.000000e+00> : vector<8xf32>
    %138 = vector.multi_reduction <add>, %137, %cst_88 [1] : vector<8x8xf32> to vector<8xf32>
    %139 = vector.shape_cast %138 : vector<8xf32> to vector<8x1xf32>
    %140 = tpu.reciprocal %139 {approx = true} : vector<8x1xf32> -> vector<8x1xf32>
    %141 = vector.broadcast %140 : vector<8x1xf32> to vector<8x8xf32>
    %142 = arith.mulf %137, %141 : vector<8x8xf32>
    %143 = arith.truncf %142 : vector<8x8xf32> to vector<8x8xbf16>
    %cst_89 = arith.constant dense<0.000000e+00> : vector<8x8xf32>
    %144 = tpu.matmul %143, %128, %cst_89 {dimension_numbers = #tpu.dot_dimension_numbers<[1], [0], [0], [1], [0, 0, 1, 1], [], []>} : vector<8x8xbf16>, vector<8x8xbf16>, vector<8x8xf32> -> vector<8x8xf32>
    %145 = arith.truncf %144 : vector<8x8xf32> to vector<8x8xbf16>
    %c3_90 = arith.constant 3 : index
    %c0_91 = arith.constant 0 : index
    %c0_92 = arith.constant 0 : index
    %146 = vector.load %arg11[%c3_90, %c0_91, %c0_92] : memref<4x8x32xbf16, #tpu.memory_space<vmem>>, vector<1x8x32xbf16>
    %147 = vector.shape_cast %146 : vector<1x8x32xbf16> to vector<8x32xbf16>
    %cst_93 = arith.constant dense<0.000000e+00> : vector<8x32xf32>
    %148 = tpu.matmul %145, %147, %cst_93 {dimension_numbers = #tpu.dot_dimension_numbers<[1], [0], [0], [1], [0, 0, 1, 1], [], []>} : vector<8x8xbf16>, vector<8x32xbf16>, vector<8x32xf32> -> vector<8x32xf32>
    %149 = arith.addf %115, %148 : vector<8x32xf32>
    %c0_94 = arith.constant 0 : index
    %c0_95 = arith.constant 0 : index
    %150 = vector.load %arg12[%c0_94, %c0_95] : memref<1x32xf32, #tpu.memory_space<vmem>>, vector<1x32xf32>
    %151 = vector.broadcast %150 : vector<1x32xf32> to vector<8x32xf32>
    %152 = arith.addf %149, %151 : vector<8x32xf32>
    %c0_96 = arith.constant 0 : index
    %c0_97 = arith.constant 0 : index
    %153 = vector.load %arg17[%c0_96, %c0_97] : memref<4x32xf32, #tpu.memory_space<vmem>>, vector<1x32xf32>
    %c1_98 = arith.constant 1 : index
    %c0_99 = arith.constant 0 : index
    %154 = vector.load %arg17[%c1_98, %c0_99] : memref<4x32xf32, #tpu.memory_space<vmem>>, vector<1x32xf32>
    %c2_100 = arith.constant 2 : index
    %c0_101 = arith.constant 0 : index
    %155 = vector.load %arg17[%c2_100, %c0_101] : memref<4x32xf32, #tpu.memory_space<vmem>>, vector<1x32xf32>
    %c3_102 = arith.constant 3 : index
    %c0_103 = arith.constant 0 : index
    %156 = vector.load %arg17[%c3_102, %c0_103] : memref<4x32xf32, #tpu.memory_space<vmem>>, vector<1x32xf32>
    %157 = arith.addf %4, %152 : vector<8x32xf32>
    %cst_104 = arith.constant dense<0.000000e+00> : vector<8xf32>
    %158 = vector.multi_reduction <add>, %157, %cst_104 [1] : vector<8x32xf32> to vector<8xf32>
    %159 = vector.shape_cast %158 : vector<8xf32> to vector<8x1xf32>
    %cst_105 = arith.constant 3.200000e+01 : f32
    %160 = vector.broadcast %cst_105 : f32 to vector<8x1xf32>
    %161 = arith.divf %159, %160 : vector<8x1xf32>
    %162 = vector.broadcast %161 : vector<8x1xf32> to vector<8x32xf32>
    %163 = arith.subf %157, %162 : vector<8x32xf32>
    %164 = arith.mulf %163, %163 : vector<8x32xf32>
    %cst_106 = arith.constant dense<0.000000e+00> : vector<8xf32>
    %165 = vector.multi_reduction <add>, %164, %cst_106 [1] : vector<8x32xf32> to vector<8xf32>
    %166 = vector.shape_cast %165 : vector<8xf32> to vector<8x1xf32>
    %cst_107 = arith.constant 3.200000e+01 : f32
    %167 = vector.broadcast %cst_107 : f32 to vector<8x1xf32>
    %168 = arith.divf %166, %167 : vector<8x1xf32>
    %cst_108 = arith.constant 9.99999996E-13 : f32
    %169 = vector.broadcast %cst_108 : f32 to vector<8x1xf32>
    %170 = arith.addf %168, %169 : vector<8x1xf32>
    %171 = math.rsqrt %170 : vector<8x1xf32>
    %172 = vector.broadcast %171 : vector<8x1xf32> to vector<8x32xf32>
    %173 = arith.mulf %163, %172 : vector<8x32xf32>
    %174 = vector.broadcast %153 : vector<1x32xf32> to vector<8x32xf32>
    %175 = arith.mulf %173, %174 : vector<8x32xf32>
    %176 = vector.broadcast %154 : vector<1x32xf32> to vector<8x32xf32>
    %177 = arith.addf %175, %176 : vector<8x32xf32>
    %178 = arith.truncf %177 : vector<8x32xf32> to vector<8x32xbf16>
    %c0_109 = arith.constant 0 : index
    %c0_110 = arith.constant 0 : index
    %179 = vector.load %arg13[%c0_109, %c0_110] : memref<32x128xbf16, #tpu.memory_space<vmem>>, vector<32x128xbf16>
    %cst_111 = arith.constant dense<0.000000e+00> : vector<8x128xf32>
    %180 = tpu.matmul %178, %179, %cst_111 {dimension_numbers = #tpu.dot_dimension_numbers<[1], [0], [0], [1], [0, 0, 1, 1], [], []>} : vector<8x32xbf16>, vector<32x128xbf16>, vector<8x128xf32> -> vector<8x128xf32>
    %c0_112 = arith.constant 0 : index
    %c0_113 = arith.constant 0 : index
    %181 = vector.load %arg14[%c0_112, %c0_113] : memref<1x128xf32, #tpu.memory_space<vmem>>, vector<1x128xf32>
    %182 = vector.broadcast %181 : vector<1x128xf32> to vector<8x128xf32>
    %183 = arith.addf %180, %182 : vector<8x128xf32>
    %cst_114 = arith.constant 5.000000e-01 : f32
    %184 = vector.broadcast %cst_114 : f32 to vector<8x128xf32>
    %185 = arith.mulf %184, %183 : vector<8x128xf32>
    %cst_115 = arith.constant 4.471500e-02 : f32
    %186 = vector.broadcast %cst_115 : f32 to vector<8x128xf32>
    %187 = arith.mulf %186, %183 : vector<8x128xf32>
    %188 = arith.mulf %187, %183 : vector<8x128xf32>
    %189 = arith.mulf %188, %183 : vector<8x128xf32>
    %190 = arith.addf %183, %189 : vector<8x128xf32>
    %cst_116 = arith.constant 0.797884583 : f32
    %191 = vector.broadcast %cst_116 : f32 to vector<8x128xf32>
    %192 = arith.mulf %191, %190 : vector<8x128xf32>
    %193 = math.tanh %192 : vector<8x128xf32>
    %cst_117 = arith.constant 1.000000e+00 : f32
    %194 = vector.broadcast %cst_117 : f32 to vector<8x128xf32>
    %195 = arith.addf %194, %193 : vector<8x128xf32>
    %196 = arith.mulf %185, %195 : vector<8x128xf32>
    %197 = arith.truncf %196 : vector<8x128xf32> to vector<8x128xbf16>
    %c0_118 = arith.constant 0 : index
    %c0_119 = arith.constant 0 : index
    %198 = vector.load %arg15[%c0_118, %c0_119] : memref<128x32xbf16, #tpu.memory_space<vmem>>, vector<128x32xbf16>
    %cst_120 = arith.constant dense<0.000000e+00> : vector<8x32xf32>
    %199 = tpu.matmul %197, %198, %cst_120 {dimension_numbers = #tpu.dot_dimension_numbers<[1], [0], [0], [1], [0, 0, 1, 1], [], []>} : vector<8x128xbf16>, vector<128x32xbf16>, vector<8x32xf32> -> vector<8x32xf32>
    %c0_121 = arith.constant 0 : index
    %c0_122 = arith.constant 0 : index
    %200 = vector.load %arg16[%c0_121, %c0_122] : memref<1x32xf32, #tpu.memory_space<vmem>>, vector<1x32xf32>
    %201 = vector.broadcast %200 : vector<1x32xf32> to vector<8x32xf32>
    %202 = arith.addf %199, %201 : vector<8x32xf32>
    %203 = arith.addf %177, %202 : vector<8x32xf32>
    %cst_123 = arith.constant dense<0.000000e+00> : vector<8xf32>
    %204 = vector.multi_reduction <add>, %203, %cst_123 [1] : vector<8x32xf32> to vector<8xf32>
    %205 = vector.shape_cast %204 : vector<8xf32> to vector<8x1xf32>
    %cst_124 = arith.constant 3.200000e+01 : f32
    %206 = vector.broadcast %cst_124 : f32 to vector<8x1xf32>
    %207 = arith.divf %205, %206 : vector<8x1xf32>
    %208 = vector.broadcast %207 : vector<8x1xf32> to vector<8x32xf32>
    %209 = arith.subf %203, %208 : vector<8x32xf32>
    %210 = arith.mulf %209, %209 : vector<8x32xf32>
    %cst_125 = arith.constant dense<0.000000e+00> : vector<8xf32>
    %211 = vector.multi_reduction <add>, %210, %cst_125 [1] : vector<8x32xf32> to vector<8xf32>
    %212 = vector.shape_cast %211 : vector<8xf32> to vector<8x1xf32>
    %cst_126 = arith.constant 3.200000e+01 : f32
    %213 = vector.broadcast %cst_126 : f32 to vector<8x1xf32>
    %214 = arith.divf %212, %213 : vector<8x1xf32>
    %cst_127 = arith.constant 9.99999996E-13 : f32
    %215 = vector.broadcast %cst_127 : f32 to vector<8x1xf32>
    %216 = arith.addf %214, %215 : vector<8x1xf32>
    %217 = math.rsqrt %216 : vector<8x1xf32>
    %218 = vector.broadcast %217 : vector<8x1xf32> to vector<8x32xf32>
    %219 = arith.mulf %209, %218 : vector<8x32xf32>
    %220 = vector.broadcast %155 : vector<1x32xf32> to vector<8x32xf32>
    %221 = arith.mulf %219, %220 : vector<8x32xf32>
    %222 = vector.broadcast %156 : vector<1x32xf32> to vector<8x32xf32>
    %223 = arith.addf %221, %222 : vector<8x32xf32>
    %c0_128 = arith.constant 0 : index
    %c0_129 = arith.constant 0 : index
    %c0_130 = arith.constant 0 : index
    %224 = vector.load %arg18[%c0_128, %c0_129, %c0_130] : memref<1x8x32xf32, #tpu.memory_space<vmem>>, vector<1x8x32xf32>
    %225 = vector.shape_cast %224 : vector<1x8x32xf32> to vector<8x32xf32>
    %226 = vector.shape_cast %223 : vector<8x32xf32> to vector<1x8x32xf32>
    tpu.vector_store %arg18[%c0_128, %c0_129, %c0_130], %226 {strides = array<i32>} : memref<1x8x32xf32, #tpu.memory_space<vmem>>, vector<1x8x32xf32>,
    return
  }
  func.func @transform_0(%arg0: i32, %arg1: i32) -> (i32, i32, i32) {
    %c0_i32 = arith.constant 0 : i32
    %c0_i32_0 = arith.constant 0 : i32
    return %arg0, %arg1, %c0_i32 : i32, i32, i32
  }
  func.func @transform_1(%arg0: i32, %arg1: i32) -> (i32, i32, i32) {
    %c0_i32 = arith.constant 0 : i32
    %c0_i32_0 = arith.constant 0 : i32
    %c0_i32_1 = arith.constant 0 : i32
    return %arg0, %c0_i32, %c0_i32_0 : i32, i32, i32
  }
  func.func @transform_2(%arg0: i32, %arg1: i32) -> (i32, i32, i32) {
    %c0_i32 = arith.constant 0 : i32
    %c0_i32_0 = arith.constant 0 : i32
    %c0_i32_1 = arith.constant 0 : i32
    return %arg0, %c0_i32, %c0_i32_0 : i32, i32, i32
  }
  func.func @transform_3(%arg0: i32, %arg1: i32) -> (i32, i32, i32) {
    %c0_i32 = arith.constant 0 : i32
    %c0_i32_0 = arith.constant 0 : i32
    %c0_i32_1 = arith.constant 0 : i32
    %c0_i32_2 = arith.constant 0 : i32
    return %c0_i32, %c0_i32_0, %c0_i32_1 : i32, i32, i32
  }
  func.func @transform_4(%arg0: i32, %arg1: i32) -> (i32, i32, i32) {
    %c0_i32 = arith.constant 0 : i32
    %c0_i32_0 = arith.constant 0 : i32
    %c0_i32_1 = arith.constant 0 : i32
    %c0_i32_2 = arith.constant 0 : i32
    return %c0_i32, %c0_i32_0, %c0_i32_1 : i32, i32, i32
  }
  func.func @transform_5(%arg0: i32, %arg1: i32) -> (i32, i32, i32) {
    %c0_i32 = arith.constant 0 : i32
    %c0_i32_0 = arith.constant 0 : i32
    %c0_i32_1 = arith.constant 0 : i32
    %c0_i32_2 = arith.constant 0 : i32
    return %c0_i32, %c0_i32_0, %c0_i32_1 : i32, i32, i32
  }
  func.func @transform_6(%arg0: i32, %arg1: i32) -> (i32, i32, i32) {
    %c0_i32 = arith.constant 0 : i32
    %c0_i32_0 = arith.constant 0 : i32
    %c0_i32_1 = arith.constant 0 : i32
    %c0_i32_2 = arith.constant 0 : i32
    return %c0_i32, %c0_i32_0, %c0_i32_1 : i32, i32, i32
  }
  func.func @transform_7(%arg0: i32, %arg1: i32) -> (i32, i32, i32) {
    %c0_i32 = arith.constant 0 : i32
    %c0_i32_0 = arith.constant 0 : i32
    %c0_i32_1 = arith.constant 0 : i32
    %c0_i32_2 = arith.constant 0 : i32
    return %c0_i32, %c0_i32_0, %c0_i32_1 : i32, i32, i32
  }
  func.func @transform_8(%arg0: i32, %arg1: i32) -> (i32, i32, i32) {
    %c0_i32 = arith.constant 0 : i32
    %c0_i32_0 = arith.constant 0 : i32
    %c0_i32_1 = arith.constant 0 : i32
    %c0_i32_2 = arith.constant 0 : i32
    return %c0_i32, %c0_i32_0, %c0_i32_1 : i32, i32, i32
  }
  func.func @transform_9(%arg0: i32, %arg1: i32) -> (i32, i32, i32) {
    %c0_i32 = arith.constant 0 : i32
    %c0_i32_0 = arith.constant 0 : i32
    %c0_i32_1 = arith.constant 0 : i32
    %c0_i32_2 = arith.constant 0 : i32
    return %c0_i32, %c0_i32_0, %c0_i32_1 : i32, i32, i32
  }
  func.func @transform_10(%arg0: i32, %arg1: i32) -> (i32, i32) {
    %c0_i32 = arith.constant 0 : i32
    %c0_i32_0 = arith.constant 0 : i32
    %c0_i32_1 = arith.constant 0 : i32
    return %c0_i32, %c0_i32_0 : i32, i32
  }
  func.func @transform_11(%arg0: i32, %arg1: i32) -> (i32, i32) {
    %c0_i32 = arith.constant 0 : i32
    %c0_i32_0 = arith.constant 0 : i32
    %c0_i32_1 = arith.constant 0 : i32
    return %c0_i32, %c0_i32_0 : i32, i32
  }
  func.func @transform_12(%arg0: i32, %arg1: i32) -> (i32, i32) {
    %c0_i32 = arith.constant 0 : i32
    %c0_i32_0 = arith.constant 0 : i32
    %c0_i32_1 = arith.constant 0 : i32
    return %c0_i32, %c0_i32_0 : i32, i32
  }
  func.func @transform_13(%arg0: i32, %arg1: i32) -> (i32, i32) {
    %c0_i32 = arith.constant 0 : i32
    %c0_i32_0 = arith.constant 0 : i32
    %c0_i32_1 = arith.constant 0 : i32
    return %c0_i32, %c0_i32_0 : i32, i32
  }
  func.func @transform_14(%arg0: i32, %arg1: i32) -> (i32, i32) {
    %c0_i32 = arith.constant 0 : i32
    %c0_i32_0 = arith.constant 0 : i32
    %c0_i32_1 = arith.constant 0 : i32
    return %c0_i32, %c0_i32_0 : i32, i32
  }
  func.func @transform_15(%arg0: i32, %arg1: i32) -> (i32, i32) {
    %c0_i32 = arith.constant 0 : i32
    %c0_i32_0 = arith.constant 0 : i32
    %c0_i32_1 = arith.constant 0 : i32
    return %c0_i32, %c0_i32_0 : i32, i32
  }
  func.func @transform_16(%arg0: i32, %arg1: i32) -> (i32, i32, i32) {
    %c0_i32 = arith.constant 0 : i32
    %c0_i32_0 = arith.constant 0 : i32
    return %arg0, %arg1, %c0_i32 : i32, i32, i32
  }
}

module attributes {stable_mosaic.version = 11 : i64} {
  func.func @_encoder_layer_kernel(%arg0: i32, %arg1: i32, %arg2: memref<1x8x32xf32, #tpu.memory_space<vmem>>, %arg3: memref<1x8x32xf32, #tpu.memory_space<vmem>>, %arg4: memref<1x1x8xf32, #tpu.memory_space<vmem>>, %arg5: memref<4x32x8xbf16, #tpu.memory_space<vmem>>, %arg6: memref<4x32x8xbf16, #tpu.memory_space<vmem>>, %arg7: memref<4x32x8xbf16, #tpu.memory_space<vmem>>, %arg8: memref<4x1x8xf32, #tpu.memory_space<vmem>>, %arg9: memref<4x1x8xf32, #tpu.memory_space<vmem>>, %arg10: memref<4x1x8xf32, #tpu.memory_space<vmem>>, %arg11: memref<4x8x32xbf16, #tpu.memory_space<vmem>>, %arg12: memref<1x32xf32, #tpu.memory_space<vmem>>, %arg13: memref<32x128xbf16, #tpu.memory_space<vmem>>, %arg14: memref<1x128xf32, #tpu.memory_space<vmem>>, %arg15: memref<128x32xbf16, #tpu.memory_space<vmem>>, %arg16: memref<1x32xf32, #tpu.memory_space<vmem>>, %arg17: memref<4x32xf32, #tpu.memory_space<vmem>>, %arg18: memref<1x8x32xf32, #tpu.memory_space<vmem>>, %arg19: memref<4x8x8xbf16, #tpu.memory_space<vmem>>, %arg20: memref<4x8x8xbf16, #tpu.memory_space<vmem>>) attributes {dimension_semantics = [#tpu.dimension_semantics<parallel>, #tpu.dimension_semantics<arbitrary>], iteration_bounds = array<i64: 2, 1>, scalar_prefetch = 0 : i64, scratch_operands = 2 : i64, tpu.core_type = #tpu.core_type<tc>, window_params = [{transform_indices = @transform_0, window_bounds = array<i64: 1, 8, 32>}, {transform_indices = @transform_1, window_bounds = array<i64: 1, 8, 32>}, {transform_indices = @transform_2, window_bounds = array<i64: 1, 1, 8>}, {pipeline_mode = #tpu.pipeline_mode<synchronous>, transform_indices = @transform_3, window_bounds = array<i64: 4, 32, 8>}, {pipeline_mode = #tpu.pipeline_mode<synchronous>, transform_indices = @transform_4, window_bounds = array<i64: 4, 32, 8>}, {pipeline_mode = #tpu.pipeline_mode<synchronous>, transform_indices = @transform_5, window_bounds = array<i64: 4, 32, 8>}, {pipeline_mode = #tpu.pipeline_mode<synchronous>, transform_indices = @transform_6, window_bounds = array<i64: 4, 1, 8>}, {pipeline_mode = #tpu.pipeline_mode<synchronous>, transform_indices = @transform_7, window_bounds = array<i64: 4, 1, 8>}, {pipeline_mode = #tpu.pipeline_mode<synchronous>, transform_indices = @transform_8, window_bounds = array<i64: 4, 1, 8>}, {pipeline_mode = #tpu.pipeline_mode<synchronous>, transform_indices = @transform_9, window_bounds = array<i64: 4, 8, 32>}, {pipeline_mode = #tpu.pipeline_mode<synchronous>, transform_indices = @transform_10, window_bounds = array<i64: 1, 32>}, {pipeline_mode = #tpu.pipeline_mode<synchronous>, transform_indices = @transform_11, window_bounds = array<i64: 32, 128>}, {pipeline_mode = #tpu.pipeline_mode<synchronous>, transform_indices = @transform_12, window_bounds = array<i64: 1, 128>}, {pipeline_mode = #tpu.pipeline_mode<synchronous>, transform_indices = @transform_13, window_bounds = array<i64: 128, 32>}, {pipeline_mode = #tpu.pipeline_mode<synchronous>, transform_indices = @transform_14, window_bounds = array<i64: 1, 32>}, {pipeline_mode = #tpu.pipeline_mode<synchronous>, transform_indices = @transform_15, window_bounds = array<i64: 4, 32>}, {transform_indices = @transform_16, window_bounds = array<i64: 1, 8, 32>}]} {
    %c0_i32 = arith.constant 0 : i32
    %0 = arith.cmpi eq, %arg1, %c0_i32 : i32
    %1 = arith.extui %0 : i1 to i32
    %c0_i32_0 = arith.constant 0 : i32
    %2 = arith.cmpi ne, %1, %c0_i32_0 : i32
    scf.if %2 {
      %c0_131 = arith.constant 0 : index
      %c0_132 = arith.constant 0 : index
      %c0_133 = arith.constant 0 : index
      %227 = vector.load %arg3[%c0_131, %c0_132, %c0_133] : memref<1x8x32xf32, #tpu.memory_space<vmem>>, vector<1x8x32xf32>
      %228 = vector.shape_cast %227 : vector<1x8x32xf32> to vector<8x32xf32>
      %229 = arith.truncf %228 : vector<8x32xf32> to vector<8x32xbf16>
      %c0_134 = arith.constant 0 : index
      %c0_135 = arith.constant 0 : index
      %c0_136 = arith.constant 0 : index
      %230 = vector.load %arg6[%c0_134, %c0_135, %c0_136] : memref<4x32x8xbf16, #tpu.memory_space<vmem>>, vector<1x32x8xbf16>
      %231 = vector.shape_cast %230 : vector<1x32x8xbf16> to vector<32x8xbf16>
      %cst_137 = arith.constant dense<0.000000e+00> : vector<8x8xf32>
      %232 = tpu.matmul %229, %231, %cst_137 {dimension_numbers = #tpu.dot_dimension_numbers<[1], [0], [0], [1], [0, 0, 1, 1], [], []>} : vector<8x32xbf16>, vector<32x8xbf16>, vector<8x8xf32> -> vector<8x8xf32>
      %c0_138 = arith.constant 0 : index
      %c0_139 = arith.constant 0 : index
      %c0_140 = arith.constant 0 : index
      %233 = vector.load %arg9[%c0_138, %c0_139, %c0_140] : memref<4x1x8xf32, #tpu.memory_space<vmem>>, vector<1x1x8xf32>
      %234 = vector.shape_cast %233 : vector<1x1x8xf32> to vector<1x8xf32>
      %235 = vector.broadcast %234 : vector<1x8xf32> to vector<8x8xf32>
      %236 = arith.addf %232, %235 : vector<8x8xf32>
      %c0_141 = arith.constant 0 : index
      %c0_142 = arith.constant 0 : index
      %c0_143 = arith.constant 0 : index
      %237 = vector.load %arg7[%c0_141, %c0_142, %c0_143] : memref<4x32x8xbf16, #tpu.memory_space<vmem>>, vector<1x32x8xbf16>
      %238 = vector.shape_cast %237 : vector<1x32x8xbf16> to vector<32x8xbf16>
      %cst_144 = arith.constant dense<0.000000e+00> : vector<8x8xf32>
      %239 = tpu.matmul %229, %238, %cst_144 {dimension_numbers = #tpu.dot_dimension_numbers<[1], [0], [0], [1], [0, 0, 1, 1], [], []>} : vector<8x32xbf16>, vector<32x8xbf16>, vector<8x8xf32> -> vector<8x8xf32>
      %c0_145 = arith.constant 0 : index
      %c0_146 = arith.constant 0 : index
      %c0_147 = arith.constant 0 : index
      %240 = vector.load %arg10[%c0_145, %c0_146, %c0_147] : memref<4x1x8xf32, #tpu.memory_space<vmem>>, vector<1x1x8xf32>
      %241 = vector.shape_cast %240 : vector<1x1x8xf32> to vector<1x8xf32>
      %242 = vector.broadcast %241 : vector<1x8xf32> to vector<8x8xf32>
      %243 = arith.addf %239, %242 : vector<8x8xf32>
      %244 = arith.truncf %236 : vector<8x8xf32> to vector<8x8xbf16>
      %c0_148 = arith.constant 0 : index
      %c0_149 = arith.constant 0 : index
      %c0_150 = arith.constant 0 : index
      %245 = vector.load %arg19[%c0_148, %c0_149, %c0_150] : memref<4x8x8xbf16, #tpu.memory_space<vmem>>, vector<1x8x8xbf16>
      %246 = vector.shape_cast %245 : vector<1x8x8xbf16> to vector<8x8xbf16>
      %247 = vector.shape_cast %244 : vector<8x8xbf16> to vector<1x8x8xbf16>
      tpu.vector_store %arg19[%c0_148, %c0_149, %c0_150], %247 {strides = array<i32>} : memref<4x8x8xbf16, #tpu.memory_space<vmem>>, vector<1x8x8xbf16>,
      %248 = arith.truncf %243 : vector<8x8xf32> to vector<8x8xbf16>
      %c0_151 = arith.constant 0 : index
      %c0_152 = arith.constant 0 : index
      %c0_153 = arith.constant 0 : index
      %249 = vector.load %arg20[%c0_151, %c0_152, %c0_153] : memref<4x8x8xbf16, #tpu.memory_space<vmem>>, vector<1x8x8xbf16>
      %250 = vector.shape_cast %249 : vector<1x8x8xbf16> to vector<8x8xbf16>
      %251 = vector.shape_cast %248 : vector<8x8xbf16> to vector<1x8x8xbf16>
      tpu.vector_store %arg20[%c0_151, %c0_152, %c0_153], %251 {strides = array<i32>} : memref<4x8x8xbf16, #tpu.memory_space<vmem>>, vector<1x8x8xbf16>,
      %c1_154 = arith.constant 1 : index
      %c0_155 = arith.constant 0 : index
      %c0_156 = arith.constant 0 : index
      %252 = vector.load %arg6[%c1_154, %c0_155, %c0_156] : memref<4x32x8xbf16, #tpu.memory_space<vmem>>, vector<1x32x8xbf16>
      %253 = vector.shape_cast %252 : vector<1x32x8xbf16> to vector<32x8xbf16>
      %cst_157 = arith.constant dense<0.000000e+00> : vector<8x8xf32>
      %254 = tpu.matmul %229, %253, %cst_157 {dimension_numbers = #tpu.dot_dimension_numbers<[1], [0], [0], [1], [0, 0, 1, 1], [], []>} : vector<8x32xbf16>, vector<32x8xbf16>, vector<8x8xf32> -> vector<8x8xf32>
      %c1_158 = arith.constant 1 : index
      %c0_159 = arith.constant 0 : index
      %c0_160 = arith.constant 0 : index
      %255 = vector.load %arg9[%c1_158, %c0_159, %c0_160] : memref<4x1x8xf32, #tpu.memory_space<vmem>>, vector<1x1x8xf32>
      %256 = vector.shape_cast %255 : vector<1x1x8xf32> to vector<1x8xf32>
      %257 = vector.broadcast %256 : vector<1x8xf32> to vector<8x8xf32>
      %258 = arith.addf %254, %257 : vector<8x8xf32>
      %c1_161 = arith.constant 1 : index
      %c0_162 = arith.constant 0 : index
      %c0_163 = arith.constant 0 : index
      %259 = vector.load %arg7[%c1_161, %c0_162, %c0_163] : memref<4x32x8xbf16, #tpu.memory_space<vmem>>, vector<1x32x8xbf16>
      %260 = vector.shape_cast %259 : vector<1x32x8xbf16> to vector<32x8xbf16>
      %cst_164 = arith.constant dense<0.000000e+00> : vector<8x8xf32>
      %261 = tpu.matmul %229, %260, %cst_164 {dimension_numbers = #tpu.dot_dimension_numbers<[1], [0], [0], [1], [0, 0, 1, 1], [], []>} : vector<8x32xbf16>, vector<32x8xbf16>, vector<8x8xf32> -> vector<8x8xf32>
      %c1_165 = arith.constant 1 : index
      %c0_166 = arith.constant 0 : index
      %c0_167 = arith.constant 0 : index
      %262 = vector.load %arg10[%c1_165, %c0_166, %c0_167] : memref<4x1x8xf32, #tpu.memory_space<vmem>>, vector<1x1x8xf32>
      %263 = vector.shape_cast %262 : vector<1x1x8xf32> to vector<1x8xf32>
      %264 = vector.broadcast %263 : vector<1x8xf32> to vector<8x8xf32>
      %265 = arith.addf %261, %264 : vector<8x8xf32>
      %266 = arith.truncf %258 : vector<8x8xf32> to vector<8x8xbf16>
      %c1_168 = arith.constant 1 : index
      %c0_169 = arith.constant 0 : index
      %c0_170 = arith.constant 0 : index
      %267 = vector.load %arg19[%c1_168, %c0_169, %c0_170] : memref<4x8x8xbf16, #tpu.memory_space<vmem>>, vector<1x8x8xbf16>
      %268 = vector.shape_cast %267 : vector<1x8x8xbf16> to vector<8x8xbf16>
      %269 = vector.shape_cast %266 : vector<8x8xbf16> to vector<1x8x8xbf16>
      tpu.vector_store %arg19[%c1_168, %c0_169, %c0_170], %269 {strides = array<i32>} : memref<4x8x8xbf16, #tpu.memory_space<vmem>>, vector<1x8x8xbf16>,
      %270 = arith.truncf %265 : vector<8x8xf32> to vector<8x8xbf16>
      %c1_171 = arith.constant 1 : index
      %c0_172 = arith.constant 0 : index
      %c0_173 = arith.constant 0 : index
      %271 = vector.load %arg20[%c1_171, %c0_172, %c0_173] : memref<4x8x8xbf16, #tpu.memory_space<vmem>>, vector<1x8x8xbf16>
      %272 = vector.shape_cast %271 : vector<1x8x8xbf16> to vector<8x8xbf16>
      %273 = vector.shape_cast %270 : vector<8x8xbf16> to vector<1x8x8xbf16>
      tpu.vector_store %arg20[%c1_171, %c0_172, %c0_173], %273 {strides = array<i32>} : memref<4x8x8xbf16, #tpu.memory_space<vmem>>, vector<1x8x8xbf16>,
      %c2_174 = arith.constant 2 : index
      %c0_175 = arith.constant 0 : index
      %c0_176 = arith.constant 0 : index
      %274 = vector.load %arg6[%c2_174, %c0_175, %c0_176] : memref<4x32x8xbf16, #tpu.memory_space<vmem>>, vector<1x32x8xbf16>
      %275 = vector.shape_cast %274 : vector<1x32x8xbf16> to vector<32x8xbf16>
      %cst_177 = arith.constant dense<0.000000e+00> : vector<8x8xf32>
      %276 = tpu.matmul %229, %275, %cst_177 {dimension_numbers = #tpu.dot_dimension_numbers<[1], [0], [0], [1], [0, 0, 1, 1], [], []>} : vector<8x32xbf16>, vector<32x8xbf16>, vector<8x8xf32> -> vector<8x8xf32>
      %c2_178 = arith.constant 2 : index
      %c0_179 = arith.constant 0 : index
      %c0_180 = arith.constant 0 : index
      %277 = vector.load %arg9[%c2_178, %c0_179, %c0_180] : memref<4x1x8xf32, #tpu.memory_space<vmem>>, vector<1x1x8xf32>
      %278 = vector.shape_cast %277 : vector<1x1x8xf32> to vector<1x8xf32>
      %279 = vector.broadcast %278 : vector<1x8xf32> to vector<8x8xf32>
      %280 = arith.addf %276, %279 : vector<8x8xf32>
      %c2_181 = arith.constant 2 : index
      %c0_182 = arith.constant 0 : index
      %c0_183 = arith.constant 0 : index
      %281 = vector.load %arg7[%c2_181, %c0_182, %c0_183] : memref<4x32x8xbf16, #tpu.memory_space<vmem>>, vector<1x32x8xbf16>
      %282 = vector.shape_cast %281 : vector<1x32x8xbf16> to vector<32x8xbf16>
      %cst_184 = arith.constant dense<0.000000e+00> : vector<8x8xf32>
      %283 = tpu.matmul %229, %282, %cst_184 {dimension_numbers = #tpu.dot_dimension_numbers<[1], [0], [0], [1], [0, 0, 1, 1], [], []>} : vector<8x32xbf16>, vector<32x8xbf16>, vector<8x8xf32> -> vector<8x8xf32>
      %c2_185 = arith.constant 2 : index
      %c0_186 = arith.constant 0 : index
      %c0_187 = arith.constant 0 : index
      %284 = vector.load %arg10[%c2_185, %c0_186, %c0_187] : memref<4x1x8xf32, #tpu.memory_space<vmem>>, vector<1x1x8xf32>
      %285 = vector.shape_cast %284 : vector<1x1x8xf32> to vector<1x8xf32>
      %286 = vector.broadcast %285 : vector<1x8xf32> to vector<8x8xf32>
      %287 = arith.addf %283, %286 : vector<8x8xf32>
      %288 = arith.truncf %280 : vector<8x8xf32> to vector<8x8xbf16>
      %c2_188 = arith.constant 2 : index
      %c0_189 = arith.constant 0 : index
      %c0_190 = arith.constant 0 : index
      %289 = vector.load %arg19[%c2_188, %c0_189, %c0_190] : memref<4x8x8xbf16, #tpu.memory_space<vmem>>, vector<1x8x8xbf16>
      %290 = vector.shape_cast %289 : vector<1x8x8xbf16> to vector<8x8xbf16>
      %291 = vector.shape_cast %288 : vector<8x8xbf16> to vector<1x8x8xbf16>
      tpu.vector_store %arg19[%c2_188, %c0_189, %c0_190], %291 {strides = array<i32>} : memref<4x8x8xbf16, #tpu.memory_space<vmem>>, vector<1x8x8xbf16>,
      %292 = arith.truncf %287 : vector<8x8xf32> to vector<8x8xbf16>
      %c2_191 = arith.constant 2 : index
      %c0_192 = arith.constant 0 : index
      %c0_193 = arith.constant 0 : index
      %293 = vector.load %arg20[%c2_191, %c0_192, %c0_193] : memref<4x8x8xbf16, #tpu.memory_space<vmem>>, vector<1x8x8xbf16>
      %294 = vector.shape_cast %293 : vector<1x8x8xbf16> to vector<8x8xbf16>
      %295 = vector.shape_cast %292 : vector<8x8xbf16> to vector<1x8x8xbf16>
      tpu.vector_store %arg20[%c2_191, %c0_192, %c0_193], %295 {strides = array<i32>} : memref<4x8x8xbf16, #tpu.memory_space<vmem>>, vector<1x8x8xbf16>,
      %c3_194 = arith.constant 3 : index
      %c0_195 = arith.constant 0 : index
      %c0_196 = arith.constant 0 : index
      %296 = vector.load %arg6[%c3_194, %c0_195, %c0_196] : memref<4x32x8xbf16, #tpu.memory_space<vmem>>, vector<1x32x8xbf16>
      %297 = vector.shape_cast %296 : vector<1x32x8xbf16> to vector<32x8xbf16>
      %cst_197 = arith.constant dense<0.000000e+00> : vector<8x8xf32>
      %298 = tpu.matmul %229, %297, %cst_197 {dimension_numbers = #tpu.dot_dimension_numbers<[1], [0], [0], [1], [0, 0, 1, 1], [], []>} : vector<8x32xbf16>, vector<32x8xbf16>, vector<8x8xf32> -> vector<8x8xf32>
      %c3_198 = arith.constant 3 : index
      %c0_199 = arith.constant 0 : index
      %c0_200 = arith.constant 0 : index
      %299 = vector.load %arg9[%c3_198, %c0_199, %c0_200] : memref<4x1x8xf32, #tpu.memory_space<vmem>>, vector<1x1x8xf32>
      %300 = vector.shape_cast %299 : vector<1x1x8xf32> to vector<1x8xf32>
      %301 = vector.broadcast %300 : vector<1x8xf32> to vector<8x8xf32>
      %302 = arith.addf %298, %301 : vector<8x8xf32>
      %c3_201 = arith.constant 3 : index
      %c0_202 = arith.constant 0 : index
      %c0_203 = arith.constant 0 : index
      %303 = vector.load %arg7[%c3_201, %c0_202, %c0_203] : memref<4x32x8xbf16, #tpu.memory_space<vmem>>, vector<1x32x8xbf16>
      %304 = vector.shape_cast %303 : vector<1x32x8xbf16> to vector<32x8xbf16>
      %cst_204 = arith.constant dense<0.000000e+00> : vector<8x8xf32>
      %305 = tpu.matmul %229, %304, %cst_204 {dimension_numbers = #tpu.dot_dimension_numbers<[1], [0], [0], [1], [0, 0, 1, 1], [], []>} : vector<8x32xbf16>, vector<32x8xbf16>, vector<8x8xf32> -> vector<8x8xf32>
      %c3_205 = arith.constant 3 : index
      %c0_206 = arith.constant 0 : index
      %c0_207 = arith.constant 0 : index
      %306 = vector.load %arg10[%c3_205, %c0_206, %c0_207] : memref<4x1x8xf32, #tpu.memory_space<vmem>>, vector<1x1x8xf32>
      %307 = vector.shape_cast %306 : vector<1x1x8xf32> to vector<1x8xf32>
      %308 = vector.broadcast %307 : vector<1x8xf32> to vector<8x8xf32>
      %309 = arith.addf %305, %308 : vector<8x8xf32>
      %310 = arith.truncf %302 : vector<8x8xf32> to vector<8x8xbf16>
      %c3_208 = arith.constant 3 : index
      %c0_209 = arith.constant 0 : index
      %c0_210 = arith.constant 0 : index
      %311 = vector.load %arg19[%c3_208, %c0_209, %c0_210] : memref<4x8x8xbf16, #tpu.memory_space<vmem>>, vector<1x8x8xbf16>
      %312 = vector.shape_cast %311 : vector<1x8x8xbf16> to vector<8x8xbf16>
      %313 = vector.shape_cast %310 : vector<8x8xbf16> to vector<1x8x8xbf16>
      tpu.vector_store %arg19[%c3_208, %c0_209, %c0_210], %313 {strides = array<i32>} : memref<4x8x8xbf16, #tpu.memory_space<vmem>>, vector<1x8x8xbf16>,
      %314 = arith.truncf %309 : vector<8x8xf32> to vector<8x8xbf16>
      %c3_211 = arith.constant 3 : index
      %c0_212 = arith.constant 0 : index
      %c0_213 = arith.constant 0 : index
      %315 = vector.load %arg20[%c3_211, %c0_212, %c0_213] : memref<4x8x8xbf16, #tpu.memory_space<vmem>>, vector<1x8x8xbf16>
      %316 = vector.shape_cast %315 : vector<1x8x8xbf16> to vector<8x8xbf16>
      %317 = vector.shape_cast %314 : vector<8x8xbf16> to vector<1x8x8xbf16>
      tpu.vector_store %arg20[%c3_211, %c0_212, %c0_213], %317 {strides = array<i32>} : memref<4x8x8xbf16, #tpu.memory_space<vmem>>, vector<1x8x8xbf16>,
    } else {
    }
    %c0 = arith.constant 0 : index
    %c0_1 = arith.constant 0 : index
    %c0_2 = arith.constant 0 : index
    %3 = vector.load %arg2[%c0, %c0_1, %c0_2] : memref<1x8x32xf32, #tpu.memory_space<vmem>>, vector<1x8x32xf32>
    %4 = vector.shape_cast %3 : vector<1x8x32xf32> to vector<8x32xf32>
    %5 = arith.truncf %4 : vector<8x32xf32> to vector<8x32xbf16>
    %c0_3 = arith.constant 0 : index
    %c0_4 = arith.constant 0 : index
    %c0_5 = arith.constant 0 : index
    %6 = vector.load %arg4[%c0_3, %c0_4, %c0_5] : memref<1x1x8xf32, #tpu.memory_space<vmem>>, vector<1x1x8xf32>
    %7 = vector.shape_cast %6 : vector<1x1x8xf32> to vector<1x8xf32>
    %cst = arith.constant 0.000000e+00 : f32
    %8 = vector.broadcast %cst : f32 to vector<1x8xf32>
    %9 = arith.cmpf ogt, %7, %8 : vector<1x8xf32>
    %cst_6 = arith.constant 0.000000e+00 : f32
    %cst_7 = arith.constant -1.000000e+09 : f32
    %10 = vector.broadcast %cst_6 : f32 to vector<1x8xf32>
    %11 = vector.broadcast %cst_7 : f32 to vector<1x8xf32>
    %12 = arith.select %9, %10, %11 : vector<1x8xi1>, vector<1x8xf32>
    %cst_8 = arith.constant 0.000000e+00 : f32
    %13 = vector.broadcast %cst_8 : f32 to vector<8x32xf32>
    %c0_9 = arith.constant 0 : index
    %c0_10 = arith.constant 0 : index
    %c0_11 = arith.constant 0 : index
    %14 = vector.load %arg5[%c0_9, %c0_10, %c0_11] : memref<4x32x8xbf16, #tpu.memory_space<vmem>>, vector<1x32x8xbf16>
    %15 = vector.shape_cast %14 : vector<1x32x8xbf16> to vector<32x8xbf16>
    %cst_12 = arith.constant dense<0.000000e+00> : vector<8x8xf32>
    %16 = tpu.matmul %5, %15, %cst_12 {dimension_numbers = #tpu.dot_dimension_numbers<[1], [0], [0], [1], [0, 0, 1, 1], [], []>} : vector<8x32xbf16>, vector<32x8xbf16>, vector<8x8xf32> -> vector<8x8xf32>
    %c0_13 = arith.constant 0 : index
    %c0_14 = arith.constant 0 : index
    %c0_15 = arith.constant 0 : index
    %17 = vector.load %arg8[%c0_13, %c0_14, %c0_15] : memref<4x1x8xf32, #tpu.memory_space<vmem>>, vector<1x1x8xf32>
    %18 = vector.shape_cast %17 : vector<1x1x8xf32> to vector<1x8xf32>
    %19 = vector.broadcast %18 : vector<1x8xf32> to vector<8x8xf32>
    %20 = arith.addf %16, %19 : vector<8x8xf32>
    %cst_16 = arith.constant 0.353553385 : f32
    %21 = vector.broadcast %cst_16 : f32 to vector<8x8xf32>
    %22 = arith.mulf %20, %21 : vector<8x8xf32>
    %c0_17 = arith.constant 0 : index
    %c0_18 = arith.constant 0 : index
    %c0_19 = arith.constant 0 : index
    %23 = vector.load %arg19[%c0_17, %c0_18, %c0_19] : memref<4x8x8xbf16, #tpu.memory_space<vmem>>, vector<1x8x8xbf16>
    %24 = vector.shape_cast %23 : vector<1x8x8xbf16> to vector<8x8xbf16>
    %c0_20 = arith.constant 0 : index
    %c0_21 = arith.constant 0 : index
    %c0_22 = arith.constant 0 : index
    %25 = vector.load %arg20[%c0_20, %c0_21, %c0_22] : memref<4x8x8xbf16, #tpu.memory_space<vmem>>, vector<1x8x8xbf16>
    %26 = vector.shape_cast %25 : vector<1x8x8xbf16> to vector<8x8xbf16>
    %27 = arith.truncf %22 : vector<8x8xf32> to vector<8x8xbf16>
    %cst_23 = arith.constant dense<0.000000e+00> : vector<8x8xf32>
    %28 = tpu.matmul %27, %24, %cst_23 {dimension_numbers = #tpu.dot_dimension_numbers<[1], [1], [0], [0], [0, 0, 1, 0], [], []>} : vector<8x8xbf16>, vector<8x8xbf16>, vector<8x8xf32> -> vector<8x8xf32>
    %29 = vector.broadcast %12 : vector<1x8xf32> to vector<8x8xf32>
    %30 = arith.addf %28, %29 : vector<8x8xf32>
    %cst_24 = arith.constant dense<0xFF800000> : vector<8xf32>
    %31 = vector.multi_reduction <maximumf>, %30, %cst_24 [1] : vector<8x8xf32> to vector<8xf32>
    %32 = vector.shape_cast %31 : vector<8xf32> to vector<8x1xf32>
    %33 = vector.broadcast %32 : vector<8x1xf32> to vector<8x8xf32>
    %34 = arith.subf %30, %33 : vector<8x8xf32>
    %35 = math.exp %34 : vector<8x8xf32>
    %cst_25 = arith.constant dense<0.000000e+00> : vector<8xf32>
    %36 = vector.multi_reduction <add>, %35, %cst_25 [1] : vector<8x8xf32> to vector<8xf32>
    %37 = vector.shape_cast %36 : vector<8xf32> to vector<8x1xf32>
    %38 = tpu.reciprocal %37 {approx = true} : vector<8x1xf32> -> vector<8x1xf32>
    %39 = vector.broadcast %38 : vector<8x1xf32> to vector<8x8xf32>
    %40 = arith.mulf %35, %39 : vector<8x8xf32>
    %41 = arith.truncf %40 : vector<8x8xf32> to vector<8x8xbf16>
    %cst_26 = arith.constant dense<0.000000e+00> : vector<8x8xf32>
    %42 = tpu.matmul %41, %26, %cst_26 {dimension_numbers = #tpu.dot_dimension_numbers<[1], [0], [0], [1], [0, 0, 1, 1], [], []>} : vector<8x8xbf16>, vector<8x8xbf16>, vector<8x8xf32> -> vector<8x8xf32>
    %43 = arith.truncf %42 : vector<8x8xf32> to vector<8x8xbf16>
    %c0_27 = arith.constant 0 : index
    %c0_28 = arith.constant 0 : index
    %c0_29 = arith.constant 0 : index
    %44 = vector.load %arg11[%c0_27, %c0_28, %c0_29] : memref<4x8x32xbf16, #tpu.memory_space<vmem>>, vector<1x8x32xbf16>
    %45 = vector.shape_cast %44 : vector<1x8x32xbf16> to vector<8x32xbf16>
    %cst_30 = arith.constant dense<0.000000e+00> : vector<8x32xf32>
    %46 = tpu.matmul %43, %45, %cst_30 {dimension_numbers = #tpu.dot_dimension_numbers<[1], [0], [0], [1], [0, 0, 1, 1], [], []>} : vector<8x8xbf16>, vector<8x32xbf16>, vector<8x32xf32> -> vector<8x32xf32>
    %47 = arith.addf %13, %46 : vector<8x32xf32>
    %c1 = arith.constant 1 : index
    %c0_31 = arith.constant 0 : index
    %c0_32 = arith.constant 0 : index
    %48 = vector.load %arg5[%c1, %c0_31, %c0_32] : memref<4x32x8xbf16, #tpu.memory_space<vmem>>, vector<1x32x8xbf16>
    %49 = vector.shape_cast %48 : vector<1x32x8xbf16> to vector<32x8xbf16>
    %cst_33 = arith.constant dense<0.000000e+00> : vector<8x8xf32>
    %50 = tpu.matmul %5, %49, %cst_33 {dimension_numbers = #tpu.dot_dimension_numbers<[1], [0], [0], [1], [0, 0, 1, 1], [], []>} : vector<8x32xbf16>, vector<32x8xbf16>, vector<8x8xf32> -> vector<8x8xf32>
    %c1_34 = arith.constant 1 : index
    %c0_35 = arith.constant 0 : index
    %c0_36 = arith.constant 0 : index
    %51 = vector.load %arg8[%c1_34, %c0_35, %c0_36] : memref<4x1x8xf32, #tpu.memory_space<vmem>>, vector<1x1x8xf32>
    %52 = vector.shape_cast %51 : vector<1x1x8xf32> to vector<1x8xf32>
    %53 = vector.broadcast %52 : vector<1x8xf32> to vector<8x8xf32>
    %54 = arith.addf %50, %53 : vector<8x8xf32>
    %cst_37 = arith.constant 0.353553385 : f32
    %55 = vector.broadcast %cst_37 : f32 to vector<8x8xf32>
    %56 = arith.mulf %54, %55 : vector<8x8xf32>
    %c1_38 = arith.constant 1 : index
    %c0_39 = arith.constant 0 : index
    %c0_40 = arith.constant 0 : index
    %57 = vector.load %arg19[%c1_38, %c0_39, %c0_40] : memref<4x8x8xbf16, #tpu.memory_space<vmem>>, vector<1x8x8xbf16>
    %58 = vector.shape_cast %57 : vector<1x8x8xbf16> to vector<8x8xbf16>
    %c1_41 = arith.constant 1 : index
    %c0_42 = arith.constant 0 : index
    %c0_43 = arith.constant 0 : index
    %59 = vector.load %arg20[%c1_41, %c0_42, %c0_43] : memref<4x8x8xbf16, #tpu.memory_space<vmem>>, vector<1x8x8xbf16>
    %60 = vector.shape_cast %59 : vector<1x8x8xbf16> to vector<8x8xbf16>
    %61 = arith.truncf %56 : vector<8x8xf32> to vector<8x8xbf16>
    %cst_44 = arith.constant dense<0.000000e+00> : vector<8x8xf32>
    %62 = tpu.matmul %61, %58, %cst_44 {dimension_numbers = #tpu.dot_dimension_numbers<[1], [1], [0], [0], [0, 0, 1, 0], [], []>} : vector<8x8xbf16>, vector<8x8xbf16>, vector<8x8xf32> -> vector<8x8xf32>
    %63 = vector.broadcast %12 : vector<1x8xf32> to vector<8x8xf32>
    %64 = arith.addf %62, %63 : vector<8x8xf32>
    %cst_45 = arith.constant dense<0xFF800000> : vector<8xf32>
    %65 = vector.multi_reduction <maximumf>, %64, %cst_45 [1] : vector<8x8xf32> to vector<8xf32>
    %66 = vector.shape_cast %65 : vector<8xf32> to vector<8x1xf32>
    %67 = vector.broadcast %66 : vector<8x1xf32> to vector<8x8xf32>
    %68 = arith.subf %64, %67 : vector<8x8xf32>
    %69 = math.exp %68 : vector<8x8xf32>
    %cst_46 = arith.constant dense<0.000000e+00> : vector<8xf32>
    %70 = vector.multi_reduction <add>, %69, %cst_46 [1] : vector<8x8xf32> to vector<8xf32>
    %71 = vector.shape_cast %70 : vector<8xf32> to vector<8x1xf32>
    %72 = tpu.reciprocal %71 {approx = true} : vector<8x1xf32> -> vector<8x1xf32>
    %73 = vector.broadcast %72 : vector<8x1xf32> to vector<8x8xf32>
    %74 = arith.mulf %69, %73 : vector<8x8xf32>
    %75 = arith.truncf %74 : vector<8x8xf32> to vector<8x8xbf16>
    %cst_47 = arith.constant dense<0.000000e+00> : vector<8x8xf32>
    %76 = tpu.matmul %75, %60, %cst_47 {dimension_numbers = #tpu.dot_dimension_numbers<[1], [0], [0], [1], [0, 0, 1, 1], [], []>} : vector<8x8xbf16>, vector<8x8xbf16>, vector<8x8xf32> -> vector<8x8xf32>
    %77 = arith.truncf %76 : vector<8x8xf32> to vector<8x8xbf16>
    %c1_48 = arith.constant 1 : index
    %c0_49 = arith.constant 0 : index
    %c0_50 = arith.constant 0 : index
    %78 = vector.load %arg11[%c1_48, %c0_49, %c0_50] : memref<4x8x32xbf16, #tpu.memory_space<vmem>>, vector<1x8x32xbf16>
    %79 = vector.shape_cast %78 : vector<1x8x32xbf16> to vector<8x32xbf16>
    %cst_51 = arith.constant dense<0.000000e+00> : vector<8x32xf32>
    %80 = tpu.matmul %77, %79, %cst_51 {dimension_numbers = #tpu.dot_dimension_numbers<[1], [0], [0], [1], [0, 0, 1, 1], [], []>} : vector<8x8xbf16>, vector<8x32xbf16>, vector<8x32xf32> -> vector<8x32xf32>
    %81 = arith.addf %47, %80 : vector<8x32xf32>
    %c2 = arith.constant 2 : index
    %c0_52 = arith.constant 0 : index
    %c0_53 = arith.constant 0 : index
    %82 = vector.load %arg5[%c2, %c0_52, %c0_53] : memref<4x32x8xbf16, #tpu.memory_space<vmem>>, vector<1x32x8xbf16>
    %83 = vector.shape_cast %82 : vector<1x32x8xbf16> to vector<32x8xbf16>
    %cst_54 = arith.constant dense<0.000000e+00> : vector<8x8xf32>
    %84 = tpu.matmul %5, %83, %cst_54 {dimension_numbers = #tpu.dot_dimension_numbers<[1], [0], [0], [1], [0, 0, 1, 1], [], []>} : vector<8x32xbf16>, vector<32x8xbf16>, vector<8x8xf32> -> vector<8x8xf32>
    %c2_55 = arith.constant 2 : index
    %c0_56 = arith.constant 0 : index
    %c0_57 = arith.constant 0 : index
    %85 = vector.load %arg8[%c2_55, %c0_56, %c0_57] : memref<4x1x8xf32, #tpu.memory_space<vmem>>, vector<1x1x8xf32>
    %86 = vector.shape_cast %85 : vector<1x1x8xf32> to vector<1x8xf32>
    %87 = vector.broadcast %86 : vector<1x8xf32> to vector<8x8xf32>
    %88 = arith.addf %84, %87 : vector<8x8xf32>
    %cst_58 = arith.constant 0.353553385 : f32
    %89 = vector.broadcast %cst_58 : f32 to vector<8x8xf32>
    %90 = arith.mulf %88, %89 : vector<8x8xf32>
    %c2_59 = arith.constant 2 : index
    %c0_60 = arith.constant 0 : index
    %c0_61 = arith.constant 0 : index
    %91 = vector.load %arg19[%c2_59, %c0_60, %c0_61] : memref<4x8x8xbf16, #tpu.memory_space<vmem>>, vector<1x8x8xbf16>
    %92 = vector.shape_cast %91 : vector<1x8x8xbf16> to vector<8x8xbf16>
    %c2_62 = arith.constant 2 : index
    %c0_63 = arith.constant 0 : index
    %c0_64 = arith.constant 0 : index
    %93 = vector.load %arg20[%c2_62, %c0_63, %c0_64] : memref<4x8x8xbf16, #tpu.memory_space<vmem>>, vector<1x8x8xbf16>
    %94 = vector.shape_cast %93 : vector<1x8x8xbf16> to vector<8x8xbf16>
    %95 = arith.truncf %90 : vector<8x8xf32> to vector<8x8xbf16>
    %cst_65 = arith.constant dense<0.000000e+00> : vector<8x8xf32>
    %96 = tpu.matmul %95, %92, %cst_65 {dimension_numbers = #tpu.dot_dimension_numbers<[1], [1], [0], [0], [0, 0, 1, 0], [], []>} : vector<8x8xbf16>, vector<8x8xbf16>, vector<8x8xf32> -> vector<8x8xf32>
    %97 = vector.broadcast %12 : vector<1x8xf32> to vector<8x8xf32>
    %98 = arith.addf %96, %97 : vector<8x8xf32>
    %cst_66 = arith.constant dense<0xFF800000> : vector<8xf32>
    %99 = vector.multi_reduction <maximumf>, %98, %cst_66 [1] : vector<8x8xf32> to vector<8xf32>
    %100 = vector.shape_cast %99 : vector<8xf32> to vector<8x1xf32>
    %101 = vector.broadcast %100 : vector<8x1xf32> to vector<8x8xf32>
    %102 = arith.subf %98, %101 : vector<8x8xf32>
    %103 = math.exp %102 : vector<8x8xf32>
    %cst_67 = arith.constant dense<0.000000e+00> : vector<8xf32>
    %104 = vector.multi_reduction <add>, %103, %cst_67 [1] : vector<8x8xf32> to vector<8xf32>
    %105 = vector.shape_cast %104 : vector<8xf32> to vector<8x1xf32>
    %106 = tpu.reciprocal %105 {approx = true} : vector<8x1xf32> -> vector<8x1xf32>
    %107 = vector.broadcast %106 : vector<8x1xf32> to vector<8x8xf32>
    %108 = arith.mulf %103, %107 : vector<8x8xf32>
    %109 = arith.truncf %108 : vector<8x8xf32> to vector<8x8xbf16>
    %cst_68 = arith.constant dense<0.000000e+00> : vector<8x8xf32>
    %110 = tpu.matmul %109, %94, %cst_68 {dimension_numbers = #tpu.dot_dimension_numbers<[1], [0], [0], [1], [0, 0, 1, 1], [], []>} : vector<8x8xbf16>, vector<8x8xbf16>, vector<8x8xf32> -> vector<8x8xf32>
    %111 = arith.truncf %110 : vector<8x8xf32> to vector<8x8xbf16>
    %c2_69 = arith.constant 2 : index
    %c0_70 = arith.constant 0 : index
    %c0_71 = arith.constant 0 : index
    %112 = vector.load %arg11[%c2_69, %c0_70, %c0_71] : memref<4x8x32xbf16, #tpu.memory_space<vmem>>, vector<1x8x32xbf16>
    %113 = vector.shape_cast %112 : vector<1x8x32xbf16> to vector<8x32xbf16>
    %cst_72 = arith.constant dense<0.000000e+00> : vector<8x32xf32>
    %114 = tpu.matmul %111, %113, %cst_72 {dimension_numbers = #tpu.dot_dimension_numbers<[1], [0], [0], [1], [0, 0, 1, 1], [], []>} : vector<8x8xbf16>, vector<8x32xbf16>, vector<8x32xf32> -> vector<8x32xf32>
    %115 = arith.addf %81, %114 : vector<8x32xf32>
    %c3 = arith.constant 3 : index
    %c0_73 = arith.constant 0 : index
    %c0_74 = arith.constant 0 : index
    %116 = vector.load %arg5[%c3, %c0_73, %c0_74] : memref<4x32x8xbf16, #tpu.memory_space<vmem>>, vector<1x32x8xbf16>
    %117 = vector.shape_cast %116 : vector<1x32x8xbf16> to vector<32x8xbf16>
    %cst_75 = arith.constant dense<0.000000e+00> : vector<8x8xf32>
    %118 = tpu.matmul %5, %117, %cst_75 {dimension_numbers = #tpu.dot_dimension_numbers<[1], [0], [0], [1], [0, 0, 1, 1], [], []>} : vector<8x32xbf16>, vector<32x8xbf16>, vector<8x8xf32> -> vector<8x8xf32>
    %c3_76 = arith.constant 3 : index
    %c0_77 = arith.constant 0 : index
    %c0_78 = arith.constant 0 : index
    %119 = vector.load %arg8[%c3_76, %c0_77, %c0_78] : memref<4x1x8xf32, #tpu.memory_space<vmem>>, vector<1x1x8xf32>
    %120 = vector.shape_cast %119 : vector<1x1x8xf32> to vector<1x8xf32>
    %121 = vector.broadcast %120 : vector<1x8xf32> to vector<8x8xf32>
    %122 = arith.addf %118, %121 : vector<8x8xf32>
    %cst_79 = arith.constant 0.353553385 : f32
    %123 = vector.broadcast %cst_79 : f32 to vector<8x8xf32>
    %124 = arith.mulf %122, %123 : vector<8x8xf32>
    %c3_80 = arith.constant 3 : index
    %c0_81 = arith.constant 0 : index
    %c0_82 = arith.constant 0 : index
    %125 = vector.load %arg19[%c3_80, %c0_81, %c0_82] : memref<4x8x8xbf16, #tpu.memory_space<vmem>>, vector<1x8x8xbf16>
    %126 = vector.shape_cast %125 : vector<1x8x8xbf16> to vector<8x8xbf16>
    %c3_83 = arith.constant 3 : index
    %c0_84 = arith.constant 0 : index
    %c0_85 = arith.constant 0 : index
    %127 = vector.load %arg20[%c3_83, %c0_84, %c0_85] : memref<4x8x8xbf16, #tpu.memory_space<vmem>>, vector<1x8x8xbf16>
    %128 = vector.shape_cast %127 : vector<1x8x8xbf16> to vector<8x8xbf16>
    %129 = arith.truncf %124 : vector<8x8xf32> to vector<8x8xbf16>
    %cst_86 = arith.constant dense<0.000000e+00> : vector<8x8xf32>
    %130 = tpu.matmul %129, %126, %cst_86 {dimension_numbers = #tpu.dot_dimension_numbers<[1], [1], [0], [0], [0, 0, 1, 0], [], []>} : vector<8x8xbf16>, vector<8x8xbf16>, vector<8x8xf32> -> vector<8x8xf32>
    %131 = vector.broadcast %12 : vector<1x8xf32> to vector<8x8xf32>
    %132 = arith.addf %130, %131 : vector<8x8xf32>
    %cst_87 = arith.constant dense<0xFF800000> : vector<8xf32>
    %133 = vector.multi_reduction <maximumf>, %132, %cst_87 [1] : vector<8x8xf32> to vector<8xf32>
    %134 = vector.shape_cast %133 : vector<8xf32> to vector<8x1xf32>
    %135 = vector.broadcast %134 : vector<8x1xf32> to vector<8x8xf32>
    %136 = arith.subf %132, %135 : vector<8x8xf32>
    %137 = math.exp %136 : vector<8x8xf32>
    %cst_88 = arith.constant dense<0.000000e+00> : vector<8xf32>
    %138 = vector.multi_reduction <add>, %137, %cst_88 [1] : vector<8x8xf32> to vector<8xf32>
    %139 = vector.shape_cast %138 : vector<8xf32> to vector<8x1xf32>
    %140 = tpu.reciprocal %139 {approx = true} : vector<8x1xf32> -> vector<8x1xf32>
    %141 = vector.broadcast %140 : vector<8x1xf32> to vector<8x8xf32>
    %142 = arith.mulf %137, %141 : vector<8x8xf32>
    %143 = arith.truncf %142 : vector<8x8xf32> to vector<8x8xbf16>
    %cst_89 = arith.constant dense<0.000000e+00> : vector<8x8xf32>
    %144 = tpu.matmul %143, %128, %cst_89 {dimension_numbers = #tpu.dot_dimension_numbers<[1], [0], [0], [1], [0, 0, 1, 1], [], []>} : vector<8x8xbf16>, vector<8x8xbf16>, vector<8x8xf32> -> vector<8x8xf32>
    %145 = arith.truncf %144 : vector<8x8xf32> to vector<8x8xbf16>
    %c3_90 = arith.constant 3 : index
    %c0_91 = arith.constant 0 : index
    %c0_92 = arith.constant 0 : index
    %146 = vector.load %arg11[%c3_90, %c0_91, %c0_92] : memref<4x8x32xbf16, #tpu.memory_space<vmem>>, vector<1x8x32xbf16>
    %147 = vector.shape_cast %146 : vector<1x8x32xbf16> to vector<8x32xbf16>
    %cst_93 = arith.constant dense<0.000000e+00> : vector<8x32xf32>
    %148 = tpu.matmul %145, %147, %cst_93 {dimension_numbers = #tpu.dot_dimension_numbers<[1], [0], [0], [1], [0, 0, 1, 1], [], []>} : vector<8x8xbf16>, vector<8x32xbf16>, vector<8x32xf32> -> vector<8x32xf32>
    %149 = arith.addf %115, %148 : vector<8x32xf32>
    %c0_94 = arith.constant 0 : index
    %c0_95 = arith.constant 0 : index
    %150 = vector.load %arg12[%c0_94, %c0_95] : memref<1x32xf32, #tpu.memory_space<vmem>>, vector<1x32xf32>
    %151 = vector.broadcast %150 : vector<1x32xf32> to vector<8x32xf32>
    %152 = arith.addf %149, %151 : vector<8x32xf32>
    %c0_96 = arith.constant 0 : index
    %c0_97 = arith.constant 0 : index
    %153 = vector.load %arg17[%c0_96, %c0_97] : memref<4x32xf32, #tpu.memory_space<vmem>>, vector<1x32xf32>
    %c1_98 = arith.constant 1 : index
    %c0_99 = arith.constant 0 : index
    %154 = vector.load %arg17[%c1_98, %c0_99] : memref<4x32xf32, #tpu.memory_space<vmem>>, vector<1x32xf32>
    %c2_100 = arith.constant 2 : index
    %c0_101 = arith.constant 0 : index
    %155 = vector.load %arg17[%c2_100, %c0_101] : memref<4x32xf32, #tpu.memory_space<vmem>>, vector<1x32xf32>
    %c3_102 = arith.constant 3 : index
    %c0_103 = arith.constant 0 : index
    %156 = vector.load %arg17[%c3_102, %c0_103] : memref<4x32xf32, #tpu.memory_space<vmem>>, vector<1x32xf32>
    %157 = arith.addf %4, %152 : vector<8x32xf32>
    %cst_104 = arith.constant dense<0.000000e+00> : vector<8xf32>
    %158 = vector.multi_reduction <add>, %157, %cst_104 [1] : vector<8x32xf32> to vector<8xf32>
    %159 = vector.shape_cast %158 : vector<8xf32> to vector<8x1xf32>
    %cst_105 = arith.constant 3.200000e+01 : f32
    %160 = vector.broadcast %cst_105 : f32 to vector<8x1xf32>
    %161 = arith.divf %159, %160 : vector<8x1xf32>
    %162 = vector.broadcast %161 : vector<8x1xf32> to vector<8x32xf32>
    %163 = arith.subf %157, %162 : vector<8x32xf32>
    %164 = arith.mulf %163, %163 : vector<8x32xf32>
    %cst_106 = arith.constant dense<0.000000e+00> : vector<8xf32>
    %165 = vector.multi_reduction <add>, %164, %cst_106 [1] : vector<8x32xf32> to vector<8xf32>
    %166 = vector.shape_cast %165 : vector<8xf32> to vector<8x1xf32>
    %cst_107 = arith.constant 3.200000e+01 : f32
    %167 = vector.broadcast %cst_107 : f32 to vector<8x1xf32>
    %168 = arith.divf %166, %167 : vector<8x1xf32>
    %cst_108 = arith.constant 9.99999996E-13 : f32
    %169 = vector.broadcast %cst_108 : f32 to vector<8x1xf32>
    %170 = arith.addf %168, %169 : vector<8x1xf32>
    %171 = math.rsqrt %170 : vector<8x1xf32>
    %172 = vector.broadcast %171 : vector<8x1xf32> to vector<8x32xf32>
    %173 = arith.mulf %163, %172 : vector<8x32xf32>
    %174 = vector.broadcast %153 : vector<1x32xf32> to vector<8x32xf32>
    %175 = arith.mulf %173, %174 : vector<8x32xf32>
    %176 = vector.broadcast %154 : vector<1x32xf32> to vector<8x32xf32>
    %177 = arith.addf %175, %176 : vector<8x32xf32>
    %178 = arith.truncf %177 : vector<8x32xf32> to vector<8x32xbf16>
    %c0_109 = arith.constant 0 : index
    %c0_110 = arith.constant 0 : index
    %179 = vector.load %arg13[%c0_109, %c0_110] : memref<32x128xbf16, #tpu.memory_space<vmem>>, vector<32x128xbf16>
    %cst_111 = arith.constant dense<0.000000e+00> : vector<8x128xf32>
    %180 = tpu.matmul %178, %179, %cst_111 {dimension_numbers = #tpu.dot_dimension_numbers<[1], [0], [0], [1], [0, 0, 1, 1], [], []>} : vector<8x32xbf16>, vector<32x128xbf16>, vector<8x128xf32> -> vector<8x128xf32>
    %c0_112 = arith.constant 0 : index
    %c0_113 = arith.constant 0 : index
    %181 = vector.load %arg14[%c0_112, %c0_113] : memref<1x128xf32, #tpu.memory_space<vmem>>, vector<1x128xf32>
    %182 = vector.broadcast %181 : vector<1x128xf32> to vector<8x128xf32>
    %183 = arith.addf %180, %182 : vector<8x128xf32>
    %cst_114 = arith.constant 5.000000e-01 : f32
    %184 = vector.broadcast %cst_114 : f32 to vector<8x128xf32>
    %185 = arith.mulf %184, %183 : vector<8x128xf32>
    %cst_115 = arith.constant 4.471500e-02 : f32
    %186 = vector.broadcast %cst_115 : f32 to vector<8x128xf32>
    %187 = arith.mulf %186, %183 : vector<8x128xf32>
    %188 = arith.mulf %187, %183 : vector<8x128xf32>
    %189 = arith.mulf %188, %183 : vector<8x128xf32>
    %190 = arith.addf %183, %189 : vector<8x128xf32>
    %cst_116 = arith.constant 0.797884583 : f32
    %191 = vector.broadcast %cst_116 : f32 to vector<8x128xf32>
    %192 = arith.mulf %191, %190 : vector<8x128xf32>
    %193 = math.tanh %192 : vector<8x128xf32>
    %cst_117 = arith.constant 1.000000e+00 : f32
    %194 = vector.broadcast %cst_117 : f32 to vector<8x128xf32>
    %195 = arith.addf %194, %193 : vector<8x128xf32>
    %196 = arith.mulf %185, %195 : vector<8x128xf32>
    %197 = arith.truncf %196 : vector<8x128xf32> to vector<8x128xbf16>
    %c0_118 = arith.constant 0 : index
    %c0_119 = arith.constant 0 : index
    %198 = vector.load %arg15[%c0_118, %c0_119] : memref<128x32xbf16, #tpu.memory_space<vmem>>, vector<128x32xbf16>
    %cst_120 = arith.constant dense<0.000000e+00> : vector<8x32xf32>
    %199 = tpu.matmul %197, %198, %cst_120 {dimension_numbers = #tpu.dot_dimension_numbers<[1], [0], [0], [1], [0, 0, 1, 1], [], []>} : vector<8x128xbf16>, vector<128x32xbf16>, vector<8x32xf32> -> vector<8x32xf32>
    %c0_121 = arith.constant 0 : index
    %c0_122 = arith.constant 0 : index
    %200 = vector.load %arg16[%c0_121, %c0_122] : memref<1x32xf32, #tpu.memory_space<vmem>>, vector<1x32xf32>
    %201 = vector.broadcast %200 : vector<1x32xf32> to vector<8x32xf32>
    %202 = arith.addf %199, %201 : vector<8x32xf32>
    %203 = arith.addf %177, %202 : vector<8x32xf32>
    %cst_123 = arith.constant dense<0.000000e+00> : vector<8xf32>
    %204 = vector.multi_reduction <add>, %203, %cst_123 [1] : vector<8x32xf32> to vector<8xf32>
    %205 = vector.shape_cast %204 : vector<8xf32> to vector<8x1xf32>
    %cst_124 = arith.constant 3.200000e+01 : f32
    %206 = vector.broadcast %cst_124 : f32 to vector<8x1xf32>
    %207 = arith.divf %205, %206 : vector<8x1xf32>
    %208 = vector.broadcast %207 : vector<8x1xf32> to vector<8x32xf32>
    %209 = arith.subf %203, %208 : vector<8x32xf32>
    %210 = arith.mulf %209, %209 : vector<8x32xf32>
    %cst_125 = arith.constant dense<0.000000e+00> : vector<8xf32>
    %211 = vector.multi_reduction <add>, %210, %cst_125 [1] : vector<8x32xf32> to vector<8xf32>
    %212 = vector.shape_cast %211 : vector<8xf32> to vector<8x1xf32>
    %cst_126 = arith.constant 3.200000e+01 : f32
    %213 = vector.broadcast %cst_126 : f32 to vector<8x1xf32>
    %214 = arith.divf %212, %213 : vector<8x1xf32>
    %cst_127 = arith.constant 9.99999996E-13 : f32
    %215 = vector.broadcast %cst_127 : f32 to vector<8x1xf32>
    %216 = arith.addf %214, %215 : vector<8x1xf32>
    %217 = math.rsqrt %216 : vector<8x1xf32>
    %218 = vector.broadcast %217 : vector<8x1xf32> to vector<8x32xf32>
    %219 = arith.mulf %209, %218 : vector<8x32xf32>
    %220 = vector.broadcast %155 : vector<1x32xf32> to vector<8x32xf32>
    %221 = arith.mulf %219, %220 : vector<8x32xf32>
    %222 = vector.broadcast %156 : vector<1x32xf32> to vector<8x32xf32>
    %223 = arith.addf %221, %222 : vector<8x32xf32>
    %c0_128 = arith.constant 0 : index
    %c0_129 = arith.constant 0 : index
    %c0_130 = arith.constant 0 : index
    %224 = vector.load %arg18[%c0_128, %c0_129, %c0_130] : memref<1x8x32xf32, #tpu.memory_space<vmem>>, vector<1x8x32xf32>
    %225 = vector.shape_cast %224 : vector<1x8x32xf32> to vector<8x32xf32>
    %226 = vector.shape_cast %223 : vector<8x32xf32> to vector<1x8x32xf32>
    tpu.vector_store %arg18[%c0_128, %c0_129, %c0_130], %226 {strides = array<i32>} : memref<1x8x32xf32, #tpu.memory_space<vmem>>, vector<1x8x32xf32>,
    return
  }
  func.func @transform_0(%arg0: i32, %arg1: i32) -> (i32, i32, i32) {
    %c0_i32 = arith.constant 0 : i32
    %c0_i32_0 = arith.constant 0 : i32
    return %arg0, %arg1, %c0_i32 : i32, i32, i32
  }
  func.func @transform_1(%arg0: i32, %arg1: i32) -> (i32, i32, i32) {
    %c0_i32 = arith.constant 0 : i32
    %c0_i32_0 = arith.constant 0 : i32
    %c0_i32_1 = arith.constant 0 : i32
    return %arg0, %c0_i32, %c0_i32_0 : i32, i32, i32
  }
  func.func @transform_2(%arg0: i32, %arg1: i32) -> (i32, i32, i32) {
    %c0_i32 = arith.constant 0 : i32
    %c0_i32_0 = arith.constant 0 : i32
    %c0_i32_1 = arith.constant 0 : i32
    return %arg0, %c0_i32, %c0_i32_0 : i32, i32, i32
  }
  func.func @transform_3(%arg0: i32, %arg1: i32) -> (i32, i32, i32) {
    %c0_i32 = arith.constant 0 : i32
    %c0_i32_0 = arith.constant 0 : i32
    %c0_i32_1 = arith.constant 0 : i32
    %c0_i32_2 = arith.constant 0 : i32
    return %c0_i32, %c0_i32_0, %c0_i32_1 : i32, i32, i32
  }
  func.func @transform_4(%arg0: i32, %arg1: i32) -> (i32, i32, i32) {
    %c0_i32 = arith.constant 0 : i32
    %c0_i32_0 = arith.constant 0 : i32
    %c0_i32_1 = arith.constant 0 : i32
    %c0_i32_2 = arith.constant 0 : i32
    return %c0_i32, %c0_i32_0, %c0_i32_1 : i32, i32, i32
  }
  func.func @transform_5(%arg0: i32, %arg1: i32) -> (i32, i32, i32) {
    %c0_i32 = arith.constant 0 : i32
    %c0_i32_0 = arith.constant 0 : i32
    %c0_i32_1 = arith.constant 0 : i32
    %c0_i32_2 = arith.constant 0 : i32
    return %c0_i32, %c0_i32_0, %c0_i32_1 : i32, i32, i32
  }
  func.func @transform_6(%arg0: i32, %arg1: i32) -> (i32, i32, i32) {
    %c0_i32 = arith.constant 0 : i32
    %c0_i32_0 = arith.constant 0 : i32
    %c0_i32_1 = arith.constant 0 : i32
    %c0_i32_2 = arith.constant 0 : i32
    return %c0_i32, %c0_i32_0, %c0_i32_1 : i32, i32, i32
  }
  func.func @transform_7(%arg0: i32, %arg1: i32) -> (i32, i32, i32) {
    %c0_i32 = arith.constant 0 : i32
    %c0_i32_0 = arith.constant 0 : i32
    %c0_i32_1 = arith.constant 0 : i32
    %c0_i32_2 = arith.constant 0 : i32
    return %c0_i32, %c0_i32_0, %c0_i32_1 : i32, i32, i32
  }
  func.func @transform_8(%arg0: i32, %arg1: i32) -> (i32, i32, i32) {
    %c0_i32 = arith.constant 0 : i32
    %c0_i32_0 = arith.constant 0 : i32
    %c0_i32_1 = arith.constant 0 : i32
    %c0_i32_2 = arith.constant 0 : i32
    return %c0_i32, %c0_i32_0, %c0_i32_1 : i32, i32, i32
  }
  func.func @transform_9(%arg0: i32, %arg1: i32) -> (i32, i32, i32) {
    %c0_i32 = arith.constant 0 : i32
    %c0_i32_0 = arith.constant 0 : i32
    %c0_i32_1 = arith.constant 0 : i32
    %c0_i32_2 = arith.constant 0 : i32
    return %c0_i32, %c0_i32_0, %c0_i32_1 : i32, i32, i32
  }
  func.func @transform_10(%arg0: i32, %arg1: i32) -> (i32, i32) {
    %c0_i32 = arith.constant 0 : i32
    %c0_i32_0 = arith.constant 0 : i32
    %c0_i32_1 = arith.constant 0 : i32
    return %c0_i32, %c0_i32_0 : i32, i32
  }
  func.func @transform_11(%arg0: i32, %arg1: i32) -> (i32, i32) {
    %c0_i32 = arith.constant 0 : i32
    %c0_i32_0 = arith.constant 0 : i32
    %c0_i32_1 = arith.constant 0 : i32
    return %c0_i32, %c0_i32_0 : i32, i32
  }
  func.func @transform_12(%arg0: i32, %arg1: i32) -> (i32, i32) {
    %c0_i32 = arith.constant 0 : i32
    %c0_i32_0 = arith.constant 0 : i32
    %c0_i32_1 = arith.constant 0 : i32
    return %c0_i32, %c0_i32_0 : i32, i32
  }
  func.func @transform_13(%arg0: i32, %arg1: i32) -> (i32, i32) {
    %c0_i32 = arith.constant 0 : i32
    %c0_i32_0 = arith.constant 0 : i32
    %c0_i32_1 = arith.constant 0 : i32
    return %c0_i32, %c0_i32_0 : i32, i32
  }
  func.func @transform_14(%arg0: i32, %arg1: i32) -> (i32, i32) {
    %c0_i32 = arith.constant 0 : i32
    %c0_i32_0 = arith.constant 0 : i32
    %c0_i32_1 = arith.constant 0 : i32
    return %c0_i32, %c0_i32_0 : i32, i32
  }
  func.func @transform_15(%arg0: i32, %arg1: i32) -> (i32, i32) {
    %c0_i32 = arith.constant 0 : i32
    %c0_i32_0 = arith.constant 0 : i32
    %c0_i32_1 = arith.constant 0 : i32
    return %c0_i32, %c0_i32_0 : i32, i32
  }
  func.func @transform_16(%arg0: i32, %arg1: i32) -> (i32, i32, i32) {
    %c0_i32 = arith.constant 0 : i32
    %c0_i32_0 = arith.constant 0 : i32
    return %arg0, %arg1, %c0_i32 : i32, i32, i32
  }
}

</mosaic_0001>

<llo_original>
// kernel: tpu_custom_call.1
$region0: #{tpu_custom_call.1}
  #allocation0 [shape = 'u32[]', space=smem, size = 0x4, offset = 0x4, fixed_abs, tag = 'smem constant byte address 0x4 - core index']
  #allocation1 [shape = 'u32[72,128]{1,0:T(1,128)}', space=vmem, size = 0x9000, scoped, tag = 'internal scratch']
  #allocation2 [shape = 'bf16[4,8,8]{2,1,0:T(8,128)(2,1)}', space=vmem, size = 0x2000, scoped, tag = 'scratch operand']
  #allocation3 [shape = 'bf16[4,8,8]{2,1,0:T(8,128)(2,1)}', space=vmem, size = 0x2000, scoped, tag = 'scratch operand']
  %s0 = inlined_call_operand.vmem [shape: f32[2,8,32], index: 0, kind: input, shape index: {}]
  %s1 = inlined_call_operand.vmem [shape: f32[2,8,32], index: 1, kind: input, shape index: {}]
  %s2 = inlined_call_operand.vmem [shape: f32[2,1,8], index: 2, kind: input, shape index: {}]
  %s3 = inlined_call_operand.vmem [shape: bf16[4,32,8], index: 3, kind: input, shape index: {}]
  %s4 = inlined_call_operand.vmem [shape: bf16[4,32,8], index: 4, kind: input, shape index: {}]
  %s5 = inlined_call_operand.vmem [shape: bf16[4,32,8], index: 5, kind: input, shape index: {}]
  %s6 = inlined_call_operand.vmem [shape: f32[4,1,8], index: 6, kind: input, shape index: {}]
  %s7 = inlined_call_operand.vmem [shape: f32[4,1,8], index: 7, kind: input, shape index: {}]
  %s8 = inlined_call_operand.vmem [shape: f32[4,1,8], index: 8, kind: input, shape index: {}]
  %s9 = inlined_call_operand.vmem [shape: bf16[4,8,32], index: 9, kind: input, shape index: {}]
  %s10 = inlined_call_operand.vmem [shape: f32[1,32], index: 10, kind: input, shape index: {}]
  %s11 = inlined_call_operand.vmem [shape: bf16[32,128], index: 11, kind: input, shape index: {}]
  %s12 = inlined_call_operand.vmem [shape: f32[1,128], index: 12, kind: input, shape index: {}]
  %s13 = inlined_call_operand.vmem [shape: bf16[128,32], index: 13, kind: input, shape index: {}]
  %s14 = inlined_call_operand.vmem [shape: f32[1,32], index: 14, kind: input, shape index: {}]
  %s15 = inlined_call_operand.vmem [shape: f32[4,32], index: 15, kind: input, shape index: {}]
  %s16 = inlined_call_operand.hbm [shape: f32[2,8,32], index: 16, kind: output, shape index: {}]
  %s17 = sld [smem:[#allocation0]]
  $region101: #{tpu_custom_call.1} parent=0
    _
  %s19 = ssub.s32 1, %s17
  %s20 = scalar_select 0, %s19, %s17
  $region1: #{tpu_custom_call.1} parent=0
    #allocation4 [shape = 'u8[8192]{0}', space=vmem, size = 0x2000, scoped, tag = 'output window, operand 0']
    #allocation5 [shape = 's32[2]{0}', space=sflag, size = 0x8, scoped, tag = 'scoped memory for tpu_custom_call.1']
    %21 = vsyncpa [#allocation5], 0
    %s22 = scalar_lea.sflag [#allocation5], 1
    %23 = vsyncpa %s22, 0
    loop: start=0, step=1, limit=4
    $region2: #{tpu_custom_call.1} parent=1 // loop_pre_header
      _
    $region3: #{tpu_custom_call.1} parent=1 // loop_header
      %s25 = sphi 0, %s29
      %p26 = scmp.ge.s32.totalorder %s25, 4
      %s32 = sphi 0, %s44
      %s33 = sphi 0, %s40
      %s34 = sphi 0, %s32
      %s35 = sphi 0, %s33
      %s36 = sphi 0, %s34
      %s37 = sphi 0, %s35
      %s49 = sphi 0, %s51
      %s52 = sphi 0, %s49
      %s53 = sphi 0, %s52
      %s69 = sphi 0, %s53
      %s75 = sphi 0, %s77
      %s78 = sphi 0, %s75
      %s79 = sphi 0, %s78
      %s95 = sphi 0, %s79
      %s101 = sphi 0, %s103
      %s104 = sphi 0, %s101
      %s105 = sphi 0, %s104
      %s121 = sphi 0, %s105
      %s125 = sphi 0, %s125
      %s127 = sphi 0, %s125
      %s128 = sphi 0, %s127
      %s142 = sphi 0, %s128
      %s146 = sphi 0, %s146
      %s148 = sphi 0, %s146
      %s149 = sphi 0, %s148
      %s163 = sphi 0, %s149
      %s167 = sphi 0, %s167
      %s169 = sphi 0, %s167
      %s170 = sphi 0, %s169
      %s184 = sphi 0, %s170
      %s188 = sphi 0, %s188
      %s190 = sphi 0, %s188
      %s191 = sphi 0, %s190
      %s205 = sphi 0, %s191
      %s209 = sphi 0, %s209
      %s211 = sphi 0, %s209
      %s212 = sphi 0, %s211
      %s226 = sphi 0, %s212
      %s230 = sphi 0, %s230
      %s232 = sphi 0, %s230
      %s233 = sphi 0, %s232
      %s247 = sphi 0, %s233
      %s251 = sphi 0, %s251
      %s253 = sphi 0, %s251
      %s254 = sphi 0, %s253
      %s268 = sphi 0, %s254
      %s272 = sphi 0, %s272
      %s274 = sphi 0, %s272
      %s275 = sphi 0, %s274
      %s289 = sphi 0, %s275
      %s293 = sphi 0, %s293
      %s295 = sphi 0, %s293
      %s296 = sphi 0, %s295
      %s310 = sphi 0, %s296
      %s314 = sphi 0, %s314
      %s316 = sphi 0, %s314
      %s317 = sphi 0, %s316
      %s331 = sphi 0, %s317
      %s335 = sphi 0, %s335
      %s337 = sphi 0, %s335
      %s338 = sphi 0, %s337
      %s352 = sphi 0, %s338
      %s356 = sphi 0, %s356
      %s358 = sphi 0, %s356
      %s359 = sphi 0, %s358
      %s373 = sphi 0, %s359
      %s377 = sphi 0, %s377
      %s379 = sphi 0, %s377
      %s380 = sphi 0, %s379
      %s394 = sphi 0, %s380
      %s402 = sphi 0, %s404
      %s405 = sphi 0, %s402
      %s406 = sphi 0, %s405
      %s422 = sphi 0, %s406
    $region4: #{tpu_custom_call.1} parent=1 // loop_header_branch
      %28 = sbr.rel (%p26) target = $region8
    $region5: #{tpu_custom_call.1} parent=1 // loop_body
      %s30 = ssub.s32 %s25, 1
      %s31 = ssub.s32 %s25, 2
      %s38 = sadd.s32 1, %s33
      %p39 = scmp.ge.s32.totalorder %s38, 1
      %s40 = scalar_select %p39, 0, %s38
      %s41 = sadd.s32 1, %s32
      %s42 = scalar_select %p39, %s41, %s32
      %p43 = scmp.ge.s32.totalorder %s42, 2
      %s44 = scalar_select %p43, 0, %s42
      %s45 = ssub.s32 %s32, %s44
      %s46 = ssub.s32 %s33, %s40
      %s47 = sor.u32 %s45, %s46
      %p48 = scmp.eq.s32.totalorder %s47, 0
      %s50 = sadd.s32 %s49, 1
      %s51 = scalar_select %p48, %s49, %s50
      %p54 = pneg %p48
      %p55 = scmp.eq.s32.totalorder %s25, 1
      %p56 = por %p54, %p55
      %p57 = scmp.ne.s32.totalorder %s49, %s52
      %p58 = scmp.eq.s32.totalorder %s25, 0
      %p59 = por %p57, %p58
      %p60 = scmp.ne.s32.totalorder %s49, %s52
      %p61 = scmp.eq.s32.totalorder %s30, 1
      %p62 = por %p60, %p61
      %p63 = scmp.ne.s32.totalorder %s52, %s53
      %p64 = scmp.eq.s32.totalorder %s30, 0
      %p65 = por %p63, %p64
      %p66 = scmp.ne.s32.totalorder %s52, %s53
      %p67 = scmp.eq.s32.totalorder %s31, 1
      %p68 = por %p66, %p67
      %p70 = scmp.ne.s32.totalorder %s53, %s69
      %p71 = scmp.eq.s32.totalorder %s31, 0
      %p72 = por %p70, %p71
      %s73 = ssub.s32 %s32, %s44
      %p74 = scmp.eq.s32.totalorder %s73, 0
      %s76 = sadd.s32 %s75, 1
      %s77 = scalar_select %p74, %s75, %s76
      %p80 = pneg %p74
      %p81 = scmp.eq.s32.totalorder %s25, 1
      %p82 = por %p80, %p81
      %p83 = scmp.ne.s32.totalorder %s75, %s78
      %p84 = scmp.eq.s32.totalorder %s25, 0
      %p85 = por %p83, %p84
      %p86 = scmp.ne.s32.totalorder %s75, %s78
      %p87 = scmp.eq.s32.totalorder %s30, 1
      %p88 = por %p86, %p87
      %p89 = scmp.ne.s32.totalorder %s78, %s79
      %p90 = scmp.eq.s32.totalorder %s30, 0
      %p91 = por %p89, %p90
      %p92 = scmp.ne.s32.totalorder %s78, %s79
      %p93 = scmp.eq.s32.totalorder %s31, 1
      %p94 = por %p92, %p93
      %p96 = scmp.ne.s32.totalorder %s79, %s95
      %p97 = scmp.eq.s32.totalorder %s31, 0
      %p98 = por %p96, %p97
      %s99 = ssub.s32 %s32, %s44
      %p100 = scmp.eq.s32.totalorder %s99, 0
      %s102 = sadd.s32 %s101, 1
      %s103 = scalar_select %p100, %s101, %s102
      %p106 = pneg %p100
      %p107 = scmp.eq.s32.totalorder %s25, 1
      %p108 = por %p106, %p107
      %p109 = scmp.ne.s32.totalorder %s101, %s104
      %p110 = scmp.eq.s32.totalorder %s25, 0
      %p111 = por %p109, %p110
      %p112 = scmp.ne.s32.totalorder %s101, %s104
      %p113 = scmp.eq.s32.totalorder %s30, 1
      %p114 = por %p112, %p113
      %p115 = scmp.ne.s32.totalorder %s104, %s105
      %p116 = scmp.eq.s32.totalorder %s30, 0
      %p117 = por %p115, %p116
      %p118 = scmp.ne.s32.totalorder %s104, %s105
      %p119 = scmp.eq.s32.totalorder %s31, 1
      %p120 = por %p118, %p119
      %p122 = scmp.ne.s32.totalorder %s105, %s121
      %p123 = scmp.eq.s32.totalorder %s31, 0
      %p124 = por %p122, %p123
      %s126 = sadd.s32 %s125, 1
      %p129 = scmp.eq.s32.totalorder %s25, 1
      %p130 = scmp.ne.s32.totalorder %s125, %s127
      %p131 = scmp.eq.s32.totalorder %s25, 0
      %p132 = por %p130, %p131
      %p133 = scmp.ne.s32.totalorder %s125, %s127
      %p134 = scmp.eq.s32.totalorder %s30, 1
      %p135 = por %p133, %p134
      %p136 = scmp.ne.s32.totalorder %s127, %s128
      %p137 = scmp.eq.s32.totalorder %s30, 0
      %p138 = por %p136, %p137
      %p139 = scmp.ne.s32.totalorder %s127, %s128
      %p140 = scmp.eq.s32.totalorder %s31, 1
      %p141 = por %p139, %p140
      %p143 = scmp.ne.s32.totalorder %s128, %s142
      %p144 = scmp.eq.s32.totalorder %s31, 0
      %p145 = por %p143, %p144
      %s147 = sadd.s32 %s146, 1
      %p150 = scmp.eq.s32.totalorder %s25, 1
      %p151 = scmp.ne.s32.totalorder %s146, %s148
      %p152 = scmp.eq.s32.totalorder %s25, 0
      %p153 = por %p151, %p152
      %p154 = scmp.ne.s32.totalorder %s146, %s148
      %p155 = scmp.eq.s32.totalorder %s30, 1
      %p156 = por %p154, %p155
      %p157 = scmp.ne.s32.totalorder %s148, %s149
      %p158 = scmp.eq.s32.totalorder %s30, 0
      %p159 = por %p157, %p158
      %p160 = scmp.ne.s32.totalorder %s148, %s149
      %p161 = scmp.eq.s32.totalorder %s31, 1
      %p162 = por %p160, %p161
      %p164 = scmp.ne.s32.totalorder %s149, %s163
      %p165 = scmp.eq.s32.totalorder %s31, 0
      %p166 = por %p164, %p165
      %s168 = sadd.s32 %s167, 1
      %p171 = scmp.eq.s32.totalorder %s25, 1
      %p172 = scmp.ne.s32.totalorder %s167, %s169
      %p173 = scmp.eq.s32.totalorder %s25, 0
      %p174 = por %p172, %p173
      %p175 = scmp.ne.s32.totalorder %s167, %s169
      %p176 = scmp.eq.s32.totalorder %s30, 1
      %p177 = por %p175, %p176
      %p178 = scmp.ne.s32.totalorder %s169, %s170
      %p179 = scmp.eq.s32.totalorder %s30, 0
      %p180 = por %p178, %p179
      %p181 = scmp.ne.s32.totalorder %s169, %s170
      %p182 = scmp.eq.s32.totalorder %s31, 1
      %p183 = por %p181, %p182
      %p185 = scmp.ne.s32.totalorder %s170, %s184
      %p186 = scmp.eq.s32.totalorder %s31, 0
      %p187 = por %p185, %p186
      %s189 = sadd.s32 %s188, 1
      %p192 = scmp.eq.s32.totalorder %s25, 1
      %p193 = scmp.ne.s32.totalorder %s188, %s190
      %p194 = scmp.eq.s32.totalorder %s25, 0
      %p195 = por %p193, %p194
      %p196 = scmp.ne.s32.totalorder %s188, %s190
      %p197 = scmp.eq.s32.totalorder %s30, 1
      %p198 = por %p196, %p197
      %p199 = scmp.ne.s32.totalorder %s190, %s191
      %p200 = scmp.eq.s32.totalorder %s30, 0
      %p201 = por %p199, %p200
      %p202 = scmp.ne.s32.totalorder %s190, %s191
      %p203 = scmp.eq.s32.totalorder %s31, 1
      %p204 = por %p202, %p203
      %p206 = scmp.ne.s32.totalorder %s191, %s205
      %p207 = scmp.eq.s32.totalorder %s31, 0
      %p208 = por %p206, %p207
      %s210 = sadd.s32 %s209, 1
      %p213 = scmp.eq.s32.totalorder %s25, 1
      %p214 = scmp.ne.s32.totalorder %s209, %s211
      %p215 = scmp.eq.s32.totalorder %s25, 0
      %p216 = por %p214, %p215
      %p217 = scmp.ne.s32.totalorder %s209, %s211
      %p218 = scmp.eq.s32.totalorder %s30, 1
      %p219 = por %p217, %p218
      %p220 = scmp.ne.s32.totalorder %s211, %s212
      %p221 = scmp.eq.s32.totalorder %s30, 0
      %p222 = por %p220, %p221
      %p223 = scmp.ne.s32.totalorder %s211, %s212
      %p224 = scmp.eq.s32.totalorder %s31, 1
      %p225 = por %p223, %p224
      %p227 = scmp.ne.s32.totalorder %s212, %s226
      %p228 = scmp.eq.s32.totalorder %s31, 0
      %p229 = por %p227, %p228
      %s231 = sadd.s32 %s230, 1
      %p234 = scmp.eq.s32.totalorder %s25, 1
      %p235 = scmp.ne.s32.totalorder %s230, %s232
      %p236 = scmp.eq.s32.totalorder %s25, 0
      %p237 = por %p235, %p236
      %p238 = scmp.ne.s32.totalorder %s230, %s232
      %p239 = scmp.eq.s32.totalorder %s30, 1
      %p240 = por %p238, %p239
      %p241 = scmp.ne.s32.totalorder %s232, %s233
      %p242 = scmp.eq.s32.totalorder %s30, 0
      %p243 = por %p241, %p242
      %p244 = scmp.ne.s32.totalorder %s232, %s233
      %p245 = scmp.eq.s32.totalorder %s31, 1
      %p246 = por %p244, %p245
      %p248 = scmp.ne.s32.totalorder %s233, %s247
      %p249 = scmp.eq.s32.totalorder %s31, 0
      %p250 = por %p248, %p249
      %s252 = sadd.s32 %s251, 1
      %p255 = scmp.eq.s32.totalorder %s25, 1
      %p256 = scmp.ne.s32.totalorder %s251, %s253
      %p257 = scmp.eq.s32.totalorder %s25, 0
      %p258 = por %p256, %p257
      %p259 = scmp.ne.s32.totalorder %s251, %s253
      %p260 = scmp.eq.s32.totalorder %s30, 1
      %p261 = por %p259, %p260
      %p262 = scmp.ne.s32.totalorder %s253, %s254
      %p263 = scmp.eq.s32.totalorder %s30, 0
      %p264 = por %p262, %p263
      %p265 = scmp.ne.s32.totalorder %s253, %s254
      %p266 = scmp.eq.s32.totalorder %s31, 1
      %p267 = por %p265, %p266
      %p269 = scmp.ne.s32.totalorder %s254, %s268
      %p270 = scmp.eq.s32.totalorder %s31, 0
      %p271 = por %p269, %p270
      %s273 = sadd.s32 %s272, 1
      %p276 = scmp.eq.s32.totalorder %s25, 1
      %p277 = scmp.ne.s32.totalorder %s272, %s274
      %p278 = scmp.eq.s32.totalorder %s25, 0
      %p279 = por %p277, %p278
      %p280 = scmp.ne.s32.totalorder %s272, %s274
      %p281 = scmp.eq.s32.totalorder %s30, 1
      %p282 = por %p280, %p281
      %p283 = scmp.ne.s32.totalorder %s274, %s275
      %p284 = scmp.eq.s32.totalorder %s30, 0
      %p285 = por %p283, %p284
      %p286 = scmp.ne.s32.totalorder %s274, %s275
      %p287 = scmp.eq.s32.totalorder %s31, 1
      %p288 = por %p286, %p287
      %p290 = scmp.ne.s32.totalorder %s275, %s289
      %p291 = scmp.eq.s32.totalorder %s31, 0
      %p292 = por %p290, %p291
      %s294 = sadd.s32 %s293, 1
      %p297 = scmp.eq.s32.totalorder %s25, 1
      %p298 = scmp.ne.s32.totalorder %s293, %s295
      %p299 = scmp.eq.s32.totalorder %s25, 0
      %p300 = por %p298, %p299
      %p301 = scmp.ne.s32.totalorder %s293, %s295
      %p302 = scmp.eq.s32.totalorder %s30, 1
      %p303 = por %p301, %p302
      %p304 = scmp.ne.s32.totalorder %s295, %s296
      %p305 = scmp.eq.s32.totalorder %s30, 0
      %p306 = por %p304, %p305
      %p307 = scmp.ne.s32.totalorder %s295, %s296
      %p308 = scmp.eq.s32.totalorder %s31, 1
      %p309 = por %p307, %p308
      %p311 = scmp.ne.s32.totalorder %s296, %s310
      %p312 = scmp.eq.s32.totalorder %s31, 0
      %p313 = por %p311, %p312
      %s315 = sadd.s32 %s314, 1
      %p318 = scmp.eq.s32.totalorder %s25, 1
      %p319 = scmp.ne.s32.totalorder %s314, %s316
      %p320 = scmp.eq.s32.totalorder %s25, 0
      %p321 = por %p319, %p320
      %p322 = scmp.ne.s32.totalorder %s314, %s316
      %p323 = scmp.eq.s32.totalorder %s30, 1
      %p324 = por %p322, %p323
      %p325 = scmp.ne.s32.totalorder %s316, %s317
      %p326 = scmp.eq.s32.totalorder %s30, 0
      %p327 = por %p325, %p326
      %p328 = scmp.ne.s32.totalorder %s316, %s317
      %p329 = scmp.eq.s32.totalorder %s31, 1
      %p330 = por %p328, %p329
      %p332 = scmp.ne.s32.totalorder %s317, %s331
      %p333 = scmp.eq.s32.totalorder %s31, 0
      %p334 = por %p332, %p333
      %s336 = sadd.s32 %s335, 1
      %p339 = scmp.eq.s32.totalorder %s25, 1
      %p340 = scmp.ne.s32.totalorder %s335, %s337
      %p341 = scmp.eq.s32.totalorder %s25, 0
      %p342 = por %p340, %p341
      %p343 = scmp.ne.s32.totalorder %s335, %s337
      %p344 = scmp.eq.s32.totalorder %s30, 1
      %p345 = por %p343, %p344
      %p346 = scmp.ne.s32.totalorder %s337, %s338
      %p347 = scmp.eq.s32.totalorder %s30, 0
      %p348 = por %p346, %p347
      %p349 = scmp.ne.s32.totalorder %s337, %s338
      %p350 = scmp.eq.s32.totalorder %s31, 1
      %p351 = por %p349, %p350
      %p353 = scmp.ne.s32.totalorder %s338, %s352
      %p354 = scmp.eq.s32.totalorder %s31, 0
      %p355 = por %p353, %p354
      %s357 = sadd.s32 %s356, 1
      %p360 = scmp.eq.s32.totalorder %s25, 1
      %p361 = scmp.ne.s32.totalorder %s356, %s358
      %p362 = scmp.eq.s32.totalorder %s25, 0
      %p363 = por %p361, %p362
      %p364 = scmp.ne.s32.totalorder %s356, %s358
      %p365 = scmp.eq.s32.totalorder %s30, 1
      %p366 = por %p364, %p365
      %p367 = scmp.ne.s32.totalorder %s358, %s359
      %p368 = scmp.eq.s32.totalorder %s30, 0
      %p369 = por %p367, %p368
      %p370 = scmp.ne.s32.totalorder %s358, %s359
      %p371 = scmp.eq.s32.totalorder %s31, 1
      %p372 = por %p370, %p371
      %p374 = scmp.ne.s32.totalorder %s359, %s373
      %p375 = scmp.eq.s32.totalorder %s31, 0
      %p376 = por %p374, %p375
      %s378 = sadd.s32 %s377, 1
      %p381 = scmp.eq.s32.totalorder %s25, 1
      %p382 = scmp.ne.s32.totalorder %s377, %s379
      %p383 = scmp.eq.s32.totalorder %s25, 0
      %p384 = por %p382, %p383
      %p385 = scmp.ne.s32.totalorder %s377, %s379
      %p386 = scmp.eq.s32.totalorder %s30, 1
      %p387 = por %p385, %p386
      %p388 = scmp.ne.s32.totalorder %s379, %s380
      %p389 = scmp.eq.s32.totalorder %s30, 0
      %p390 = por %p388, %p389
      %p391 = scmp.ne.s32.totalorder %s379, %s380
      %p392 = scmp.eq.s32.totalorder %s31, 1
      %p393 = por %p391, %p392
      %p395 = scmp.ne.s32.totalorder %s380, %s394
      %p396 = scmp.eq.s32.totalorder %s31, 0
      %p397 = por %p395, %p396
      %s398 = ssub.s32 %s32, %s44
      %s399 = ssub.s32 %s33, %s40
      %s400 = sor.u32 %s398, %s399
      %p401 = scmp.eq.s32.totalorder %s400, 0
      %s403 = sadd.s32 %s402, 1
      %s404 = scalar_select %p401, %s402, %s403
      %p407 = pneg %p401
      %p408 = scmp.eq.s32.totalorder %s25, 1
      %p409 = por %p407, %p408
      %p410 = scmp.ne.s32.totalorder %s402, %s405
      %p411 = scmp.eq.s32.totalorder %s25, 0
      %p412 = por %p410, %p411
      %p413 = scmp.ne.s32.totalorder %s402, %s405
      %p414 = scmp.eq.s32.totalorder %s30, 1
      %p415 = por %p413, %p414
      %p416 = scmp.ne.s32.totalorder %s405, %s406
      %p417 = scmp.eq.s32.totalorder %s30, 0
      %p418 = por %p416, %p417
      %p419 = scmp.ne.s32.totalorder %s405, %s406
      %p420 = scmp.eq.s32.totalorder %s31, 1
      %p421 = por %p419, %p420
      %p423 = scmp.ne.s32.totalorder %s406, %s422
      %p424 = scmp.eq.s32.totalorder %s31, 0
      %p425 = por %p423, %p424
      %p426 = scmp.le.s32.totalorder 1, %s25
      %p427 = scmp.lt.s32.totalorder %s25, 3
      %p428 = pnand %p426, %p427
      %p429 = pneg %p428
      // Predicated region
      $region9: #{tpu_custom_call.1} parent=5 // pred_check
        _
      $region10: #{tpu_custom_call.1} parent=5 // pred_check_branch
        %431 = sbr.rel (%p428) target = $region12
      $region11: #{tpu_custom_call.1} parent=5 // pred_region
        %s432 = ssub.s32 %s25, 1
        // Predicated region
        $region13: #{tpu_custom_call.1} parent=11 // pred_check
          %p433 = pneg %p138
        $region14: #{tpu_custom_call.1} parent=11 // pred_check_branch
          %435 = sbr.rel (%p433) target = $region16
        $region15: #{tpu_custom_call.1} parent=11 // pred_region
          _
        $region16: #{tpu_custom_call.1} parent=11 // pred_fallthru
          _
        // Predicated region
        $region17: #{tpu_custom_call.1} parent=11 // pred_check
          %p436 = pneg %p159
        $region18: #{tpu_custom_call.1} parent=11 // pred_check_branch
          %438 = sbr.rel (%p436) target = $region20
        $region19: #{tpu_custom_call.1} parent=11 // pred_region
          _
        $region20: #{tpu_custom_call.1} parent=11 // pred_fallthru
          _
        // Predicated region
        $region21: #{tpu_custom_call.1} parent=11 // pred_check
          %p439 = pneg %p180
        $region22: #{tpu_custom_call.1} parent=11 // pred_check_branch
          %441 = sbr.rel (%p439) target = $region24
        $region23: #{tpu_custom_call.1} parent=11 // pred_region
          _
        $region24: #{tpu_custom_call.1} parent=11 // pred_fallthru
          _
        // Predicated region
        $region25: #{tpu_custom_call.1} parent=11 // pred_check
          %p442 = pneg %p201
        $region26: #{tpu_custom_call.1} parent=11 // pred_check_branch
          %444 = sbr.rel (%p442) target = $region28
        $region27: #{tpu_custom_call.1} parent=11 // pred_region
          _
        $region28: #{tpu_custom_call.1} parent=11 // pred_fallthru
          _
        // Predicated region
        $region29: #{tpu_custom_call.1} parent=11 // pred_check
          %p445 = pneg %p222
        $region30: #{tpu_custom_call.1} parent=11 // pred_check_branch
          %447 = sbr.rel (%p445) target = $region32
        $region31: #{tpu_custom_call.1} parent=11 // pred_region
          _
        $region32: #{tpu_custom_call.1} parent=11 // pred_fallthru
          _
        // Predicated region
        $region33: #{tpu_custom_call.1} parent=11 // pred_check
          %p448 = pneg %p243
        $region34: #{tpu_custom_call.1} parent=11 // pred_check_branch
          %450 = sbr.rel (%p448) target = $region36
        $region35: #{tpu_custom_call.1} parent=11 // pred_region
          _
        $region36: #{tpu_custom_call.1} parent=11 // pred_fallthru
          _
        // Predicated region
        $region37: #{tpu_custom_call.1} parent=11 // pred_check
          %p451 = pneg %p264
        $region38: #{tpu_custom_call.1} parent=11 // pred_check_branch
          %453 = sbr.rel (%p451) target = $region40
        $region39: #{tpu_custom_call.1} parent=11 // pred_region
          _
        $region40: #{tpu_custom_call.1} parent=11 // pred_fallthru
          _
        // Predicated region
        $region41: #{tpu_custom_call.1} parent=11 // pred_check
          %p454 = pneg %p285
        $region42: #{tpu_custom_call.1} parent=11 // pred_check_branch
          %456 = sbr.rel (%p454) target = $region44
        $region43: #{tpu_custom_call.1} parent=11 // pred_region
          _
        $region44: #{tpu_custom_call.1} parent=11 // pred_fallthru
          _
        // Predicated region
        $region45: #{tpu_custom_call.1} parent=11 // pred_check
          %p457 = pneg %p306
        $region46: #{tpu_custom_call.1} parent=11 // pred_check_branch
          %459 = sbr.rel (%p457) target = $region48
        $region47: #{tpu_custom_call.1} parent=11 // pred_region
          _
        $region48: #{tpu_custom_call.1} parent=11 // pred_fallthru
          _
        // Predicated region
        $region49: #{tpu_custom_call.1} parent=11 // pred_check
          %p460 = pneg %p327
        $region50: #{tpu_custom_call.1} parent=11 // pred_check_branch
          %462 = sbr.rel (%p460) target = $region52
        $region51: #{tpu_custom_call.1} parent=11 // pred_region
          _
        $region52: #{tpu_custom_call.1} parent=11 // pred_fallthru
          _
        // Predicated region
        $region53: #{tpu_custom_call.1} parent=11 // pred_check
          %p463 = pneg %p348
        $region54: #{tpu_custom_call.1} parent=11 // pred_check_branch
          %465 = sbr.rel (%p463) target = $region56
        $region55: #{tpu_custom_call.1} parent=11 // pred_region
          _
        $region56: #{tpu_custom_call.1} parent=11 // pred_fallthru
          _
        // Predicated region
        $region57: #{tpu_custom_call.1} parent=11 // pred_check
          %p466 = pneg %p369
        $region58: #{tpu_custom_call.1} parent=11 // pred_check_branch
          %468 = sbr.rel (%p466) target = $region60
        $region59: #{tpu_custom_call.1} parent=11 // pred_region
          _
        $region60: #{tpu_custom_call.1} parent=11 // pred_fallthru
          _
        // Predicated region
        $region61: #{tpu_custom_call.1} parent=11 // pred_check
          %p469 = pneg %p390
        $region62: #{tpu_custom_call.1} parent=11 // pred_check_branch
          %471 = sbr.rel (%p469) target = $region64
        $region63: #{tpu_custom_call.1} parent=11 // pred_region
          _
        $region64: #{tpu_custom_call.1} parent=11 // pred_fallthru
          _
      $region12: #{tpu_custom_call.1} parent=5 // pred_fallthru
        _
      %p472 = scmp.lt.s32.totalorder %s25, 2
      // Predicated region
      $region65: #{tpu_custom_call.1} parent=5 // pred_check
        %p473 = pneg %p472
      $region66: #{tpu_custom_call.1} parent=5 // pred_check_branch
        %475 = sbr.rel (%p473) target = $region68
      $region67: #{tpu_custom_call.1} parent=5 // pred_region
        // Predicated region
        $region69: #{tpu_custom_call.1} parent=67 // pred_check
          %p476 = pneg %p59
        $region70: #{tpu_custom_call.1} parent=67 // pred_check_branch
          %478 = sbr.rel (%p476) target = $region72
        $region71: #{tpu_custom_call.1} parent=67 // pred_region
          %p479 = scmp.lt.s32.totalorder %s32, 1
          %s480 = scalar_select %p479, %s32, 1
          %p481 = scmp.lt.s32.totalorder %s33, 0
          %s482 = scalar_select %p481, %s33, 0
          %s483 = sadd.s32 %s482, %s480
          %s484 = smul.addr %s483, 8
          %s485 = scalar_lea.vmem %s0, %s484
        $region72: #{tpu_custom_call.1} parent=67 // pred_fallthru
          _
        // Predicated region
        $region73: #{tpu_custom_call.1} parent=67 // pred_check
          %p486 = pneg %p85
        $region74: #{tpu_custom_call.1} parent=67 // pred_check_branch
          %488 = sbr.rel (%p486) target = $region76
        $region75: #{tpu_custom_call.1} parent=67 // pred_region
          %p489 = scmp.lt.s32.totalorder %s32, 1
          %s490 = scalar_select %p489, %s32, 1
          %s491 = smul.addr %s490, 8
          %s492 = scalar_lea.vmem %s1, %s491
        $region76: #{tpu_custom_call.1} parent=67 // pred_fallthru
          _
        // Predicated region
        $region77: #{tpu_custom_call.1} parent=67 // pred_check
          %p493 = pneg %p111
        $region78: #{tpu_custom_call.1} parent=67 // pred_check_branch
          %495 = sbr.rel (%p493) target = $region80
        $region79: #{tpu_custom_call.1} parent=67 // pred_region
          %p496 = scmp.lt.s32.totalorder %s32, 1
          %s497 = scalar_select %p496, %s32, 1
          %s498 = scalar_lea.vmem %s2, %s497
        $region80: #{tpu_custom_call.1} parent=67 // pred_fallthru
          _
      $region68: #{tpu_custom_call.1} parent=5 // pred_fallthru
        _
      %p499 = scmp.le.s32.totalorder 1, %s25
      %p500 = scmp.lt.s32.totalorder %s25, 3
      %p501 = pnand %p499, %p500
      %p502 = pneg %p501
      // Predicated region
      $region81: #{tpu_custom_call.1} parent=5 // pred_check
        _
      $region82: #{tpu_custom_call.1} parent=5 // pred_check_branch
        %504 = sbr.rel (%p501) target = $region84
      $region83: #{tpu_custom_call.1} parent=5 // pred_region
        %s505 = ssub.s32 %s25, 1
        %p506 = scmp.lt.s32.totalorder %s34, 1
        %s507 = scalar_select %p506, %s34, 1
        %p508 = scmp.lt.s32.totalorder %s35, 0
        %s509 = scalar_select %p508, %s35, 0
        %s510 = sadd.s32 %s509, %s507
        %s511 = smul.addr %s510, 8
        %s512 = scalar_lea.vmem %s0, %s511
        %p513 = pneg %p65
        %p514 = pneg %p62
        %p515 = scmp.lt.s32.totalorder %s34, 1
        %s516 = scalar_select %p515, %s34, 1
        %s517 = smul.addr %s516, 8
        %s518 = scalar_lea.vmem %s1, %s517
        %p519 = pneg %p91
        %p520 = pneg %p88
        %p521 = scmp.lt.s32.totalorder %s34, 1
        %s522 = scalar_select %p521, %s34, 1
        %s523 = scalar_lea.vmem %s2, %s522
        %p524 = pneg %p117
        %p525 = pneg %p114
        %p526 = pneg %p138
        %p527 = pneg %p135
        %p528 = pneg %p159
        %p529 = pneg %p156
        %p530 = pneg %p180
        %p531 = pneg %p177
        %p532 = pneg %p201
        %p533 = pneg %p198
        %p534 = pneg %p222
        %p535 = pneg %p219
        %p536 = pneg %p243
        %p537 = pneg %p240
        %p538 = pneg %p264
        %p539 = pneg %p261
        %p540 = pneg %p285
        %p541 = pneg %p282
        %p542 = pneg %p306
        %p543 = pneg %p303
        %p544 = pneg %p327
        %p545 = pneg %p324
        %p546 = pneg %p348
        %p547 = pneg %p345
        %p548 = pneg %p369
        %p549 = pneg %p366
        %p550 = pneg %p390
        %p551 = pneg %p387
        %p552 = pneg %p418
        %p553 = pneg %p415
        %s554 = sand.u32 %s405, 1
        %s555 = scalar_lea.sflag [#allocation5], %s554
        %s556 = sand.u32 %s405, 1
        %s557 = smul.addr %s556, 8
        %s558 = scalar_lea.vmem [#allocation4], %s557
        %p559 = scmp.lt.s32.totalorder %s34, 1
        %s560 = scalar_select %p559, %s34, 1
        %p561 = scmp.lt.s32.totalorder %s35, 0
        %s562 = scalar_select %p561, %s35, 0
        %s563 = sadd.s32 %s562, %s560
        %s564 = smul.addr %s563, 8
        %s565 = scalar_lea.vmem %s0, %s564
        %p566 = scmp.lt.s32.totalorder %s34, 1
        %s567 = scalar_select %p566, %s34, 1
        %s568 = smul.addr %s567, 8
        %s569 = scalar_lea.vmem %s1, %s568
        %p570 = scmp.lt.s32.totalorder %s34, 1
        %s571 = scalar_select %p570, %s34, 1
        %s572 = scalar_lea.vmem %s2, %s571
        %p574 = scmp.eq.s32.totalorder %s35, 0
        // Predicated region
        $region85: #{tpu_custom_call.1} parent=83 // pred_check
          %p575 = pneg %p574
        $region86: #{tpu_custom_call.1} parent=83 // pred_check_branch
          %577 = sbr.rel (%p575) target = $region88
        $region87: #{tpu_custom_call.1} parent=83 // pred_region
          %v578 = vld [vmem:[%s569] sm:$0xff]
          %v579 = vpack.c.bf16 %v578, %v578
          %v580 = vld [vmem:[%s4] sm:$0xf]
          %v581 = vld [vmem:[%s4 + $0x4] sm:$0xf]
          %v582 = vld [vmem:[%s4 + $0x8] sm:$0xf]
          %v583 = vld [vmem:[%s4 + $0xc] sm:$0xf]
          %v584 = vld [vmem:[%s7] sm:$0x1]
          %v586 = vperm.slane %v584, 0
          %v592 = vunpack.c.l.b16 %v580
          %v593 = vunpack.c.l.b16 %v581
          %v594 = vunpack.c.l.b16 %v582
          %v595 = vunpack.c.l.b16 %v583
          %v596 = vpack.c.b16 %v593, %v592
          %v597 = vpack.c.b16 %v595, %v594
          %vm600 = vcmask 261120
          %v602 = vsel %vm600, %v579, 0
          %604 = vmatpush.bf16.msra.mxu0 0
          %605 = vmatpush.bf16.msra.mxu0 0
          %606 = vmatpush.bf16.msra.mxu0 0
          %607 = vmatpush.bf16.msra.mxu0 0
          %608 = vmatpush.bf16.msra.mxu0 0
          %609 = vmatpush.bf16.msra.mxu0 0
          %610 = vmatpush.bf16.msra.mxu0 %v597
          %611 = vmatpush.bf16.msra.mxu0 %v596
          %612 = vmatmul.bf16.gmra.mxu0 %v602
          %v613 = vpop.f32.mrf.mxu0
          %v614 = vadd.f32 %v586, %v613
          %v615 = vpop.f32.mrf.mxu0
          %616 = vdwg.mxu0
          %v617 = vld [vmem:[%s5] sm:$0xf]
          %v618 = vld [vmem:[%s5 + $0x4] sm:$0xf]
          %v619 = vld [vmem:[%s5 + $0x8] sm:$0xf]
          %v620 = vld [vmem:[%s5 + $0xc] sm:$0xf]
          %v621 = vld [vmem:[%s8] sm:$0x1]
          %v623 = vperm.slane %v621, 0
          %v629 = vunpack.c.l.b16 %v617
          %v630 = vunpack.c.l.b16 %v618
          %v631 = vunpack.c.l.b16 %v619
          %v632 = vunpack.c.l.b16 %v620
          %v633 = vpack.c.b16 %v630, %v629
          %v634 = vpack.c.b16 %v632, %v631
          %637 = vmatpush.bf16.msra.mxu0 0
          %638 = vmatpush.bf16.msra.mxu0 0
          %639 = vmatpush.bf16.msra.mxu0 0
          %640 = vmatpush.bf16.msra.mxu0 0
          %641 = vmatpush.bf16.msra.mxu0 0
          %642 = vmatpush.bf16.msra.mxu0 0
          %643 = vmatpush.bf16.msra.mxu0 %v634
          %644 = vmatpush.bf16.msra.mxu0 %v633
          %645 = vmatmul.bf16.gmra.mxu0 %v602
          %v646 = vpop.f32.mrf.mxu0
          %v647 = vadd.f32 %v623, %v646
          %v648 = vpop.f32.mrf.mxu0
          %649 = vdwg.mxu0
          %v650 = vpack.c.bf16 %v614, %v614
          %vm651 = vcmask 60416
          %652 = vst.msk [vmem:[#allocation2] sm:$0xf] %vm651, %v650
          %v653 = vpack.c.bf16 %v647, %v647
          %654 = vst.msk [vmem:[#allocation3] sm:$0xf] %vm651, %v653
          %s655 = scalar_lea.vmem %s4, 16
          %v656 = vld [vmem:[%s655] sm:$0xf]
          %v657 = vld [vmem:[%s655 + $0x4] sm:$0xf]
          %v658 = vld [vmem:[%s655 + $0x8] sm:$0xf]
          %v659 = vld [vmem:[%s655 + $0xc] sm:$0xf]
          %s660 = scalar_lea.vmem %s7, 1
          %v661 = vld [vmem:[%s660] sm:$0x1]
          %v663 = vperm.slane %v661, 0
          %v669 = vunpack.c.l.b16 %v656
          %v670 = vunpack.c.l.b16 %v657
          %v671 = vunpack.c.l.b16 %v658
          %v672 = vunpack.c.l.b16 %v659
          %v673 = vpack.c.b16 %v670, %v669
          %v674 = vpack.c.b16 %v672, %v671
          %677 = vmatpush.bf16.msra.mxu0 0
          %678 = vmatpush.bf16.msra.mxu0 0
          %679 = vmatpush.bf16.msra.mxu0 0
          %680 = vmatpush.bf16.msra.mxu0 0
          %681 = vmatpush.bf16.msra.mxu0 0
          %682 = vmatpush.bf16.msra.mxu0 0
          %683 = vmatpush.bf16.msra.mxu0 %v674
          %684 = vmatpush.bf16.msra.mxu0 %v673
          %685 = vmatmul.bf16.gmra.mxu0 %v602
          %v686 = vpop.f32.mrf.mxu0
          %v687 = vadd.f32 %v663, %v686
          %v688 = vpop.f32.mrf.mxu0
          %689 = vdwg.mxu0
          %s690 = scalar_lea.vmem %s5, 16
          %v691 = vld [vmem:[%s690] sm:$0xf]
          %v692 = vld [vmem:[%s690 + $0x4] sm:$0xf]
          %v693 = vld [vmem:[%s690 + $0x8] sm:$0xf]
          %v694 = vld [vmem:[%s690 + $0xc] sm:$0xf]
          %s695 = scalar_lea.vmem %s8, 1
          %v696 = vld [vmem:[%s695] sm:$0x1]
          %v698 = vperm.slane %v696, 0
          %v704 = vunpack.c.l.b16 %v691
          %v705 = vunpack.c.l.b16 %v692
          %v706 = vunpack.c.l.b16 %v693
          %v707 = vunpack.c.l.b16 %v694
          %v708 = vpack.c.b16 %v705, %v704
          %v709 = vpack.c.b16 %v707, %v706
          %712 = vmatpush.bf16.msra.mxu0 0
          %713 = vmatpush.bf16.msra.mxu0 0
          %714 = vmatpush.bf16.msra.mxu0 0
          %715 = vmatpush.bf16.msra.mxu0 0
          %716 = vmatpush.bf16.msra.mxu0 0
          %717 = vmatpush.bf16.msra.mxu0 0
          %718 = vmatpush.bf16.msra.mxu0 %v709
          %719 = vmatpush.bf16.msra.mxu0 %v708
          %720 = vmatmul.bf16.gmra.mxu0 %v602
          %v721 = vpop.f32.mrf.mxu0
          %v722 = vadd.f32 %v698, %v721
          %v723 = vpop.f32.mrf.mxu0
          %724 = vdwg.mxu0
          %v725 = vpack.c.bf16 %v687, %v687
          %s726 = scalar_lea.vmem [#allocation2], 4
          %727 = vst.msk [vmem:[%s726] sm:$0xf] %vm651, %v725
          %v728 = vpack.c.bf16 %v722, %v722
          %s729 = scalar_lea.vmem [#allocation3], 4
          %730 = vst.msk [vmem:[%s729] sm:$0xf] %vm651, %v728
          %s731 = scalar_lea.vmem %s4, 32
          %v732 = vld [vmem:[%s731] sm:$0xf]
          %v733 = vld [vmem:[%s731 + $0x4] sm:$0xf]
          %v734 = vld [vmem:[%s731 + $0x8] sm:$0xf]
          %v735 = vld [vmem:[%s731 + $0xc] sm:$0xf]
          %s736 = scalar_lea.vmem %s7, 2
          %v737 = vld [vmem:[%s736] sm:$0x1]
          %v739 = vperm.slane %v737, 0
          %v745 = vunpack.c.l.b16 %v732
          %v746 = vunpack.c.l.b16 %v733
          %v747 = vunpack.c.l.b16 %v734
          %v748 = vunpack.c.l.b16 %v735
          %v749 = vpack.c.b16 %v746, %v745
          %v750 = vpack.c.b16 %v748, %v747
          %753 = vmatpush.bf16.msra.mxu0 0
          %754 = vmatpush.bf16.msra.mxu0 0
          %755 = vmatpush.bf16.msra.mxu0 0
          %756 = vmatpush.bf16.msra.mxu0 0
          %757 = vmatpush.bf16.msra.mxu0 0
          %758 = vmatpush.bf16.msra.mxu0 0
          %759 = vmatpush.bf16.msra.mxu0 %v750
          %760 = vmatpush.bf16.msra.mxu0 %v749
          %761 = vmatmul.bf16.gmra.mxu0 %v602
          %v762 = vpop.f32.mrf.mxu0
          %v763 = vadd.f32 %v739, %v762
          %v764 = vpop.f32.mrf.mxu0
          %765 = vdwg.mxu0
          %s766 = scalar_lea.vmem %s5, 32
          %v767 = vld [vmem:[%s766] sm:$0xf]
          %v768 = vld [vmem:[%s766 + $0x4] sm:$0xf]
          %v769 = vld [vmem:[%s766 + $0x8] sm:$0xf]
          %v770 = vld [vmem:[%s766 + $0xc] sm:$0xf]
          %s771 = scalar_lea.vmem %s8, 2
          %v772 = vld [vmem:[%s771] sm:$0x1]
          %v774 = vperm.slane %v772, 0
          %v780 = vunpack.c.l.b16 %v767
          %v781 = vunpack.c.l.b16 %v768
          %v782 = vunpack.c.l.b16 %v769
          %v783 = vunpack.c.l.b16 %v770
          %v784 = vpack.c.b16 %v781, %v780
          %v785 = vpack.c.b16 %v783, %v782
          %788 = vmatpush.bf16.msra.mxu0 0
          %789 = vmatpush.bf16.msra.mxu0 0
          %790 = vmatpush.bf16.msra.mxu0 0
          %791 = vmatpush.bf16.msra.mxu0 0
          %792 = vmatpush.bf16.msra.mxu0 0
          %793 = vmatpush.bf16.msra.mxu0 0
          %794 = vmatpush.bf16.msra.mxu0 %v785
          %795 = vmatpush.bf16.msra.mxu0 %v784
          %796 = vmatmul.bf16.gmra.mxu0 %v602
          %v797 = vpop.f32.mrf.mxu0
          %v798 = vadd.f32 %v774, %v797
          %v799 = vpop.f32.mrf.mxu0
          %800 = vdwg.mxu0
          %v801 = vpack.c.bf16 %v763, %v763
          %s802 = scalar_lea.vmem [#allocation2], 8
          %803 = vst.msk [vmem:[%s802] sm:$0xf] %vm651, %v801
          %v804 = vpack.c.bf16 %v798, %v798
          %s805 = scalar_lea.vmem [#allocation3], 8
          %806 = vst.msk [vmem:[%s805] sm:$0xf] %vm651, %v804
          %s807 = scalar_lea.vmem %s4, 48
          %v808 = vld [vmem:[%s807] sm:$0xf]
          %v809 = vld [vmem:[%s807 + $0x4] sm:$0xf]
          %v810 = vld [vmem:[%s807 + $0x8] sm:$0xf]
          %v811 = vld [vmem:[%s807 + $0xc] sm:$0xf]
          %s812 = scalar_lea.vmem %s7, 3
          %v813 = vld [vmem:[%s812] sm:$0x1]
          %v815 = vperm.slane %v813, 0
          %v821 = vunpack.c.l.b16 %v808
          %v822 = vunpack.c.l.b16 %v809
          %v823 = vunpack.c.l.b16 %v810
          %v824 = vunpack.c.l.b16 %v811
          %v825 = vpack.c.b16 %v822, %v821
          %v826 = vpack.c.b16 %v824, %v823
          %829 = vmatpush.bf16.msra.mxu0 0
          %830 = vmatpush.bf16.msra.mxu0 0
          %831 = vmatpush.bf16.msra.mxu0 0
          %832 = vmatpush.bf16.msra.mxu0 0
          %833 = vmatpush.bf16.msra.mxu0 0
          %834 = vmatpush.bf16.msra.mxu0 0
          %835 = vmatpush.bf16.msra.mxu0 %v826
          %836 = vmatpush.bf16.msra.mxu0 %v825
          %837 = vmatmul.bf16.gmra.mxu0 %v602
          %v838 = vpop.f32.mrf.mxu0
          %v839 = vadd.f32 %v815, %v838
          %v840 = vpop.f32.mrf.mxu0
          %841 = vdwg.mxu0
          %s842 = scalar_lea.vmem %s5, 48
          %v843 = vld [vmem:[%s842] sm:$0xf]
          %v844 = vld [vmem:[%s842 + $0x4] sm:$0xf]
          %v845 = vld [vmem:[%s842 + $0x8] sm:$0xf]
          %v846 = vld [vmem:[%s842 + $0xc] sm:$0xf]
          %s847 = scalar_lea.vmem %s8, 3
          %v848 = vld [vmem:[%s847] sm:$0x1]
          %v850 = vperm.slane %v848, 0
          %v856 = vunpack.c.l.b16 %v843
          %v857 = vunpack.c.l.b16 %v844
          %v858 = vunpack.c.l.b16 %v845
          %v859 = vunpack.c.l.b16 %v846
          %v860 = vpack.c.b16 %v857, %v856
          %v861 = vpack.c.b16 %v859, %v858
          %864 = vmatpush.bf16.msra.mxu0 0
          %865 = vmatpush.bf16.msra.mxu0 0
          %866 = vmatpush.bf16.msra.mxu0 0
          %867 = vmatpush.bf16.msra.mxu0 0
          %868 = vmatpush.bf16.msra.mxu0 0
          %869 = vmatpush.bf16.msra.mxu0 0
          %870 = vmatpush.bf16.msra.mxu0 %v861
          %871 = vmatpush.bf16.msra.mxu0 %v860
          %872 = vmatmul.bf16.gmra.mxu0 %v602
          %v873 = vpop.f32.mrf.mxu0
          %v874 = vadd.f32 %v850, %v873
          %v875 = vpop.f32.mrf.mxu0
          %876 = vdwg.mxu0
          %v877 = vpack.c.bf16 %v839, %v839
          %s878 = scalar_lea.vmem [#allocation2], 12
          %879 = vst.msk [vmem:[%s878] sm:$0xf] %vm651, %v877
          %v880 = vpack.c.bf16 %v874, %v874
          %s881 = scalar_lea.vmem [#allocation3], 12
          %882 = vst.msk [vmem:[%s881] sm:$0xf] %vm651, %v880
        $region88: #{tpu_custom_call.1} parent=83 // pred_fallthru
          _
        %v883 = vld [vmem:[%s565] sm:$0xff]
        %v884 = vpack.c.bf16 %v883, %v883
        %v885 = vld [vmem:[%s572] sm:$0x1]
        %vm886 = vcmp.gt.f32.partialorder %v885, 0.0
        %v887 = vsel %vm886, 0.0, -1e+09
        %v888 = vld [vmem:[%s3] sm:$0xf]
        %v889 = vld [vmem:[%s3 + $0x4] sm:$0xf]
        %v890 = vld [vmem:[%s3 + $0x8] sm:$0xf]
        %v891 = vld [vmem:[%s3 + $0xc] sm:$0xf]
        %v892 = vld [vmem:[%s6] sm:$0x1]
        %v894 = vperm.slane %v892, 0
        %v900 = vunpack.c.l.b16 %v888
        %v901 = vunpack.c.l.b16 %v889
        %v902 = vunpack.c.l.b16 %v890
        %v903 = vunpack.c.l.b16 %v891
        %v904 = vpack.c.b16 %v901, %v900
        %v905 = vpack.c.b16 %v903, %v902
        %vm908 = vcmask 261120
        %v910 = vsel %vm908, %v884, 0
        %912 = vmatpush.bf16.msra.mxu0 0
        %913 = vmatpush.bf16.msra.mxu0 0
        %914 = vmatpush.bf16.msra.mxu0 0
        %915 = vmatpush.bf16.msra.mxu0 0
        %916 = vmatpush.bf16.msra.mxu0 0
        %917 = vmatpush.bf16.msra.mxu0 0
        %918 = vmatpush.bf16.msra.mxu0 %v905
        %919 = vmatpush.bf16.msra.mxu0 %v904
        %920 = vmatmul.bf16.gmra.mxu0 %v910
        %v921 = vpop.f32.mrf.mxu0
        %v922 = vadd.f32 %v894, %v921
        %v923 = vpop.f32.mrf.mxu0
        %924 = vdwg.mxu0
        %v925 = vmul.f32 %v922, 0.35355338
        %v926 = vld [vmem:[#allocation2] sm:$0xf]
        %v927 = vld [vmem:[#allocation3] sm:$0xf]
        %v928 = vpack.c.bf16 %v925, %v925
        %v930 = vperm.slane %v887, 0
        %vm932 = vcmask 64512
        %v934 = vsel %vm932, %v928, 0
        %v937 = vsel %vm932, %v926, 0
        %939 = vmatpush.bf16.xpose.msra.mxu0 0
        %940 = vmatpush.bf16.xpose.msra.mxu0 0
        %941 = vmatpush.bf16.xpose.msra.mxu0 0
        %942 = vmatpush.bf16.xpose.msra.mxu0 0
        %943 = vmatpush.bf16.xpose.msra.mxu0 0
        %944 = vmatpush.bf16.xpose.msra.mxu0 0
        %945 = vmatpush.bf16.xpose.msra.mxu0 0
        %946 = vmatpush.bf16.xpose.msra.mxu0 %v937
        %947 = vmatmul.bf16.gmra.mxu0 %v934
        %v948 = vpop.f32.mrf.mxu0
        %v949 = vadd.f32 %v930, %v948
        %v950 = vpop.f32.mrf.mxu0
        %951 = vdwg.mxu0
        %v952 = vsel %vm932, %v949, -inf
        %953 = vmax.xlane.f32.xlu0 %v952
        %v954 = vpop.xlane.xlu0 %953
        %v955 = vsub.f32 %v949, %v954
        %v956 = vmul.f32 %v955, 1.442695
        %v957 = vpow.pop %v956
        %v958 = vsel %vm932, %v957, 0.0
        %959 = vadd.xlane.f32.xlu0 %v958
        %v960 = vpop.xlane.xlu0 %959
        %v961 = vrcp.pop %v960
        %v962 = vmul.f32 %v957, %v961
        %v963 = vpack.c.bf16 %v962, %v962
        %v965 = vsel %vm932, %v963, 0
        %vm967 = vcmask 1043456
        %v969 = vsel %vm967, %v927, 0
        %971 = vmatpush.bf16.msra.mxu0 0
        %972 = vmatpush.bf16.msra.mxu0 0
        %973 = vmatpush.bf16.msra.mxu0 0
        %974 = vmatpush.bf16.msra.mxu0 0
        %975 = vmatpush.bf16.msra.mxu0 0
        %976 = vmatpush.bf16.msra.mxu0 0
        %977 = vmatpush.bf16.msra.mxu0 0
        %978 = vmatpush.bf16.msra.mxu0 %v969
        %979 = vmatmul.bf16.gmra.mxu0 %v965
        %v980 = vpop.f32.mrf.mxu0
        %v981 = vadd.f32 0.0, %v980
        %v982 = vpop.f32.mrf.mxu0
        %983 = vdwg.mxu0
        %v984 = vpack.c.bf16 %v981, %v981
        %v985 = vld [vmem:[%s9] sm:$0xf]
        %s986 = scalar_lea.vmem %s3, 16
        %v987 = vld [vmem:[%s986] sm:$0xf]
        %v988 = vld [vmem:[%s986 + $0x4] sm:$0xf]
        %v989 = vld [vmem:[%s986 + $0x8] sm:$0xf]
        %v990 = vld [vmem:[%s986 + $0xc] sm:$0xf]
        %s991 = scalar_lea.vmem %s6, 1
        %v992 = vld [vmem:[%s991] sm:$0x1]
        %v994 = vperm.slane %v992, 0
        %v1000 = vunpack.c.l.b16 %v987
        %v1001 = vunpack.c.l.b16 %v988
        %v1002 = vunpack.c.l.b16 %v989
        %v1003 = vunpack.c.l.b16 %v990
        %v1004 = vpack.c.b16 %v1001, %v1000
        %v1005 = vpack.c.b16 %v1003, %v1002
        %1008 = vmatpush.bf16.msra.mxu0 0
        %1009 = vmatpush.bf16.msra.mxu0 0
        %1010 = vmatpush.bf16.msra.mxu0 0
        %1011 = vmatpush.bf16.msra.mxu0 0
        %1012 = vmatpush.bf16.msra.mxu0 0
        %1013 = vmatpush.bf16.msra.mxu0 0
        %1014 = vmatpush.bf16.msra.mxu0 %v1005
        %1015 = vmatpush.bf16.msra.mxu0 %v1004
        %1016 = vmatmul.bf16.gmra.mxu0 %v910
        %v1017 = vpop.f32.mrf.mxu0
        %v1018 = vadd.f32 %v994, %v1017
        %v1019 = vpop.f32.mrf.mxu0
        %1020 = vdwg.mxu0
        %v1021 = vmul.f32 %v1018, 0.35355338
        %s1022 = scalar_lea.vmem [#allocation2], 4
        %v1023 = vld [vmem:[%s1022] sm:$0xf]
        %s1024 = scalar_lea.vmem [#allocation3], 4
        %v1025 = vld [vmem:[%s1024] sm:$0xf]
        %v1026 = vpack.c.bf16 %v1021, %v1021
        %v1028 = vsel %vm932, %v1026, 0
        %v1031 = vsel %vm932, %v1023, 0
        %1033 = vmatpush.bf16.xpose.msra.mxu0 0
        %1034 = vmatpush.bf16.xpose.msra.mxu0 0
        %1035 = vmatpush.bf16.xpose.msra.mxu0 0
        %1036 = vmatpush.bf16.xpose.msra.mxu0 0
        %1037 = vmatpush.bf16.xpose.msra.mxu0 0
        %1038 = vmatpush.bf16.xpose.msra.mxu0 0
        %1039 = vmatpush.bf16.xpose.msra.mxu0 0
        %1040 = vmatpush.bf16.xpose.msra.mxu0 %v1031
        %1041 = vmatmul.bf16.gmra.mxu0 %v1028
        %v1042 = vpop.f32.mrf.mxu0
        %v1043 = vadd.f32 %v930, %v1042
        %v1044 = vpop.f32.mrf.mxu0
        %1045 = vdwg.mxu0
        %v1046 = vsel %vm932, %v1043, -inf
        %1047 = vmax.xlane.f32.xlu0 %v1046
        %v1048 = vpop.xlane.xlu0 %1047
        %v1049 = vsub.f32 %v1043, %v1048
        %v1050 = vmul.f32 %v1049, 1.442695
        %v1051 = vpow.pop %v1050
        %v1052 = vsel %vm932, %v1051, 0.0
        %1053 = vadd.xlane.f32.xlu0 %v1052
        %v1054 = vpop.xlane.xlu0 %1053
        %v1055 = vrcp.pop %v1054
        %v1056 = vmul.f32 %v1051, %v1055
        %v1057 = vpack.c.bf16 %v1056, %v1056
        %v1059 = vsel %vm932, %v1057, 0
        %v1062 = vsel %vm967, %v1025, 0
        %1064 = vmatpush.bf16.msra.mxu0 0
        %1065 = vmatpush.bf16.msra.mxu0 0
        %1066 = vmatpush.bf16.msra.mxu0 0
        %1067 = vmatpush.bf16.msra.mxu0 0
        %1068 = vmatpush.bf16.msra.mxu0 0
        %1069 = vmatpush.bf16.msra.mxu0 0
        %1070 = vmatpush.bf16.msra.mxu0 0
        %1071 = vmatpush.bf16.msra.mxu0 %v1062
        %1072 = vmatmul.bf16.gmra.mxu0 %v1059
        %v1073 = vpop.f32.mrf.mxu0
        %v1074 = vadd.f32 0.0, %v1073
        %v1075 = vpop.f32.mrf.mxu0
        %1076 = vdwg.mxu0
        %v1077 = vpack.c.bf16 %v1074, %v1074
        %s1078 = scalar_lea.vmem %s9, 4
        %v1079 = vld [vmem:[%s1078] sm:$0xf]
        %v1081 = vsel %vm932, %v1077, 0
        %v1084 = vsel %vm967, %v1079, 0
        %1086 = vmatpush.bf16.msra.mxu0 0
        %1087 = vmatpush.bf16.msra.mxu0 0
        %1088 = vmatpush.bf16.msra.mxu0 0
        %1089 = vmatpush.bf16.msra.mxu0 0
        %1090 = vmatpush.bf16.msra.mxu0 0
        %1091 = vmatpush.bf16.msra.mxu0 0
        %1092 = vmatpush.bf16.msra.mxu0 0
        %1093 = vmatpush.bf16.msra.mxu0 %v1084
        %1094 = vmatmul.bf16.gmra.mxu0 %v1081
        %v1095 = vpop.f32.mrf.mxu0
        %v1096 = vadd.f32 0.0, %v1095
        %v1097 = vpop.f32.mrf.mxu0
        %1098 = vdwg.mxu0
        %v1100 = vsel %vm932, %v984, 0
        %v1103 = vsel %vm967, %v985, 0
        %1105 = vmatpush.bf16.msra.mxu0 0
        %1106 = vmatpush.bf16.msra.mxu0 0
        %1107 = vmatpush.bf16.msra.mxu0 0
        %1108 = vmatpush.bf16.msra.mxu0 0
        %1109 = vmatpush.bf16.msra.mxu0 0
        %1110 = vmatpush.bf16.msra.mxu0 0
        %1111 = vmatpush.bf16.msra.mxu0 0
        %1112 = vmatpush.bf16.msra.mxu0 %v1103
        %1113 = vmatmul.bf16.gmra.mxu0 %v1100
        %v1114 = vpop.f32.mrf.mxu0
        %v1115 = vadd.f32 %v1096, %v1114
        %v1116 = vpop.f32.mrf.mxu0
        %1117 = vdwg.mxu0
        %s1118 = scalar_lea.vmem %s3, 32
        %v1119 = vld [vmem:[%s1118] sm:$0xf]
        %v1120 = vld [vmem:[%s1118 + $0x4] sm:$0xf]
        %v1121 = vld [vmem:[%s1118 + $0x8] sm:$0xf]
        %v1122 = vld [vmem:[%s1118 + $0xc] sm:$0xf]
        %s1123 = scalar_lea.vmem %s6, 2
        %v1124 = vld [vmem:[%s1123] sm:$0x1]
        %v1126 = vperm.slane %v1124, 0
        %v1132 = vunpack.c.l.b16 %v1119
        %v1133 = vunpack.c.l.b16 %v1120
        %v1134 = vunpack.c.l.b16 %v1121
        %v1135 = vunpack.c.l.b16 %v1122
        %v1136 = vpack.c.b16 %v1133, %v1132
        %v1137 = vpack.c.b16 %v1135, %v1134
        %1140 = vmatpush.bf16.msra.mxu0 0
        %1141 = vmatpush.bf16.msra.mxu0 0
        %1142 = vmatpush.bf16.msra.mxu0 0
        %1143 = vmatpush.bf16.msra.mxu0 0
        %1144 = vmatpush.bf16.msra.mxu0 0
        %1145 = vmatpush.bf16.msra.mxu0 0
        %1146 = vmatpush.bf16.msra.mxu0 %v1137
        %1147 = vmatpush.bf16.msra.mxu0 %v1136
        %1148 = vmatmul.bf16.gmra.mxu0 %v910
        %v1149 = vpop.f32.mrf.mxu0
        %v1150 = vadd.f32 %v1126, %v1149
        %v1151 = vpop.f32.mrf.mxu0
        %1152 = vdwg.mxu0
        %v1153 = vmul.f32 %v1150, 0.35355338
        %s1154 = scalar_lea.vmem [#allocation2], 8
        %v1155 = vld [vmem:[%s1154] sm:$0xf]
        %s1156 = scalar_lea.vmem [#allocation3], 8
        %v1157 = vld [vmem:[%s1156] sm:$0xf]
        %v1158 = vpack.c.bf16 %v1153, %v1153
        %v1160 = vsel %vm932, %v1158, 0
        %v1163 = vsel %vm932, %v1155, 0
        %1165 = vmatpush.bf16.xpose.msra.mxu0 0
        %1166 = vmatpush.bf16.xpose.msra.mxu0 0
        %1167 = vmatpush.bf16.xpose.msra.mxu0 0
        %1168 = vmatpush.bf16.xpose.msra.mxu0 0
        %1169 = vmatpush.bf16.xpose.msra.mxu0 0
        %1170 = vmatpush.bf16.xpose.msra.mxu0 0
        %1171 = vmatpush.bf16.xpose.msra.mxu0 0
        %1172 = vmatpush.bf16.xpose.msra.mxu0 %v1163
        %1173 = vmatmul.bf16.gmra.mxu0 %v1160
        %v1174 = vpop.f32.mrf.mxu0
        %v1175 = vadd.f32 %v930, %v1174
        %v1176 = vpop.f32.mrf.mxu0
        %1177 = vdwg.mxu0
        %v1178 = vsel %vm932, %v1175, -inf
        %1179 = vmax.xlane.f32.xlu0 %v1178
        %v1180 = vpop.xlane.xlu0 %1179
        %v1181 = vsub.f32 %v1175, %v1180
        %v1182 = vmul.f32 %v1181, 1.442695
        %v1183 = vpow.pop %v1182
        %v1184 = vsel %vm932, %v1183, 0.0
        %1185 = vadd.xlane.f32.xlu0 %v1184
        %v1186 = vpop.xlane.xlu0 %1185
        %v1187 = vrcp.pop %v1186
        %v1188 = vmul.f32 %v1183, %v1187
        %v1189 = vpack.c.bf16 %v1188, %v1188
        %v1191 = vsel %vm932, %v1189, 0
        %v1194 = vsel %vm967, %v1157, 0
        %1196 = vmatpush.bf16.msra.mxu0 0
        %1197 = vmatpush.bf16.msra.mxu0 0
        %1198 = vmatpush.bf16.msra.mxu0 0
        %1199 = vmatpush.bf16.msra.mxu0 0
        %1200 = vmatpush.bf16.msra.mxu0 0
        %1201 = vmatpush.bf16.msra.mxu0 0
        %1202 = vmatpush.bf16.msra.mxu0 0
        %1203 = vmatpush.bf16.msra.mxu0 %v1194
        %1204 = vmatmul.bf16.gmra.mxu0 %v1191
        %v1205 = vpop.f32.mrf.mxu0
        %v1206 = vadd.f32 0.0, %v1205
        %v1207 = vpop.f32.mrf.mxu0
        %1208 = vdwg.mxu0
        %v1209 = vpack.c.bf16 %v1206, %v1206
        %s1210 = scalar_lea.vmem %s9, 8
        %v1211 = vld [vmem:[%s1210] sm:$0xf]
        %v1213 = vsel %vm932, %v1209, 0
        %v1216 = vsel %vm967, %v1211, 0
        %1218 = vmatpush.bf16.msra.mxu0 0
        %1219 = vmatpush.bf16.msra.mxu0 0
        %1220 = vmatpush.bf16.msra.mxu0 0
        %1221 = vmatpush.bf16.msra.mxu0 0
        %1222 = vmatpush.bf16.msra.mxu0 0
        %1223 = vmatpush.bf16.msra.mxu0 0
        %1224 = vmatpush.bf16.msra.mxu0 0
        %1225 = vmatpush.bf16.msra.mxu0 %v1216
        %1226 = vmatmul.bf16.gmra.mxu0 %v1213
        %v1227 = vpop.f32.mrf.mxu0
        %v1228 = vadd.f32 0.0, %v1227
        %v1229 = vpop.f32.mrf.mxu0
        %1230 = vdwg.mxu0
        %v1231 = vadd.f32 %v1115, %v1228
        %s1232 = scalar_lea.vmem %s3, 48
        %v1233 = vld [vmem:[%s1232] sm:$0xf]
        %v1234 = vld [vmem:[%s1232 + $0x4] sm:$0xf]
        %v1235 = vld [vmem:[%s1232 + $0x8] sm:$0xf]
        %v1236 = vld [vmem:[%s1232 + $0xc] sm:$0xf]
        %s1237 = scalar_lea.vmem %s6, 3
        %v1238 = vld [vmem:[%s1237] sm:$0x1]
        %v1240 = vperm.slane %v1238, 0
        %v1246 = vunpack.c.l.b16 %v1233
        %v1247 = vunpack.c.l.b16 %v1234
        %v1248 = vunpack.c.l.b16 %v1235
        %v1249 = vunpack.c.l.b16 %v1236
        %v1250 = vpack.c.b16 %v1247, %v1246
        %v1251 = vpack.c.b16 %v1249, %v1248
        %1254 = vmatpush.bf16.msra.mxu0 0
        %1255 = vmatpush.bf16.msra.mxu0 0
        %1256 = vmatpush.bf16.msra.mxu0 0
        %1257 = vmatpush.bf16.msra.mxu0 0
        %1258 = vmatpush.bf16.msra.mxu0 0
        %1259 = vmatpush.bf16.msra.mxu0 0
        %1260 = vmatpush.bf16.msra.mxu0 %v1251
        %1261 = vmatpush.bf16.msra.mxu0 %v1250
        %1262 = vmatmul.bf16.gmra.mxu0 %v910
        %v1263 = vpop.f32.mrf.mxu0
        %v1264 = vadd.f32 %v1240, %v1263
        %v1265 = vpop.f32.mrf.mxu0
        %1266 = vdwg.mxu0
        %v1267 = vmul.f32 %v1264, 0.35355338
        %s1268 = scalar_lea.vmem [#allocation2], 12
        %v1269 = vld [vmem:[%s1268] sm:$0xf]
        %s1270 = scalar_lea.vmem [#allocation3], 12
        %v1271 = vld [vmem:[%s1270] sm:$0xf]
        %v1272 = vpack.c.bf16 %v1267, %v1267
        %v1274 = vsel %vm932, %v1272, 0
        %v1277 = vsel %vm932, %v1269, 0
        %1279 = vmatpush.bf16.xpose.msra.mxu0 0
        %1280 = vmatpush.bf16.xpose.msra.mxu0 0
        %1281 = vmatpush.bf16.xpose.msra.mxu0 0
        %1282 = vmatpush.bf16.xpose.msra.mxu0 0
        %1283 = vmatpush.bf16.xpose.msra.mxu0 0
        %1284 = vmatpush.bf16.xpose.msra.mxu0 0
        %1285 = vmatpush.bf16.xpose.msra.mxu0 0
        %1286 = vmatpush.bf16.xpose.msra.mxu0 %v1277
        %1287 = vmatmul.bf16.gmra.mxu0 %v1274
        %v1288 = vpop.f32.mrf.mxu0
        %v1289 = vadd.f32 %v930, %v1288
        %v1290 = vpop.f32.mrf.mxu0
        %1291 = vdwg.mxu0
        %v1292 = vsel %vm932, %v1289, -inf
        %1293 = vmax.xlane.f32.xlu0 %v1292
        %v1294 = vpop.xlane.xlu0 %1293
        %v1295 = vsub.f32 %v1289, %v1294
        %v1296 = vmul.f32 %v1295, 1.442695
        %v1297 = vpow.pop %v1296
        %v1298 = vsel %vm932, %v1297, 0.0
        %1299 = vadd.xlane.f32.xlu0 %v1298
        %v1300 = vpop.xlane.xlu0 %1299
        %v1301 = vrcp.pop %v1300
        %v1302 = vmul.f32 %v1297, %v1301
        %v1303 = vpack.c.bf16 %v1302, %v1302
        %v1305 = vsel %vm932, %v1303, 0
        %v1308 = vsel %vm967, %v1271, 0
        %1310 = vmatpush.bf16.msra.mxu0 0
        %1311 = vmatpush.bf16.msra.mxu0 0
        %1312 = vmatpush.bf16.msra.mxu0 0
        %1313 = vmatpush.bf16.msra.mxu0 0
        %1314 = vmatpush.bf16.msra.mxu0 0
        %1315 = vmatpush.bf16.msra.mxu0 0
        %1316 = vmatpush.bf16.msra.mxu0 0
        %1317 = vmatpush.bf16.msra.mxu0 %v1308
        %1318 = vmatmul.bf16.gmra.mxu0 %v1305
        %v1319 = vpop.f32.mrf.mxu0
        %v1320 = vadd.f32 0.0, %v1319
        %v1321 = vpop.f32.mrf.mxu0
        %1322 = vdwg.mxu0
        %v1323 = vpack.c.bf16 %v1320, %v1320
        %s1324 = scalar_lea.vmem %s9, 12
        %v1325 = vld [vmem:[%s1324] sm:$0xf]
        %v1327 = vsel %vm932, %v1323, 0
        %v1330 = vsel %vm967, %v1325, 0
        %1332 = vmatpush.bf16.msra.mxu0 0
        %1333 = vmatpush.bf16.msra.mxu0 0
        %1334 = vmatpush.bf16.msra.mxu0 0
        %1335 = vmatpush.bf16.msra.mxu0 0
        %1336 = vmatpush.bf16.msra.mxu0 0
        %1337 = vmatpush.bf16.msra.mxu0 0
        %1338 = vmatpush.bf16.msra.mxu0 0
        %1339 = vmatpush.bf16.msra.mxu0 %v1330
        %1340 = vmatmul.bf16.gmra.mxu0 %v1327
        %v1341 = vpop.f32.mrf.mxu0
        %v1342 = vadd.f32 0.0, %v1341
        %v1343 = vpop.f32.mrf.mxu0
        %1344 = vdwg.mxu0
        %v1345 = vadd.f32 %v1231, %v1342
        %v1346 = vld [vmem:[%s10] sm:$0x1]
        %v1348 = vperm.slane %v1346, 0
        %v1350 = vadd.f32 %v1345, %v1348
        %v1351 = vld [vmem:[%s15] sm:$0x1]
        %v1352 = vld [vmem:[%s15 + $0x1] sm:$0x1]
        %v1353 = vld [vmem:[%s15 + $0x2] sm:$0x1]
        %v1354 = vld [vmem:[%s15 + $0x3] sm:$0x1]
        %v1355 = vadd.f32 %v883, %v1350
        %v1356 = vsel %vm908, %v1355, 0.0
        %1357 = vadd.xlane.f32.xlu0 %v1356
        %v1358 = vpop.xlane.xlu0 %1357
        %v1359 = vrcp.pop 32.0
        %v1360 = vmul.f32 32.0, %v1359
        %v1361 = vsub.f32 1.0, %v1360
        %v1362 = vmul.f32 %v1359, %v1361
        %v1363 = vadd.f32 %v1359, %v1362
        %vm1364 = vweird.f32 %v1359
        %v1365 = vsel %vm1364, %v1359, %v1363
        %v1366 = vmul.f32 %v1358, %v1365
        %v1367 = vsub.f32 %v1355, %v1366
        %v1368 = vmul.f32 %v1367, %v1367
        %v1369 = vsel %vm908, %v1368, 0.0
        %1370 = vadd.xlane.f32.xlu0 %v1369
        %v1371 = vpop.xlane.xlu0 %1370
        %v1372 = vmul.f32 %v1371, %v1365
        %v1373 = vadd.f32 %v1372, 1e-12
        %v1374 = vrsqrt.pop %v1373
        %v1375 = vmul.f32 %v1374, %v1373
        %v1376 = vmul.f32 %v1375, %v1374
        %v1377 = vmul.f32 0.5, %v1376
        %v1378 = vsub.f32 1.5, %v1377
        %v1379 = vmul.f32 %v1374, %v1378
        %vm1380 = vweird.f32 %v1373
        %vm1381 = vweird.f32 %v1374
        %vm1382 = vmor %vm1380, %vm1381
        %v1383 = vsel %vm1382, %v1374, %v1379
        %v1384 = vmul.f32 %v1367, %v1383
        %v1385 = vperm.slane %v1351, 0
        %v1386 = vmul.f32 %v1384, %v1385
        %v1387 = vperm.slane %v1352, 0
        %v1388 = vadd.f32 %v1386, %v1387
        %v1389 = vpack.c.bf16 %v1388, %v1388
        %v1390 = vld [vmem:[%s11] sm:$0xf]
        %v1391 = vld [vmem:[%s11 + $0x4] sm:$0xf]
        %v1392 = vld [vmem:[%s11 + $0x8] sm:$0xf]
        %v1393 = vld [vmem:[%s11 + $0xc] sm:$0xf]
        %v1394 = vld [vmem:[%s12] sm:$0x1]
        %v1396 = vperm.slane %v1394, 0
        %v1402 = vunpack.c.l.b16 %v1390
        %v1403 = vunpack.c.l.b16 %v1391
        %v1404 = vunpack.c.l.b16 %v1392
        %v1405 = vunpack.c.l.b16 %v1393
        %v1406 = vpack.c.b16 %v1403, %v1402
        %v1407 = vpack.c.b16 %v1405, %v1404
        %v1411 = vsel %vm908, %v1389, 0
        %1413 = vmatpush.bf16.msra.mxu0 0
        %1414 = vmatpush.bf16.msra.mxu0 0
        %1415 = vmatpush.bf16.msra.mxu0 0
        %1416 = vmatpush.bf16.msra.mxu0 0
        %1417 = vmatpush.bf16.msra.mxu0 0
        %1418 = vmatpush.bf16.msra.mxu0 0
        %1419 = vmatpush.bf16.msra.mxu0 %v1407
        %1420 = vmatpush.bf16.msra.mxu0 %v1406
        %1421 = vmatmul.bf16.gmra.mxu0 %v1411
        %v1422 = vpop.f32.mrf.mxu0
        %v1423 = vadd.f32 %v1396, %v1422
        %v1424 = vpop.f32.mrf.mxu0
        %1425 = vdwg.mxu0
        %v1426 = vmul.f32 %v1423, 0.5
        %v1427 = vmul.f32 %v1423, 0.044715
        %v1428 = vmul.f32 %v1427, %v1423
        %v1429 = vmul.f32 %v1428, %v1423
        %v1430 = vadd.f32 %v1423, %v1429
        %v1431 = vmul.f32 %v1430, 0.7978846
        %v1432 = vtanh.pop %v1431
        %v1433 = vadd.f32 %v1432, 1.0
        %v1434 = vmul.f32 %v1426, %v1433
        %v1435 = vpack.c.bf16 %v1434, %v1434
        %v1436 = vld [vmem:[%s13] sm:$0xf]
        %v1437 = vld [vmem:[%s13 + $0x4] sm:$0xf]
        %v1438 = vld [vmem:[%s13 + $0x8] sm:$0xf]
        %v1439 = vld [vmem:[%s13 + $0xc] sm:$0xf]
        %v1440 = vld [vmem:[%s13 + $0x10] sm:$0xf]
        %v1441 = vld [vmem:[%s13 + $0x14] sm:$0xf]
        %v1442 = vld [vmem:[%s13 + $0x18] sm:$0xf]
        %v1443 = vld [vmem:[%s13 + $0x1c] sm:$0xf]
        %v1444 = vld [vmem:[%s13 + $0x20] sm:$0xf]
        %v1445 = vld [vmem:[%s13 + $0x24] sm:$0xf]
        %v1446 = vld [vmem:[%s13 + $0x28] sm:$0xf]
        %v1447 = vld [vmem:[%s13 + $0x2c] sm:$0xf]
        %v1448 = vld [vmem:[%s13 + $0x30] sm:$0xf]
        %v1449 = vld [vmem:[%s13 + $0x34] sm:$0xf]
        %v1450 = vld [vmem:[%s13 + $0x38] sm:$0xf]
        %v1451 = vld [vmem:[%s13 + $0x3c] sm:$0xf]
        %v1452 = vld [vmem:[%s14] sm:$0x1]
        %v1454 = vperm.slane %v1452, 0
        %v1472 = vunpack.c.l.b16 %v1436
        %v1473 = vunpack.c.l.b16 %v1437
        %v1474 = vunpack.c.l.b16 %v1438
        %v1475 = vunpack.c.l.b16 %v1439
        %v1476 = vunpack.c.l.b16 %v1440
        %v1477 = vunpack.c.l.b16 %v1441
        %v1478 = vunpack.c.l.b16 %v1442
        %v1479 = vunpack.c.l.b16 %v1443
        %v1480 = vunpack.c.l.b16 %v1444
        %v1481 = vunpack.c.l.b16 %v1445
        %v1482 = vunpack.c.l.b16 %v1446
        %v1483 = vunpack.c.l.b16 %v1447
        %v1484 = vunpack.c.l.b16 %v1448
        %v1485 = vunpack.c.l.b16 %v1449
        %v1486 = vunpack.c.l.b16 %v1450
        %v1487 = vunpack.c.l.b16 %v1451
        %v1488 = vpack.c.b16 %v1473, %v1472
        %v1489 = vpack.c.b16 %v1475, %v1474
        %v1490 = vpack.c.b16 %v1477, %v1476
        %v1491 = vpack.c.b16 %v1479, %v1478
        %v1492 = vpack.c.b16 %v1481, %v1480
        %v1493 = vpack.c.b16 %v1483, %v1482
        %v1494 = vpack.c.b16 %v1485, %v1484
        %v1495 = vpack.c.b16 %v1487, %v1486
        %1504 = vmatpush.bf16.msra.mxu0 %v1495
        %1505 = vmatpush.bf16.msra.mxu0 %v1494
        %1506 = vmatpush.bf16.msra.mxu0 %v1493
        %1507 = vmatpush.bf16.msra.mxu0 %v1492
        %1508 = vmatpush.bf16.msra.mxu0 %v1491
        %1509 = vmatpush.bf16.msra.mxu0 %v1490
        %1510 = vmatpush.bf16.msra.mxu0 %v1489
        %1511 = vmatpush.bf16.msra.mxu0 %v1488
        %1512 = vmatmul.bf16.gmra.mxu0 %v1435
        %v1513 = vpop.f32.mrf.mxu0
        %v1514 = vadd.f32 %v1454, %v1513
        %v1515 = vpop.f32.mrf.mxu0
        %1516 = vdwg.mxu0
        %v1517 = vadd.f32 %v1388, %v1514
        %v1518 = vsel %vm908, %v1517, 0.0
        %1519 = vadd.xlane.f32.xlu0 %v1518
        %v1520 = vpop.xlane.xlu0 %1519
        %v1521 = vmul.f32 %v1520, %v1365
        %v1522 = vsub.f32 %v1517, %v1521
        %v1523 = vmul.f32 %v1522, %v1522
        %v1524 = vsel %vm908, %v1523, 0.0
        %1525 = vadd.xlane.f32.xlu0 %v1524
        %v1526 = vpop.xlane.xlu0 %1525
        %v1527 = vmul.f32 %v1526, %v1365
        %v1528 = vadd.f32 %v1527, 1e-12
        %v1529 = vrsqrt.pop %v1528
        %v1530 = vmul.f32 %v1529, %v1528
        %v1531 = vmul.f32 %v1530, %v1529
        %v1532 = vmul.f32 0.5, %v1531
        %v1533 = vsub.f32 1.5, %v1532
        %v1534 = vmul.f32 %v1529, %v1533
        %vm1535 = vweird.f32 %v1528
        %vm1536 = vweird.f32 %v1529
        %vm1537 = vmor %vm1535, %vm1536
        %v1538 = vsel %vm1537, %v1529, %v1534
        %v1539 = vmul.f32 %v1522, %v1538
        %v1540 = vperm.slane %v1353, 0
        %v1541 = vmul.f32 %v1539, %v1540
        %v1542 = vperm.slane %v1354, 0
        %v1543 = vadd.f32 %v1541, %v1542
        %1544 = vst.msk [vmem:[%s558] sm:$0xff] %vm908, %v1543
        %s1545 = sand.u32 %s405, 1
        %s1546 = scalar_lea.sflag [#allocation5], %s1545
        %s1547 = sand.u32 %s405, 1
        %s1548 = smul.addr %s1547, 8
        %s1549 = scalar_lea.vmem [#allocation4], %s1548
        // Predicated region
        $region89: #{tpu_custom_call.1} parent=83 // pred_check
          %p1550 = pneg %p415
        $region90: #{tpu_custom_call.1} parent=83 // pred_check_branch
          %1552 = sbr.rel (%p1550) target = $region92
        $region91: #{tpu_custom_call.1} parent=83 // pred_region
          %1554 = vsyncadd %s1546, 0
          %s1555 = sadd.s32 %s35, %s34
          %s1556 = smul.addr %s1555, 8
          %s1557 = scalar_lea.hbm %s16, %s1556
          %s1559 = sshll.u32 %s1549, 4
          %s1560 = int_to_ptr.vmem [resolvable:$true] %s1559
          %s1561 = sshll.u32 %s1557, 4
          %s1562 = int_to_ptr.hbm [resolvable:$true] %s1561
          %1564 = dma.vmem_to_hbm [thread:$0]  %s1560, 128, %s1562, %s1546
        $region92: #{tpu_custom_call.1} parent=83 // pred_fallthru
          _
      $region84: #{tpu_custom_call.1} parent=5 // pred_fallthru
        _
      %p1565 = scmp.le.s32.totalorder 2, %s25
      // Predicated region
      $region93: #{tpu_custom_call.1} parent=5 // pred_check
        %p1566 = pneg %p1565
      $region94: #{tpu_custom_call.1} parent=5 // pred_check_branch
        %1568 = sbr.rel (%p1566) target = $region96
      $region95: #{tpu_custom_call.1} parent=5 // pred_region
        %s1569 = ssub.s32 %s25, 2
        // Predicated region
        $region97: #{tpu_custom_call.1} parent=95 // pred_check
          %p1570 = pneg %p421
        $region98: #{tpu_custom_call.1} parent=95 // pred_check_branch
          %1572 = sbr.rel (%p1570) target = $region100
        $region99: #{tpu_custom_call.1} parent=95 // pred_region
          %s1573 = sand.u32 %s406, 1
          %s1574 = scalar_lea.sflag [#allocation5], %s1573
          %s1575 = sand.u32 %s406, 1
          %s1576 = smul.addr %s1575, 8
          %s1577 = scalar_lea.vmem [#allocation4], %s1576
          %1579 = dma.done %s1574, 128
        $region100: #{tpu_custom_call.1} parent=95 // pred_fallthru
          _
      $region96: #{tpu_custom_call.1} parent=5 // pred_fallthru
        _
    $region6: #{tpu_custom_call.1} parent=1 // loop_footer
      %s29 = sadd.s32 1, %s25
    $region7: #{tpu_custom_call.1} parent=1 // loop_footer_branch
      %24 = sbr.rel target = $region3
    $region8: #{tpu_custom_call.1} parent=1 // loop_exit
      _
    %1580 = vsyncpa [#allocation5], 1
    %s1581 = scalar_lea.sflag [#allocation5], 1
    %1582 = vsyncpa %s1581, 1

// kernel: tpu_custom_call.1
$region0: #{tpu_custom_call.1}
  #allocation0 [shape = 'u32[]', space=smem, size = 0x4, offset = 0x4, fixed_abs, tag = 'smem constant byte address 0x4 - core index']
  #allocation1 [shape = 'u32[72,128]{1,0:T(1,128)}', space=vmem, size = 0x9000, scoped, tag = 'internal scratch']
  #allocation2 [shape = 'bf16[4,8,8]{2,1,0:T(8,128)(2,1)}', space=vmem, size = 0x2000, scoped, tag = 'scratch operand']
  #allocation3 [shape = 'bf16[4,8,8]{2,1,0:T(8,128)(2,1)}', space=vmem, size = 0x2000, scoped, tag = 'scratch operand']
  %s0 = inlined_call_operand.vmem [shape: f32[2,8,32], index: 0, kind: input, shape index: {}]
  %s1 = inlined_call_operand.vmem [shape: f32[2,8,32], index: 1, kind: input, shape index: {}]
  %s2 = inlined_call_operand.vmem [shape: f32[2,1,8], index: 2, kind: input, shape index: {}]
  %s3 = inlined_call_operand.vmem [shape: bf16[4,32,8], index: 3, kind: input, shape index: {}]
  %s4 = inlined_call_operand.vmem [shape: bf16[4,32,8], index: 4, kind: input, shape index: {}]
  %s5 = inlined_call_operand.vmem [shape: bf16[4,32,8], index: 5, kind: input, shape index: {}]
  %s6 = inlined_call_operand.vmem [shape: f32[4,1,8], index: 6, kind: input, shape index: {}]
  %s7 = inlined_call_operand.vmem [shape: f32[4,1,8], index: 7, kind: input, shape index: {}]
  %s8 = inlined_call_operand.vmem [shape: f32[4,1,8], index: 8, kind: input, shape index: {}]
  %s9 = inlined_call_operand.vmem [shape: bf16[4,8,32], index: 9, kind: input, shape index: {}]
  %s10 = inlined_call_operand.vmem [shape: f32[1,32], index: 10, kind: input, shape index: {}]
  %s11 = inlined_call_operand.vmem [shape: bf16[32,128], index: 11, kind: input, shape index: {}]
  %s12 = inlined_call_operand.vmem [shape: f32[1,128], index: 12, kind: input, shape index: {}]
  %s13 = inlined_call_operand.vmem [shape: bf16[128,32], index: 13, kind: input, shape index: {}]
  %s14 = inlined_call_operand.vmem [shape: f32[1,32], index: 14, kind: input, shape index: {}]
  %s15 = inlined_call_operand.vmem [shape: f32[4,32], index: 15, kind: input, shape index: {}]
  %s16 = inlined_call_operand.hbm [shape: f32[2,8,32], index: 16, kind: output, shape index: {}]
  %s17 = sld [smem:[#allocation0]]
  $region101: #{tpu_custom_call.1} parent=0
    _
  %s19 = ssub.s32 1, %s17
  %s20 = scalar_select 0, %s19, %s17
  $region1: #{tpu_custom_call.1} parent=0
    #allocation4 [shape = 'u8[8192]{0}', space=vmem, size = 0x2000, scoped, tag = 'output window, operand 0']
    #allocation5 [shape = 's32[2]{0}', space=sflag, size = 0x8, scoped, tag = 'scoped memory for tpu_custom_call.1']
    %21 = vsyncpa [#allocation5], 0
    %s22 = scalar_lea.sflag [#allocation5], 1
    %23 = vsyncpa %s22, 0
    loop: start=0, step=1, limit=4
    $region2: #{tpu_custom_call.1} parent=1 // loop_pre_header
      _
    $region3: #{tpu_custom_call.1} parent=1 // loop_header
      %s25 = sphi 0, %s29
      %p26 = scmp.ge.s32.totalorder %s25, 4
      %s32 = sphi 0, %s44
      %s33 = sphi 0, %s40
      %s34 = sphi 0, %s32
      %s35 = sphi 0, %s33
      %s36 = sphi 0, %s34
      %s37 = sphi 0, %s35
      %s49 = sphi 0, %s51
      %s52 = sphi 0, %s49
      %s53 = sphi 0, %s52
      %s69 = sphi 0, %s53
      %s75 = sphi 0, %s77
      %s78 = sphi 0, %s75
      %s79 = sphi 0, %s78
      %s95 = sphi 0, %s79
      %s101 = sphi 0, %s103
      %s104 = sphi 0, %s101
      %s105 = sphi 0, %s104
      %s121 = sphi 0, %s105
      %s125 = sphi 0, %s125
      %s127 = sphi 0, %s125
      %s128 = sphi 0, %s127
      %s142 = sphi 0, %s128
      %s146 = sphi 0, %s146
      %s148 = sphi 0, %s146
      %s149 = sphi 0, %s148
      %s163 = sphi 0, %s149
      %s167 = sphi 0, %s167
      %s169 = sphi 0, %s167
      %s170 = sphi 0, %s169
      %s184 = sphi 0, %s170
      %s188 = sphi 0, %s188
      %s190 = sphi 0, %s188
      %s191 = sphi 0, %s190
      %s205 = sphi 0, %s191
      %s209 = sphi 0, %s209
      %s211 = sphi 0, %s209
      %s212 = sphi 0, %s211
      %s226 = sphi 0, %s212
      %s230 = sphi 0, %s230
      %s232 = sphi 0, %s230
      %s233 = sphi 0, %s232
      %s247 = sphi 0, %s233
      %s251 = sphi 0, %s251
      %s253 = sphi 0, %s251
      %s254 = sphi 0, %s253
      %s268 = sphi 0, %s254
      %s272 = sphi 0, %s272
      %s274 = sphi 0, %s272
      %s275 = sphi 0, %s274
      %s289 = sphi 0, %s275
      %s293 = sphi 0, %s293
      %s295 = sphi 0, %s293
      %s296 = sphi 0, %s295
      %s310 = sphi 0, %s296
      %s314 = sphi 0, %s314
      %s316 = sphi 0, %s314
      %s317 = sphi 0, %s316
      %s331 = sphi 0, %s317
      %s335 = sphi 0, %s335
      %s337 = sphi 0, %s335
      %s338 = sphi 0, %s337
      %s352 = sphi 0, %s338
      %s356 = sphi 0, %s356
      %s358 = sphi 0, %s356
      %s359 = sphi 0, %s358
      %s373 = sphi 0, %s359
      %s377 = sphi 0, %s377
      %s379 = sphi 0, %s377
      %s380 = sphi 0, %s379
      %s394 = sphi 0, %s380
      %s402 = sphi 0, %s404
      %s405 = sphi 0, %s402
      %s406 = sphi 0, %s405
      %s422 = sphi 0, %s406
    $region4: #{tpu_custom_call.1} parent=1 // loop_header_branch
      %28 = sbr.rel (%p26) target = $region8
    $region5: #{tpu_custom_call.1} parent=1 // loop_body
      %s30 = ssub.s32 %s25, 1
      %s31 = ssub.s32 %s25, 2
      %s38 = sadd.s32 1, %s33
      %p39 = scmp.ge.s32.totalorder %s38, 1
      %s40 = scalar_select %p39, 0, %s38
      %s41 = sadd.s32 1, %s32
      %s42 = scalar_select %p39, %s41, %s32
      %p43 = scmp.ge.s32.totalorder %s42, 2
      %s44 = scalar_select %p43, 0, %s42
      %s45 = ssub.s32 %s32, %s44
      %s46 = ssub.s32 %s33, %s40
      %s47 = sor.u32 %s45, %s46
      %p48 = scmp.eq.s32.totalorder %s47, 0
      %s50 = sadd.s32 %s49, 1
      %s51 = scalar_select %p48, %s49, %s50
      %p54 = pneg %p48
      %p55 = scmp.eq.s32.totalorder %s25, 1
      %p56 = por %p54, %p55
      %p57 = scmp.ne.s32.totalorder %s49, %s52
      %p58 = scmp.eq.s32.totalorder %s25, 0
      %p59 = por %p57, %p58
      %p60 = scmp.ne.s32.totalorder %s49, %s52
      %p61 = scmp.eq.s32.totalorder %s30, 1
      %p62 = por %p60, %p61
      %p63 = scmp.ne.s32.totalorder %s52, %s53
      %p64 = scmp.eq.s32.totalorder %s30, 0
      %p65 = por %p63, %p64
      %p66 = scmp.ne.s32.totalorder %s52, %s53
      %p67 = scmp.eq.s32.totalorder %s31, 1
      %p68 = por %p66, %p67
      %p70 = scmp.ne.s32.totalorder %s53, %s69
      %p71 = scmp.eq.s32.totalorder %s31, 0
      %p72 = por %p70, %p71
      %s73 = ssub.s32 %s32, %s44
      %p74 = scmp.eq.s32.totalorder %s73, 0
      %s76 = sadd.s32 %s75, 1
      %s77 = scalar_select %p74, %s75, %s76
      %p80 = pneg %p74
      %p81 = scmp.eq.s32.totalorder %s25, 1
      %p82 = por %p80, %p81
      %p83 = scmp.ne.s32.totalorder %s75, %s78
      %p84 = scmp.eq.s32.totalorder %s25, 0
      %p85 = por %p83, %p84
      %p86 = scmp.ne.s32.totalorder %s75, %s78
      %p87 = scmp.eq.s32.totalorder %s30, 1
      %p88 = por %p86, %p87
      %p89 = scmp.ne.s32.totalorder %s78, %s79
      %p90 = scmp.eq.s32.totalorder %s30, 0
      %p91 = por %p89, %p90
      %p92 = scmp.ne.s32.totalorder %s78, %s79
      %p93 = scmp.eq.s32.totalorder %s31, 1
      %p94 = por %p92, %p93
      %p96 = scmp.ne.s32.totalorder %s79, %s95
      %p97 = scmp.eq.s32.totalorder %s31, 0
      %p98 = por %p96, %p97
      %s99 = ssub.s32 %s32, %s44
      %p100 = scmp.eq.s32.totalorder %s99, 0
      %s102 = sadd.s32 %s101, 1
      %s103 = scalar_select %p100, %s101, %s102
      %p106 = pneg %p100
      %p107 = scmp.eq.s32.totalorder %s25, 1
      %p108 = por %p106, %p107
      %p109 = scmp.ne.s32.totalorder %s101, %s104
      %p110 = scmp.eq.s32.totalorder %s25, 0
      %p111 = por %p109, %p110
      %p112 = scmp.ne.s32.totalorder %s101, %s104
      %p113 = scmp.eq.s32.totalorder %s30, 1
      %p114 = por %p112, %p113
      %p115 = scmp.ne.s32.totalorder %s104, %s105
      %p116 = scmp.eq.s32.totalorder %s30, 0
      %p117 = por %p115, %p116
      %p118 = scmp.ne.s32.totalorder %s104, %s105
      %p119 = scmp.eq.s32.totalorder %s31, 1
      %p120 = por %p118, %p119
      %p122 = scmp.ne.s32.totalorder %s105, %s121
      %p123 = scmp.eq.s32.totalorder %s31, 0
      %p124 = por %p122, %p123
      %s126 = sadd.s32 %s125, 1
      %p129 = scmp.eq.s32.totalorder %s25, 1
      %p130 = scmp.ne.s32.totalorder %s125, %s127
      %p131 = scmp.eq.s32.totalorder %s25, 0
      %p132 = por %p130, %p131
      %p133 = scmp.ne.s32.totalorder %s125, %s127
      %p134 = scmp.eq.s32.totalorder %s30, 1
      %p135 = por %p133, %p134
      %p136 = scmp.ne.s32.totalorder %s127, %s128
      %p137 = scmp.eq.s32.totalorder %s30, 0
      %p138 = por %p136, %p137
      %p139 = scmp.ne.s32.totalorder %s127, %s128
      %p140 = scmp.eq.s32.totalorder %s31, 1
      %p141 = por %p139, %p140
      %p143 = scmp.ne.s32.totalorder %s128, %s142
      %p144 = scmp.eq.s32.totalorder %s31, 0
      %p145 = por %p143, %p144
      %s147 = sadd.s32 %s146, 1
      %p150 = scmp.eq.s32.totalorder %s25, 1
      %p151 = scmp.ne.s32.totalorder %s146, %s148
      %p152 = scmp.eq.s32.totalorder %s25, 0
      %p153 = por %p151, %p152
      %p154 = scmp.ne.s32.totalorder %s146, %s148
      %p155 = scmp.eq.s32.totalorder %s30, 1
      %p156 = por %p154, %p155
      %p157 = scmp.ne.s32.totalorder %s148, %s149
      %p158 = scmp.eq.s32.totalorder %s30, 0
      %p159 = por %p157, %p158
      %p160 = scmp.ne.s32.totalorder %s148, %s149
      %p161 = scmp.eq.s32.totalorder %s31, 1
      %p162 = por %p160, %p161
      %p164 = scmp.ne.s32.totalorder %s149, %s163
      %p165 = scmp.eq.s32.totalorder %s31, 0
      %p166 = por %p164, %p165
      %s168 = sadd.s32 %s167, 1
      %p171 = scmp.eq.s32.totalorder %s25, 1
      %p172 = scmp.ne.s32.totalorder %s167, %s169
      %p173 = scmp.eq.s32.totalorder %s25, 0
      %p174 = por %p172, %p173
      %p175 = scmp.ne.s32.totalorder %s167, %s169
      %p176 = scmp.eq.s32.totalorder %s30, 1
      %p177 = por %p175, %p176
      %p178 = scmp.ne.s32.totalorder %s169, %s170
      %p179 = scmp.eq.s32.totalorder %s30, 0
      %p180 = por %p178, %p179
      %p181 = scmp.ne.s32.totalorder %s169, %s170
      %p182 = scmp.eq.s32.totalorder %s31, 1
      %p183 = por %p181, %p182
      %p185 = scmp.ne.s32.totalorder %s170, %s184
      %p186 = scmp.eq.s32.totalorder %s31, 0
      %p187 = por %p185, %p186
      %s189 = sadd.s32 %s188, 1
      %p192 = scmp.eq.s32.totalorder %s25, 1
      %p193 = scmp.ne.s32.totalorder %s188, %s190
      %p194 = scmp.eq.s32.totalorder %s25, 0
      %p195 = por %p193, %p194
      %p196 = scmp.ne.s32.totalorder %s188, %s190
      %p197 = scmp.eq.s32.totalorder %s30, 1
      %p198 = por %p196, %p197
      %p199 = scmp.ne.s32.totalorder %s190, %s191
      %p200 = scmp.eq.s32.totalorder %s30, 0
      %p201 = por %p199, %p200
      %p202 = scmp.ne.s32.totalorder %s190, %s191
      %p203 = scmp.eq.s32.totalorder %s31, 1
      %p204 = por %p202, %p203
      %p206 = scmp.ne.s32.totalorder %s191, %s205
      %p207 = scmp.eq.s32.totalorder %s31, 0
      %p208 = por %p206, %p207
      %s210 = sadd.s32 %s209, 1
      %p213 = scmp.eq.s32.totalorder %s25, 1
      %p214 = scmp.ne.s32.totalorder %s209, %s211
      %p215 = scmp.eq.s32.totalorder %s25, 0
      %p216 = por %p214, %p215
      %p217 = scmp.ne.s32.totalorder %s209, %s211
      %p218 = scmp.eq.s32.totalorder %s30, 1
      %p219 = por %p217, %p218
      %p220 = scmp.ne.s32.totalorder %s211, %s212
      %p221 = scmp.eq.s32.totalorder %s30, 0
      %p222 = por %p220, %p221
      %p223 = scmp.ne.s32.totalorder %s211, %s212
      %p224 = scmp.eq.s32.totalorder %s31, 1
      %p225 = por %p223, %p224
      %p227 = scmp.ne.s32.totalorder %s212, %s226
      %p228 = scmp.eq.s32.totalorder %s31, 0
      %p229 = por %p227, %p228
      %s231 = sadd.s32 %s230, 1
      %p234 = scmp.eq.s32.totalorder %s25, 1
      %p235 = scmp.ne.s32.totalorder %s230, %s232
      %p236 = scmp.eq.s32.totalorder %s25, 0
      %p237 = por %p235, %p236
      %p238 = scmp.ne.s32.totalorder %s230, %s232
      %p239 = scmp.eq.s32.totalorder %s30, 1
      %p240 = por %p238, %p239
      %p241 = scmp.ne.s32.totalorder %s232, %s233
      %p242 = scmp.eq.s32.totalorder %s30, 0
      %p243 = por %p241, %p242
      %p244 = scmp.ne.s32.totalorder %s232, %s233
      %p245 = scmp.eq.s32.totalorder %s31, 1
      %p246 = por %p244, %p245
      %p248 = scmp.ne.s32.totalorder %s233, %s247
      %p249 = scmp.eq.s32.totalorder %s31, 0
      %p250 = por %p248, %p249
      %s252 = sadd.s32 %s251, 1
      %p255 = scmp.eq.s32.totalorder %s25, 1
      %p256 = scmp.ne.s32.totalorder %s251, %s253
      %p257 = scmp.eq.s32.totalorder %s25, 0
      %p258 = por %p256, %p257
      %p259 = scmp.ne.s32.totalorder %s251, %s253
      %p260 = scmp.eq.s32.totalorder %s30, 1
      %p261 = por %p259, %p260
      %p262 = scmp.ne.s32.totalorder %s253, %s254
      %p263 = scmp.eq.s32.totalorder %s30, 0
      %p264 = por %p262, %p263
      %p265 = scmp.ne.s32.totalorder %s253, %s254
      %p266 = scmp.eq.s32.totalorder %s31, 1
      %p267 = por %p265, %p266
      %p269 = scmp.ne.s32.totalorder %s254, %s268
      %p270 = scmp.eq.s32.totalorder %s31, 0
      %p271 = por %p269, %p270
      %s273 = sadd.s32 %s272, 1
      %p276 = scmp.eq.s32.totalorder %s25, 1
      %p277 = scmp.ne.s32.totalorder %s272, %s274
      %p278 = scmp.eq.s32.totalorder %s25, 0
      %p279 = por %p277, %p278
      %p280 = scmp.ne.s32.totalorder %s272, %s274
      %p281 = scmp.eq.s32.totalorder %s30, 1
      %p282 = por %p280, %p281
      %p283 = scmp.ne.s32.totalorder %s274, %s275
      %p284 = scmp.eq.s32.totalorder %s30, 0
      %p285 = por %p283, %p284
      %p286 = scmp.ne.s32.totalorder %s274, %s275
      %p287 = scmp.eq.s32.totalorder %s31, 1
      %p288 = por %p286, %p287
      %p290 = scmp.ne.s32.totalorder %s275, %s289
      %p291 = scmp.eq.s32.totalorder %s31, 0
      %p292 = por %p290, %p291
      %s294 = sadd.s32 %s293, 1
      %p297 = scmp.eq.s32.totalorder %s25, 1
      %p298 = scmp.ne.s32.totalorder %s293, %s295
      %p299 = scmp.eq.s32.totalorder %s25, 0
      %p300 = por %p298, %p299
      %p301 = scmp.ne.s32.totalorder %s293, %s295
      %p302 = scmp.eq.s32.totalorder %s30, 1
      %p303 = por %p301, %p302
      %p304 = scmp.ne.s32.totalorder %s295, %s296
      %p305 = scmp.eq.s32.totalorder %s30, 0
      %p306 = por %p304, %p305
      %p307 = scmp.ne.s32.totalorder %s295, %s296
      %p308 = scmp.eq.s32.totalorder %s31, 1
      %p309 = por %p307, %p308
      %p311 = scmp.ne.s32.totalorder %s296, %s310
      %p312 = scmp.eq.s32.totalorder %s31, 0
      %p313 = por %p311, %p312
      %s315 = sadd.s32 %s314, 1
      %p318 = scmp.eq.s32.totalorder %s25, 1
      %p319 = scmp.ne.s32.totalorder %s314, %s316
      %p320 = scmp.eq.s32.totalorder %s25, 0
      %p321 = por %p319, %p320
      %p322 = scmp.ne.s32.totalorder %s314, %s316
      %p323 = scmp.eq.s32.totalorder %s30, 1
      %p324 = por %p322, %p323
      %p325 = scmp.ne.s32.totalorder %s316, %s317
      %p326 = scmp.eq.s32.totalorder %s30, 0
      %p327 = por %p325, %p326
      %p328 = scmp.ne.s32.totalorder %s316, %s317
      %p329 = scmp.eq.s32.totalorder %s31, 1
      %p330 = por %p328, %p329
      %p332 = scmp.ne.s32.totalorder %s317, %s331
      %p333 = scmp.eq.s32.totalorder %s31, 0
      %p334 = por %p332, %p333
      %s336 = sadd.s32 %s335, 1
      %p339 = scmp.eq.s32.totalorder %s25, 1
      %p340 = scmp.ne.s32.totalorder %s335, %s337
      %p341 = scmp.eq.s32.totalorder %s25, 0
      %p342 = por %p340, %p341
      %p343 = scmp.ne.s32.totalorder %s335, %s337
      %p344 = scmp.eq.s32.totalorder %s30, 1
      %p345 = por %p343, %p344
      %p346 = scmp.ne.s32.totalorder %s337, %s338
      %p347 = scmp.eq.s32.totalorder %s30, 0
      %p348 = por %p346, %p347
      %p349 = scmp.ne.s32.totalorder %s337, %s338
      %p350 = scmp.eq.s32.totalorder %s31, 1
      %p351 = por %p349, %p350
      %p353 = scmp.ne.s32.totalorder %s338, %s352
      %p354 = scmp.eq.s32.totalorder %s31, 0
      %p355 = por %p353, %p354
      %s357 = sadd.s32 %s356, 1
      %p360 = scmp.eq.s32.totalorder %s25, 1
      %p361 = scmp.ne.s32.totalorder %s356, %s358
      %p362 = scmp.eq.s32.totalorder %s25, 0
      %p363 = por %p361, %p362
      %p364 = scmp.ne.s32.totalorder %s356, %s358
      %p365 = scmp.eq.s32.totalorder %s30, 1
      %p366 = por %p364, %p365
      %p367 = scmp.ne.s32.totalorder %s358, %s359
      %p368 = scmp.eq.s32.totalorder %s30, 0
      %p369 = por %p367, %p368
      %p370 = scmp.ne.s32.totalorder %s358, %s359
      %p371 = scmp.eq.s32.totalorder %s31, 1
      %p372 = por %p370, %p371
      %p374 = scmp.ne.s32.totalorder %s359, %s373
      %p375 = scmp.eq.s32.totalorder %s31, 0
      %p376 = por %p374, %p375
      %s378 = sadd.s32 %s377, 1
      %p381 = scmp.eq.s32.totalorder %s25, 1
      %p382 = scmp.ne.s32.totalorder %s377, %s379
      %p383 = scmp.eq.s32.totalorder %s25, 0
      %p384 = por %p382, %p383
      %p385 = scmp.ne.s32.totalorder %s377, %s379
      %p386 = scmp.eq.s32.totalorder %s30, 1
      %p387 = por %p385, %p386
      %p388 = scmp.ne.s32.totalorder %s379, %s380
      %p389 = scmp.eq.s32.totalorder %s30, 0
      %p390 = por %p388, %p389
      %p391 = scmp.ne.s32.totalorder %s379, %s380
      %p392 = scmp.eq.s32.totalorder %s31, 1
      %p393 = por %p391, %p392
      %p395 = scmp.ne.s32.totalorder %s380, %s394
      %p396 = scmp.eq.s32.totalorder %s31, 0
      %p397 = por %p395, %p396
      %s398 = ssub.s32 %s32, %s44
      %s399 = ssub.s32 %s33, %s40
      %s400 = sor.u32 %s398, %s399
      %p401 = scmp.eq.s32.totalorder %s400, 0
      %s403 = sadd.s32 %s402, 1
      %s404 = scalar_select %p401, %s402, %s403
      %p407 = pneg %p401
      %p408 = scmp.eq.s32.totalorder %s25, 1
      %p409 = por %p407, %p408
      %p410 = scmp.ne.s32.totalorder %s402, %s405
      %p411 = scmp.eq.s32.totalorder %s25, 0
      %p412 = por %p410, %p411
      %p413 = scmp.ne.s32.totalorder %s402, %s405
      %p414 = scmp.eq.s32.totalorder %s30, 1
      %p415 = por %p413, %p414
      %p416 = scmp.ne.s32.totalorder %s405, %s406
      %p417 = scmp.eq.s32.totalorder %s30, 0
      %p418 = por %p416, %p417
      %p419 = scmp.ne.s32.totalorder %s405, %s406
      %p420 = scmp.eq.s32.totalorder %s31, 1
      %p421 = por %p419, %p420
      %p423 = scmp.ne.s32.totalorder %s406, %s422
      %p424 = scmp.eq.s32.totalorder %s31, 0
      %p425 = por %p423, %p424
      %p426 = scmp.le.s32.totalorder 1, %s25
      %p427 = scmp.lt.s32.totalorder %s25, 3
      %p428 = pnand %p426, %p427
      %p429 = pneg %p428
      // Predicated region
      $region9: #{tpu_custom_call.1} parent=5 // pred_check
        _
      $region10: #{tpu_custom_call.1} parent=5 // pred_check_branch
        %431 = sbr.rel (%p428) target = $region12
      $region11: #{tpu_custom_call.1} parent=5 // pred_region
        %s432 = ssub.s32 %s25, 1
        // Predicated region
        $region13: #{tpu_custom_call.1} parent=11 // pred_check
          %p433 = pneg %p138
        $region14: #{tpu_custom_call.1} parent=11 // pred_check_branch
          %435 = sbr.rel (%p433) target = $region16
        $region15: #{tpu_custom_call.1} parent=11 // pred_region
          _
        $region16: #{tpu_custom_call.1} parent=11 // pred_fallthru
          _
        // Predicated region
        $region17: #{tpu_custom_call.1} parent=11 // pred_check
          %p436 = pneg %p159
        $region18: #{tpu_custom_call.1} parent=11 // pred_check_branch
          %438 = sbr.rel (%p436) target = $region20
        $region19: #{tpu_custom_call.1} parent=11 // pred_region
          _
        $region20: #{tpu_custom_call.1} parent=11 // pred_fallthru
          _
        // Predicated region
        $region21: #{tpu_custom_call.1} parent=11 // pred_check
          %p439 = pneg %p180
        $region22: #{tpu_custom_call.1} parent=11 // pred_check_branch
          %441 = sbr.rel (%p439) target = $region24
        $region23: #{tpu_custom_call.1} parent=11 // pred_region
          _
        $region24: #{tpu_custom_call.1} parent=11 // pred_fallthru
          _
        // Predicated region
        $region25: #{tpu_custom_call.1} parent=11 // pred_check
          %p442 = pneg %p201
        $region26: #{tpu_custom_call.1} parent=11 // pred_check_branch
          %444 = sbr.rel (%p442) target = $region28
        $region27: #{tpu_custom_call.1} parent=11 // pred_region
          _
        $region28: #{tpu_custom_call.1} parent=11 // pred_fallthru
          _
        // Predicated region
        $region29: #{tpu_custom_call.1} parent=11 // pred_check
          %p445 = pneg %p222
        $region30: #{tpu_custom_call.1} parent=11 // pred_check_branch
          %447 = sbr.rel (%p445) target = $region32
        $region31: #{tpu_custom_call.1} parent=11 // pred_region
          _
        $region32: #{tpu_custom_call.1} parent=11 // pred_fallthru
          _
        // Predicated region
        $region33: #{tpu_custom_call.1} parent=11 // pred_check
          %p448 = pneg %p243
        $region34: #{tpu_custom_call.1} parent=11 // pred_check_branch
          %450 = sbr.rel (%p448) target = $region36
        $region35: #{tpu_custom_call.1} parent=11 // pred_region
          _
        $region36: #{tpu_custom_call.1} parent=11 // pred_fallthru
          _
        // Predicated region
        $region37: #{tpu_custom_call.1} parent=11 // pred_check
          %p451 = pneg %p264
        $region38: #{tpu_custom_call.1} parent=11 // pred_check_branch
          %453 = sbr.rel (%p451) target = $region40
        $region39: #{tpu_custom_call.1} parent=11 // pred_region
          _
        $region40: #{tpu_custom_call.1} parent=11 // pred_fallthru
          _
        // Predicated region
        $region41: #{tpu_custom_call.1} parent=11 // pred_check
          %p454 = pneg %p285
        $region42: #{tpu_custom_call.1} parent=11 // pred_check_branch
          %456 = sbr.rel (%p454) target = $region44
        $region43: #{tpu_custom_call.1} parent=11 // pred_region
          _
        $region44: #{tpu_custom_call.1} parent=11 // pred_fallthru
          _
        // Predicated region
        $region45: #{tpu_custom_call.1} parent=11 // pred_check
          %p457 = pneg %p306
        $region46: #{tpu_custom_call.1} parent=11 // pred_check_branch
          %459 = sbr.rel (%p457) target = $region48
        $region47: #{tpu_custom_call.1} parent=11 // pred_region
          _
        $region48: #{tpu_custom_call.1} parent=11 // pred_fallthru
          _
        // Predicated region
        $region49: #{tpu_custom_call.1} parent=11 // pred_check
          %p460 = pneg %p327
        $region50: #{tpu_custom_call.1} parent=11 // pred_check_branch
          %462 = sbr.rel (%p460) target = $region52
        $region51: #{tpu_custom_call.1} parent=11 // pred_region
          _
        $region52: #{tpu_custom_call.1} parent=11 // pred_fallthru
          _
        // Predicated region
        $region53: #{tpu_custom_call.1} parent=11 // pred_check
          %p463 = pneg %p348
        $region54: #{tpu_custom_call.1} parent=11 // pred_check_branch
          %465 = sbr.rel (%p463) target = $region56
        $region55: #{tpu_custom_call.1} parent=11 // pred_region
          _
        $region56: #{tpu_custom_call.1} parent=11 // pred_fallthru
          _
        // Predicated region
        $region57: #{tpu_custom_call.1} parent=11 // pred_check
          %p466 = pneg %p369
        $region58: #{tpu_custom_call.1} parent=11 // pred_check_branch
          %468 = sbr.rel (%p466) target = $region60
        $region59: #{tpu_custom_call.1} parent=11 // pred_region
          _
        $region60: #{tpu_custom_call.1} parent=11 // pred_fallthru
          _
        // Predicated region
        $region61: #{tpu_custom_call.1} parent=11 // pred_check
          %p469 = pneg %p390
        $region62: #{tpu_custom_call.1} parent=11 // pred_check_branch
          %471 = sbr.rel (%p469) target = $region64
        $region63: #{tpu_custom_call.1} parent=11 // pred_region
          _
        $region64: #{tpu_custom_call.1} parent=11 // pred_fallthru
          _
      $region12: #{tpu_custom_call.1} parent=5 // pred_fallthru
        _
      %p472 = scmp.lt.s32.totalorder %s25, 2
      // Predicated region
      $region65: #{tpu_custom_call.1} parent=5 // pred_check
        %p473 = pneg %p472
      $region66: #{tpu_custom_call.1} parent=5 // pred_check_branch
        %475 = sbr.rel (%p473) target = $region68
      $region67: #{tpu_custom_call.1} parent=5 // pred_region
        // Predicated region
        $region69: #{tpu_custom_call.1} parent=67 // pred_check
          %p476 = pneg %p59
        $region70: #{tpu_custom_call.1} parent=67 // pred_check_branch
          %478 = sbr.rel (%p476) target = $region72
        $region71: #{tpu_custom_call.1} parent=67 // pred_region
          %p479 = scmp.lt.s32.totalorder %s32, 1
          %s480 = scalar_select %p479, %s32, 1
          %p481 = scmp.lt.s32.totalorder %s33, 0
          %s482 = scalar_select %p481, %s33, 0
          %s483 = sadd.s32 %s482, %s480
          %s484 = smul.addr %s483, 8
          %s485 = scalar_lea.vmem %s0, %s484
        $region72: #{tpu_custom_call.1} parent=67 // pred_fallthru
          _
        // Predicated region
        $region73: #{tpu_custom_call.1} parent=67 // pred_check
          %p486 = pneg %p85
        $region74: #{tpu_custom_call.1} parent=67 // pred_check_branch
          %488 = sbr.rel (%p486) target = $region76
        $region75: #{tpu_custom_call.1} parent=67 // pred_region
          %p489 = scmp.lt.s32.totalorder %s32, 1
          %s490 = scalar_select %p489, %s32, 1
          %s491 = smul.addr %s490, 8
          %s492 = scalar_lea.vmem %s1, %s491
        $region76: #{tpu_custom_call.1} parent=67 // pred_fallthru
          _
        // Predicated region
        $region77: #{tpu_custom_call.1} parent=67 // pred_check
          %p493 = pneg %p111
        $region78: #{tpu_custom_call.1} parent=67 // pred_check_branch
          %495 = sbr.rel (%p493) target = $region80
        $region79: #{tpu_custom_call.1} parent=67 // pred_region
          %p496 = scmp.lt.s32.totalorder %s32, 1
          %s497 = scalar_select %p496, %s32, 1
          %s498 = scalar_lea.vmem %s2, %s497
        $region80: #{tpu_custom_call.1} parent=67 // pred_fallthru
          _
      $region68: #{tpu_custom_call.1} parent=5 // pred_fallthru
        _
      %p499 = scmp.le.s32.totalorder 1, %s25
      %p500 = scmp.lt.s32.totalorder %s25, 3
      %p501 = pnand %p499, %p500
      %p502 = pneg %p501
      // Predicated region
      $region81: #{tpu_custom_call.1} parent=5 // pred_check
        _
      $region82: #{tpu_custom_call.1} parent=5 // pred_check_branch
        %504 = sbr.rel (%p501) target = $region84
      $region83: #{tpu_custom_call.1} parent=5 // pred_region
        %s505 = ssub.s32 %s25, 1
        %p506 = scmp.lt.s32.totalorder %s34, 1
        %s507 = scalar_select %p506, %s34, 1
        %p508 = scmp.lt.s32.totalorder %s35, 0
        %s509 = scalar_select %p508, %s35, 0
        %s510 = sadd.s32 %s509, %s507
        %s511 = smul.addr %s510, 8
        %s512 = scalar_lea.vmem %s0, %s511
        %p513 = pneg %p65
        %p514 = pneg %p62
        %p515 = scmp.lt.s32.totalorder %s34, 1
        %s516 = scalar_select %p515, %s34, 1
        %s517 = smul.addr %s516, 8
        %s518 = scalar_lea.vmem %s1, %s517
        %p519 = pneg %p91
        %p520 = pneg %p88
        %p521 = scmp.lt.s32.totalorder %s34, 1
        %s522 = scalar_select %p521, %s34, 1
        %s523 = scalar_lea.vmem %s2, %s522
        %p524 = pneg %p117
        %p525 = pneg %p114
        %p526 = pneg %p138
        %p527 = pneg %p135
        %p528 = pneg %p159
        %p529 = pneg %p156
        %p530 = pneg %p180
        %p531 = pneg %p177
        %p532 = pneg %p201
        %p533 = pneg %p198
        %p534 = pneg %p222
        %p535 = pneg %p219
        %p536 = pneg %p243
        %p537 = pneg %p240
        %p538 = pneg %p264
        %p539 = pneg %p261
        %p540 = pneg %p285
        %p541 = pneg %p282
        %p542 = pneg %p306
        %p543 = pneg %p303
        %p544 = pneg %p327
        %p545 = pneg %p324
        %p546 = pneg %p348
        %p547 = pneg %p345
        %p548 = pneg %p369
        %p549 = pneg %p366
        %p550 = pneg %p390
        %p551 = pneg %p387
        %p552 = pneg %p418
        %p553 = pneg %p415
        %s554 = sand.u32 %s405, 1
        %s555 = scalar_lea.sflag [#allocation5], %s554
        %s556 = sand.u32 %s405, 1
        %s557 = smul.addr %s556, 8
        %s558 = scalar_lea.vmem [#allocation4], %s557
        %p559 = scmp.lt.s32.totalorder %s34, 1
        %s560 = scalar_select %p559, %s34, 1
        %p561 = scmp.lt.s32.totalorder %s35, 0
        %s562 = scalar_select %p561, %s35, 0
        %s563 = sadd.s32 %s562, %s560
        %s564 = smul.addr %s563, 8
        %s565 = scalar_lea.vmem %s0, %s564
        %p566 = scmp.lt.s32.totalorder %s34, 1
        %s567 = scalar_select %p566, %s34, 1
        %s568 = smul.addr %s567, 8
        %s569 = scalar_lea.vmem %s1, %s568
        %p570 = scmp.lt.s32.totalorder %s34, 1
        %s571 = scalar_select %p570, %s34, 1
        %s572 = scalar_lea.vmem %s2, %s571
        %p574 = scmp.eq.s32.totalorder %s35, 0
        // Predicated region
        $region85: #{tpu_custom_call.1} parent=83 // pred_check
          %p575 = pneg %p574
        $region86: #{tpu_custom_call.1} parent=83 // pred_check_branch
          %577 = sbr.rel (%p575) target = $region88
        $region87: #{tpu_custom_call.1} parent=83 // pred_region
          %v578 = vld [vmem:[%s569] sm:$0xff]
          %v579 = vpack.c.bf16 %v578, %v578
          %v580 = vld [vmem:[%s4] sm:$0xf]
          %v581 = vld [vmem:[%s4 + $0x4] sm:$0xf]
          %v582 = vld [vmem:[%s4 + $0x8] sm:$0xf]
          %v583 = vld [vmem:[%s4 + $0xc] sm:$0xf]
          %v584 = vld [vmem:[%s7] sm:$0x1]
          %v586 = vperm.slane %v584, 0
          %v592 = vunpack.c.l.b16 %v580
          %v593 = vunpack.c.l.b16 %v581
          %v594 = vunpack.c.l.b16 %v582
          %v595 = vunpack.c.l.b16 %v583
          %v596 = vpack.c.b16 %v593, %v592
          %v597 = vpack.c.b16 %v595, %v594
          %vm600 = vcmask 261120
          %v602 = vsel %vm600, %v579, 0
          %604 = vmatpush.bf16.msra.mxu0 0
          %605 = vmatpush.bf16.msra.mxu0 0
          %606 = vmatpush.bf16.msra.mxu0 0
          %607 = vmatpush.bf16.msra.mxu0 0
          %608 = vmatpush.bf16.msra.mxu0 0
          %609 = vmatpush.bf16.msra.mxu0 0
          %610 = vmatpush.bf16.msra.mxu0 %v597
          %611 = vmatpush.bf16.msra.mxu0 %v596
          %612 = vmatmul.bf16.gmra.mxu0 %v602
          %v613 = vpop.f32.mrf.mxu0
          %v614 = vadd.f32 %v586, %v613
          %v615 = vpop.f32.mrf.mxu0
          %616 = vdwg.mxu0
          %v617 = vld [vmem:[%s5] sm:$0xf]
          %v618 = vld [vmem:[%s5 + $0x4] sm:$0xf]
          %v619 = vld [vmem:[%s5 + $0x8] sm:$0xf]
          %v620 = vld [vmem:[%s5 + $0xc] sm:$0xf]
          %v621 = vld [vmem:[%s8] sm:$0x1]
          %v623 = vperm.slane %v621, 0
          %v629 = vunpack.c.l.b16 %v617
          %v630 = vunpack.c.l.b16 %v618
          %v631 = vunpack.c.l.b16 %v619
          %v632 = vunpack.c.l.b16 %v620
          %v633 = vpack.c.b16 %v630, %v629
          %v634 = vpack.c.b16 %v632, %v631
          %637 = vmatpush.bf16.msra.mxu0 0
          %638 = vmatpush.bf16.msra.mxu0 0
          %639 = vmatpush.bf16.msra.mxu0 0
          %640 = vmatpush.bf16.msra.mxu0 0
          %641 = vmatpush.bf16.msra.mxu0 0
          %642 = vmatpush.bf16.msra.mxu0 0
          %643 = vmatpush.bf16.msra.mxu0 %v634
          %644 = vmatpush.bf16.msra.mxu0 %v633
          %645 = vmatmul.bf16.gmra.mxu0 %v602
          %v646 = vpop.f32.mrf.mxu0
          %v647 = vadd.f32 %v623, %v646
          %v648 = vpop.f32.mrf.mxu0
          %649 = vdwg.mxu0
          %v650 = vpack.c.bf16 %v614, %v614
          %vm651 = vcmask 60416
          %652 = vst.msk [vmem:[#allocation2] sm:$0xf] %vm651, %v650
          %v653 = vpack.c.bf16 %v647, %v647
          %654 = vst.msk [vmem:[#allocation3] sm:$0xf] %vm651, %v653
          %s655 = scalar_lea.vmem %s4, 16
          %v656 = vld [vmem:[%s655] sm:$0xf]
          %v657 = vld [vmem:[%s655 + $0x4] sm:$0xf]
          %v658 = vld [vmem:[%s655 + $0x8] sm:$0xf]
          %v659 = vld [vmem:[%s655 + $0xc] sm:$0xf]
          %s660 = scalar_lea.vmem %s7, 1
          %v661 = vld [vmem:[%s660] sm:$0x1]
          %v663 = vperm.slane %v661, 0
          %v669 = vunpack.c.l.b16 %v656
          %v670 = vunpack.c.l.b16 %v657
          %v671 = vunpack.c.l.b16 %v658
          %v672 = vunpack.c.l.b16 %v659
          %v673 = vpack.c.b16 %v670, %v669
          %v674 = vpack.c.b16 %v672, %v671
          %677 = vmatpush.bf16.msra.mxu0 0
          %678 = vmatpush.bf16.msra.mxu0 0
          %679 = vmatpush.bf16.msra.mxu0 0
          %680 = vmatpush.bf16.msra.mxu0 0
          %681 = vmatpush.bf16.msra.mxu0 0
          %682 = vmatpush.bf16.msra.mxu0 0
          %683 = vmatpush.bf16.msra.mxu0 %v674
          %684 = vmatpush.bf16.msra.mxu0 %v673
          %685 = vmatmul.bf16.gmra.mxu0 %v602
          %v686 = vpop.f32.mrf.mxu0
          %v687 = vadd.f32 %v663, %v686
          %v688 = vpop.f32.mrf.mxu0
          %689 = vdwg.mxu0
          %s690 = scalar_lea.vmem %s5, 16
          %v691 = vld [vmem:[%s690] sm:$0xf]
          %v692 = vld [vmem:[%s690 + $0x4] sm:$0xf]
          %v693 = vld [vmem:[%s690 + $0x8] sm:$0xf]
          %v694 = vld [vmem:[%s690 + $0xc] sm:$0xf]
          %s695 = scalar_lea.vmem %s8, 1
          %v696 = vld [vmem:[%s695] sm:$0x1]
          %v698 = vperm.slane %v696, 0
          %v704 = vunpack.c.l.b16 %v691
          %v705 = vunpack.c.l.b16 %v692
          %v706 = vunpack.c.l.b16 %v693
          %v707 = vunpack.c.l.b16 %v694
          %v708 = vpack.c.b16 %v705, %v704
          %v709 = vpack.c.b16 %v707, %v706
          %712 = vmatpush.bf16.msra.mxu0 0
          %713 = vmatpush.bf16.msra.mxu0 0
          %714 = vmatpush.bf16.msra.mxu0 0
          %715 = vmatpush.bf16.msra.mxu0 0
          %716 = vmatpush.bf16.msra.mxu0 0
          %717 = vmatpush.bf16.msra.mxu0 0
          %718 = vmatpush.bf16.msra.mxu0 %v709
          %719 = vmatpush.bf16.msra.mxu0 %v708
          %720 = vmatmul.bf16.gmra.mxu0 %v602
          %v721 = vpop.f32.mrf.mxu0
          %v722 = vadd.f32 %v698, %v721
          %v723 = vpop.f32.mrf.mxu0
          %724 = vdwg.mxu0
          %v725 = vpack.c.bf16 %v687, %v687
          %s726 = scalar_lea.vmem [#allocation2], 4
          %727 = vst.msk [vmem:[%s726] sm:$0xf] %vm651, %v725
          %v728 = vpack.c.bf16 %v722, %v722
          %s729 = scalar_lea.vmem [#allocation3], 4
          %730 = vst.msk [vmem:[%s729] sm:$0xf] %vm651, %v728
          %s731 = scalar_lea.vmem %s4, 32
          %v732 = vld [vmem:[%s731] sm:$0xf]
          %v733 = vld [vmem:[%s731 + $0x4] sm:$0xf]
          %v734 = vld [vmem:[%s731 + $0x8] sm:$0xf]
          %v735 = vld [vmem:[%s731 + $0xc] sm:$0xf]
          %s736 = scalar_lea.vmem %s7, 2
          %v737 = vld [vmem:[%s736] sm:$0x1]
          %v739 = vperm.slane %v737, 0
          %v745 = vunpack.c.l.b16 %v732
          %v746 = vunpack.c.l.b16 %v733
          %v747 = vunpack.c.l.b16 %v734
          %v748 = vunpack.c.l.b16 %v735
          %v749 = vpack.c.b16 %v746, %v745
          %v750 = vpack.c.b16 %v748, %v747
          %753 = vmatpush.bf16.msra.mxu0 0
          %754 = vmatpush.bf16.msra.mxu0 0
          %755 = vmatpush.bf16.msra.mxu0 0
          %756 = vmatpush.bf16.msra.mxu0 0
          %757 = vmatpush.bf16.msra.mxu0 0
          %758 = vmatpush.bf16.msra.mxu0 0
          %759 = vmatpush.bf16.msra.mxu0 %v750
          %760 = vmatpush.bf16.msra.mxu0 %v749
          %761 = vmatmul.bf16.gmra.mxu0 %v602
          %v762 = vpop.f32.mrf.mxu0
          %v763 = vadd.f32 %v739, %v762
          %v764 = vpop.f32.mrf.mxu0
          %765 = vdwg.mxu0
          %s766 = scalar_lea.vmem %s5, 32
          %v767 = vld [vmem:[%s766] sm:$0xf]
          %v768 = vld [vmem:[%s766 + $0x4] sm:$0xf]
          %v769 = vld [vmem:[%s766 + $0x8] sm:$0xf]
          %v770 = vld [vmem:[%s766 + $0xc] sm:$0xf]
          %s771 = scalar_lea.vmem %s8, 2
          %v772 = vld [vmem:[%s771] sm:$0x1]
          %v774 = vperm.slane %v772, 0
          %v780 = vunpack.c.l.b16 %v767
          %v781 = vunpack.c.l.b16 %v768
          %v782 = vunpack.c.l.b16 %v769
          %v783 = vunpack.c.l.b16 %v770
          %v784 = vpack.c.b16 %v781, %v780
          %v785 = vpack.c.b16 %v783, %v782
          %788 = vmatpush.bf16.msra.mxu0 0
          %789 = vmatpush.bf16.msra.mxu0 0
          %790 = vmatpush.bf16.msra.mxu0 0
          %791 = vmatpush.bf16.msra.mxu0 0
          %792 = vmatpush.bf16.msra.mxu0 0
          %793 = vmatpush.bf16.msra.mxu0 0
          %794 = vmatpush.bf16.msra.mxu0 %v785
          %795 = vmatpush.bf16.msra.mxu0 %v784
          %796 = vmatmul.bf16.gmra.mxu0 %v602
          %v797 = vpop.f32.mrf.mxu0
          %v798 = vadd.f32 %v774, %v797
          %v799 = vpop.f32.mrf.mxu0
          %800 = vdwg.mxu0
          %v801 = vpack.c.bf16 %v763, %v763
          %s802 = scalar_lea.vmem [#allocation2], 8
          %803 = vst.msk [vmem:[%s802] sm:$0xf] %vm651, %v801
          %v804 = vpack.c.bf16 %v798, %v798
          %s805 = scalar_lea.vmem [#allocation3], 8
          %806 = vst.msk [vmem:[%s805] sm:$0xf] %vm651, %v804
          %s807 = scalar_lea.vmem %s4, 48
          %v808 = vld [vmem:[%s807] sm:$0xf]
          %v809 = vld [vmem:[%s807 + $0x4] sm:$0xf]
          %v810 = vld [vmem:[%s807 + $0x8] sm:$0xf]
          %v811 = vld [vmem:[%s807 + $0xc] sm:$0xf]
          %s812 = scalar_lea.vmem %s7, 3
          %v813 = vld [vmem:[%s812] sm:$0x1]
          %v815 = vperm.slane %v813, 0
          %v821 = vunpack.c.l.b16 %v808
          %v822 = vunpack.c.l.b16 %v809
          %v823 = vunpack.c.l.b16 %v810
          %v824 = vunpack.c.l.b16 %v811
          %v825 = vpack.c.b16 %v822, %v821
          %v826 = vpack.c.b16 %v824, %v823
          %829 = vmatpush.bf16.msra.mxu0 0
          %830 = vmatpush.bf16.msra.mxu0 0
          %831 = vmatpush.bf16.msra.mxu0 0
          %832 = vmatpush.bf16.msra.mxu0 0
          %833 = vmatpush.bf16.msra.mxu0 0
          %834 = vmatpush.bf16.msra.mxu0 0
          %835 = vmatpush.bf16.msra.mxu0 %v826
          %836 = vmatpush.bf16.msra.mxu0 %v825
          %837 = vmatmul.bf16.gmra.mxu0 %v602
          %v838 = vpop.f32.mrf.mxu0
          %v839 = vadd.f32 %v815, %v838
          %v840 = vpop.f32.mrf.mxu0
          %841 = vdwg.mxu0
          %s842 = scalar_lea.vmem %s5, 48
          %v843 = vld [vmem:[%s842] sm:$0xf]
          %v844 = vld [vmem:[%s842 + $0x4] sm:$0xf]
          %v845 = vld [vmem:[%s842 + $0x8] sm:$0xf]
          %v846 = vld [vmem:[%s842 + $0xc] sm:$0xf]
          %s847 = scalar_lea.vmem %s8, 3
          %v848 = vld [vmem:[%s847] sm:$0x1]
          %v850 = vperm.slane %v848, 0
          %v856 = vunpack.c.l.b16 %v843
          %v857 = vunpack.c.l.b16 %v844
          %v858 = vunpack.c.l.b16 %v845
          %v859 = vunpack.c.l.b16 %v846
          %v860 = vpack.c.b16 %v857, %v856
          %v861 = vpack.c.b16 %v859, %v858
          %864 = vmatpush.bf16.msra.mxu0 0
          %865 = vmatpush.bf16.msra.mxu0 0
          %866 = vmatpush.bf16.msra.mxu0 0
          %867 = vmatpush.bf16.msra.mxu0 0
          %868 = vmatpush.bf16.msra.mxu0 0
          %869 = vmatpush.bf16.msra.mxu0 0
          %870 = vmatpush.bf16.msra.mxu0 %v861
          %871 = vmatpush.bf16.msra.mxu0 %v860
          %872 = vmatmul.bf16.gmra.mxu0 %v602
          %v873 = vpop.f32.mrf.mxu0
          %v874 = vadd.f32 %v850, %v873
          %v875 = vpop.f32.mrf.mxu0
          %876 = vdwg.mxu0
          %v877 = vpack.c.bf16 %v839, %v839
          %s878 = scalar_lea.vmem [#allocation2], 12
          %879 = vst.msk [vmem:[%s878] sm:$0xf] %vm651, %v877
          %v880 = vpack.c.bf16 %v874, %v874
          %s881 = scalar_lea.vmem [#allocation3], 12
          %882 = vst.msk [vmem:[%s881] sm:$0xf] %vm651, %v880
        $region88: #{tpu_custom_call.1} parent=83 // pred_fallthru
          _
        %v883 = vld [vmem:[%s565] sm:$0xff]
        %v884 = vpack.c.bf16 %v883, %v883
        %v885 = vld [vmem:[%s572] sm:$0x1]
        %vm886 = vcmp.gt.f32.partialorder %v885, 0.0
        %v887 = vsel %vm886, 0.0, -1e+09
        %v888 = vld [vmem:[%s3] sm:$0xf]
        %v889 = vld [vmem:[%s3 + $0x4] sm:$0xf]
        %v890 = vld [vmem:[%s3 + $0x8] sm:$0xf]
        %v891 = vld [vmem:[%s3 + $0xc] sm:$0xf]
        %v892 = vld [vmem:[%s6] sm:$0x1]
        %v894 = vperm.slane %v892, 0
        %v900 = vunpack.c.l.b16 %v888
        %v901 = vunpack.c.l.b16 %v889
        %v902 = vunpack.c.l.b16 %v890
        %v903 = vunpack.c.l.b16 %v891
        %v904 = vpack.c.b16 %v901, %v900
        %v905 = vpack.c.b16 %v903, %v902
        %vm908 = vcmask 261120
        %v910 = vsel %vm908, %v884, 0
        %912 = vmatpush.bf16.msra.mxu0 0
        %913 = vmatpush.bf16.msra.mxu0 0
        %914 = vmatpush.bf16.msra.mxu0 0
        %915 = vmatpush.bf16.msra.mxu0 0
        %916 = vmatpush.bf16.msra.mxu0 0
        %917 = vmatpush.bf16.msra.mxu0 0
        %918 = vmatpush.bf16.msra.mxu0 %v905
        %919 = vmatpush.bf16.msra.mxu0 %v904
        %920 = vmatmul.bf16.gmra.mxu0 %v910
        %v921 = vpop.f32.mrf.mxu0
        %v922 = vadd.f32 %v894, %v921
        %v923 = vpop.f32.mrf.mxu0
        %924 = vdwg.mxu0
        %v925 = vmul.f32 %v922, 0.35355338
        %v926 = vld [vmem:[#allocation2] sm:$0xf]
        %v927 = vld [vmem:[#allocation3] sm:$0xf]
        %v928 = vpack.c.bf16 %v925, %v925
        %v930 = vperm.slane %v887, 0
        %vm932 = vcmask 64512
        %v934 = vsel %vm932, %v928, 0
        %v937 = vsel %vm932, %v926, 0
        %939 = vmatpush.bf16.xpose.msra.mxu0 0
        %940 = vmatpush.bf16.xpose.msra.mxu0 0
        %941 = vmatpush.bf16.xpose.msra.mxu0 0
        %942 = vmatpush.bf16.xpose.msra.mxu0 0
        %943 = vmatpush.bf16.xpose.msra.mxu0 0
        %944 = vmatpush.bf16.xpose.msra.mxu0 0
        %945 = vmatpush.bf16.xpose.msra.mxu0 0
        %946 = vmatpush.bf16.xpose.msra.mxu0 %v937
        %947 = vmatmul.bf16.gmra.mxu0 %v934
        %v948 = vpop.f32.mrf.mxu0
        %v949 = vadd.f32 %v930, %v948
        %v950 = vpop.f32.mrf.mxu0
        %951 = vdwg.mxu0
        %v952 = vsel %vm932, %v949, -inf
        %953 = vmax.xlane.f32.xlu0 %v952
        %v954 = vpop.xlane.xlu0 %953
        %v955 = vsub.f32 %v949, %v954
        %v956 = vmul.f32 %v955, 1.442695
        %v957 = vpow.pop %v956
        %v958 = vsel %vm932, %v957, 0.0
        %959 = vadd.xlane.f32.xlu0 %v958
        %v960 = vpop.xlane.xlu0 %959
        %v961 = vrcp.pop %v960
        %v962 = vmul.f32 %v957, %v961
        %v963 = vpack.c.bf16 %v962, %v962
        %v965 = vsel %vm932, %v963, 0
        %vm967 = vcmask 1043456
        %v969 = vsel %vm967, %v927, 0
        %971 = vmatpush.bf16.msra.mxu0 0
        %972 = vmatpush.bf16.msra.mxu0 0
        %973 = vmatpush.bf16.msra.mxu0 0
        %974 = vmatpush.bf16.msra.mxu0 0
        %975 = vmatpush.bf16.msra.mxu0 0
        %976 = vmatpush.bf16.msra.mxu0 0
        %977 = vmatpush.bf16.msra.mxu0 0
        %978 = vmatpush.bf16.msra.mxu0 %v969
        %979 = vmatmul.bf16.gmra.mxu0 %v965
        %v980 = vpop.f32.mrf.mxu0
        %v981 = vadd.f32 0.0, %v980
        %v982 = vpop.f32.mrf.mxu0
        %983 = vdwg.mxu0
        %v984 = vpack.c.bf16 %v981, %v981
        %v985 = vld [vmem:[%s9] sm:$0xf]
        %s986 = scalar_lea.vmem %s3, 16
        %v987 = vld [vmem:[%s986] sm:$0xf]
        %v988 = vld [vmem:[%s986 + $0x4] sm:$0xf]
        %v989 = vld [vmem:[%s986 + $0x8] sm:$0xf]
        %v990 = vld [vmem:[%s986 + $0xc] sm:$0xf]
        %s991 = scalar_lea.vmem %s6, 1
        %v992 = vld [vmem:[%s991] sm:$0x1]
        %v994 = vperm.slane %v992, 0
        %v1000 = vunpack.c.l.b16 %v987
        %v1001 = vunpack.c.l.b16 %v988
        %v1002 = vunpack.c.l.b16 %v989
        %v1003 = vunpack.c.l.b16 %v990
        %v1004 = vpack.c.b16 %v1001, %v1000
        %v1005 = vpack.c.b16 %v1003, %v1002
        %1008 = vmatpush.bf16.msra.mxu0 0
        %1009 = vmatpush.bf16.msra.mxu0 0
        %1010 = vmatpush.bf16.msra.mxu0 0
        %1011 = vmatpush.bf16.msra.mxu0 0
        %1012 = vmatpush.bf16.msra.mxu0 0
        %1013 = vmatpush.bf16.msra.mxu0 0
        %1014 = vmatpush.bf16.msra.mxu0 %v1005
        %1015 = vmatpush.bf16.msra.mxu0 %v1004
        %1016 = vmatmul.bf16.gmra.mxu0 %v910
        %v1017 = vpop.f32.mrf.mxu0
        %v1018 = vadd.f32 %v994, %v1017
        %v1019 = vpop.f32.mrf.mxu0
        %1020 = vdwg.mxu0
        %v1021 = vmul.f32 %v1018, 0.35355338
        %s1022 = scalar_lea.vmem [#allocation2], 4
        %v1023 = vld [vmem:[%s1022] sm:$0xf]
        %s1024 = scalar_lea.vmem [#allocation3], 4
        %v1025 = vld [vmem:[%s1024] sm:$0xf]
        %v1026 = vpack.c.bf16 %v1021, %v1021
        %v1028 = vsel %vm932, %v1026, 0
        %v1031 = vsel %vm932, %v1023, 0
        %1033 = vmatpush.bf16.xpose.msra.mxu0 0
        %1034 = vmatpush.bf16.xpose.msra.mxu0 0
        %1035 = vmatpush.bf16.xpose.msra.mxu0 0
        %1036 = vmatpush.bf16.xpose.msra.mxu0 0
        %1037 = vmatpush.bf16.xpose.msra.mxu0 0
        %1038 = vmatpush.bf16.xpose.msra.mxu0 0
        %1039 = vmatpush.bf16.xpose.msra.mxu0 0
        %1040 = vmatpush.bf16.xpose.msra.mxu0 %v1031
        %1041 = vmatmul.bf16.gmra.mxu0 %v1028
        %v1042 = vpop.f32.mrf.mxu0
        %v1043 = vadd.f32 %v930, %v1042
        %v1044 = vpop.f32.mrf.mxu0
        %1045 = vdwg.mxu0
        %v1046 = vsel %vm932, %v1043, -inf
        %1047 = vmax.xlane.f32.xlu0 %v1046
        %v1048 = vpop.xlane.xlu0 %1047
        %v1049 = vsub.f32 %v1043, %v1048
        %v1050 = vmul.f32 %v1049, 1.442695
        %v1051 = vpow.pop %v1050
        %v1052 = vsel %vm932, %v1051, 0.0
        %1053 = vadd.xlane.f32.xlu0 %v1052
        %v1054 = vpop.xlane.xlu0 %1053
        %v1055 = vrcp.pop %v1054
        %v1056 = vmul.f32 %v1051, %v1055
        %v1057 = vpack.c.bf16 %v1056, %v1056
        %v1059 = vsel %vm932, %v1057, 0
        %v1062 = vsel %vm967, %v1025, 0
        %1064 = vmatpush.bf16.msra.mxu0 0
        %1065 = vmatpush.bf16.msra.mxu0 0
        %1066 = vmatpush.bf16.msra.mxu0 0
        %1067 = vmatpush.bf16.msra.mxu0 0
        %1068 = vmatpush.bf16.msra.mxu0 0
        %1069 = vmatpush.bf16.msra.mxu0 0
        %1070 = vmatpush.bf16.msra.mxu0 0
        %1071 = vmatpush.bf16.msra.mxu0 %v1062
        %1072 = vmatmul.bf16.gmra.mxu0 %v1059
        %v1073 = vpop.f32.mrf.mxu0
        %v1074 = vadd.f32 0.0, %v1073
        %v1075 = vpop.f32.mrf.mxu0
        %1076 = vdwg.mxu0
        %v1077 = vpack.c.bf16 %v1074, %v1074
        %s1078 = scalar_lea.vmem %s9, 4
        %v1079 = vld [vmem:[%s1078] sm:$0xf]
        %v1081 = vsel %vm932, %v1077, 0
        %v1084 = vsel %vm967, %v1079, 0
        %1086 = vmatpush.bf16.msra.mxu0 0
        %1087 = vmatpush.bf16.msra.mxu0 0
        %1088 = vmatpush.bf16.msra.mxu0 0
        %1089 = vmatpush.bf16.msra.mxu0 0
        %1090 = vmatpush.bf16.msra.mxu0 0
        %1091 = vmatpush.bf16.msra.mxu0 0
        %1092 = vmatpush.bf16.msra.mxu0 0
        %1093 = vmatpush.bf16.msra.mxu0 %v1084
        %1094 = vmatmul.bf16.gmra.mxu0 %v1081
        %v1095 = vpop.f32.mrf.mxu0
        %v1096 = vadd.f32 0.0, %v1095
        %v1097 = vpop.f32.mrf.mxu0
        %1098 = vdwg.mxu0
        %v1100 = vsel %vm932, %v984, 0
        %v1103 = vsel %vm967, %v985, 0
        %1105 = vmatpush.bf16.msra.mxu0 0
        %1106 = vmatpush.bf16.msra.mxu0 0
        %1107 = vmatpush.bf16.msra.mxu0 0
        %1108 = vmatpush.bf16.msra.mxu0 0
        %1109 = vmatpush.bf16.msra.mxu0 0
        %1110 = vmatpush.bf16.msra.mxu0 0
        %1111 = vmatpush.bf16.msra.mxu0 0
        %1112 = vmatpush.bf16.msra.mxu0 %v1103
        %1113 = vmatmul.bf16.gmra.mxu0 %v1100
        %v1114 = vpop.f32.mrf.mxu0
        %v1115 = vadd.f32 %v1096, %v1114
        %v1116 = vpop.f32.mrf.mxu0
        %1117 = vdwg.mxu0
        %s1118 = scalar_lea.vmem %s3, 32
        %v1119 = vld [vmem:[%s1118] sm:$0xf]
        %v1120 = vld [vmem:[%s1118 + $0x4] sm:$0xf]
        %v1121 = vld [vmem:[%s1118 + $0x8] sm:$0xf]
        %v1122 = vld [vmem:[%s1118 + $0xc] sm:$0xf]
        %s1123 = scalar_lea.vmem %s6, 2
        %v1124 = vld [vmem:[%s1123] sm:$0x1]
        %v1126 = vperm.slane %v1124, 0
        %v1132 = vunpack.c.l.b16 %v1119
        %v1133 = vunpack.c.l.b16 %v1120
        %v1134 = vunpack.c.l.b16 %v1121
        %v1135 = vunpack.c.l.b16 %v1122
        %v1136 = vpack.c.b16 %v1133, %v1132
        %v1137 = vpack.c.b16 %v1135, %v1134
        %1140 = vmatpush.bf16.msra.mxu0 0
        %1141 = vmatpush.bf16.msra.mxu0 0
        %1142 = vmatpush.bf16.msra.mxu0 0
        %1143 = vmatpush.bf16.msra.mxu0 0
        %1144 = vmatpush.bf16.msra.mxu0 0
        %1145 = vmatpush.bf16.msra.mxu0 0
        %1146 = vmatpush.bf16.msra.mxu0 %v1137
        %1147 = vmatpush.bf16.msra.mxu0 %v1136
        %1148 = vmatmul.bf16.gmra.mxu0 %v910
        %v1149 = vpop.f32.mrf.mxu0
        %v1150 = vadd.f32 %v1126, %v1149
        %v1151 = vpop.f32.mrf.mxu0
        %1152 = vdwg.mxu0
        %v1153 = vmul.f32 %v1150, 0.35355338
        %s1154 = scalar_lea.vmem [#allocation2], 8
        %v1155 = vld [vmem:[%s1154] sm:$0xf]
        %s1156 = scalar_lea.vmem [#allocation3], 8
        %v1157 = vld [vmem:[%s1156] sm:$0xf]
        %v1158 = vpack.c.bf16 %v1153, %v1153
        %v1160 = vsel %vm932, %v1158, 0
        %v1163 = vsel %vm932, %v1155, 0
        %1165 = vmatpush.bf16.xpose.msra.mxu0 0
        %1166 = vmatpush.bf16.xpose.msra.mxu0 0
        %1167 = vmatpush.bf16.xpose.msra.mxu0 0
        %1168 = vmatpush.bf16.xpose.msra.mxu0 0
        %1169 = vmatpush.bf16.xpose.msra.mxu0 0
        %1170 = vmatpush.bf16.xpose.msra.mxu0 0
        %1171 = vmatpush.bf16.xpose.msra.mxu0 0
        %1172 = vmatpush.bf16.xpose.msra.mxu0 %v1163
        %1173 = vmatmul.bf16.gmra.mxu0 %v1160
        %v1174 = vpop.f32.mrf.mxu0
        %v1175 = vadd.f32 %v930, %v1174
        %v1176 = vpop.f32.mrf.mxu0
        %1177 = vdwg.mxu0
        %v1178 = vsel %vm932, %v1175, -inf
        %1179 = vmax.xlane.f32.xlu0 %v1178
        %v1180 = vpop.xlane.xlu0 %1179
        %v1181 = vsub.f32 %v1175, %v1180
        %v1182 = vmul.f32 %v1181, 1.442695
        %v1183 = vpow.pop %v1182
        %v1184 = vsel %vm932, %v1183, 0.0
        %1185 = vadd.xlane.f32.xlu0 %v1184
        %v1186 = vpop.xlane.xlu0 %1185
        %v1187 = vrcp.pop %v1186
        %v1188 = vmul.f32 %v1183, %v1187
        %v1189 = vpack.c.bf16 %v1188, %v1188
        %v1191 = vsel %vm932, %v1189, 0
        %v1194 = vsel %vm967, %v1157, 0
        %1196 = vmatpush.bf16.msra.mxu0 0
        %1197 = vmatpush.bf16.msra.mxu0 0
        %1198 = vmatpush.bf16.msra.mxu0 0
        %1199 = vmatpush.bf16.msra.mxu0 0
        %1200 = vmatpush.bf16.msra.mxu0 0
        %1201 = vmatpush.bf16.msra.mxu0 0
        %1202 = vmatpush.bf16.msra.mxu0 0
        %1203 = vmatpush.bf16.msra.mxu0 %v1194
        %1204 = vmatmul.bf16.gmra.mxu0 %v1191
        %v1205 = vpop.f32.mrf.mxu0
        %v1206 = vadd.f32 0.0, %v1205
        %v1207 = vpop.f32.mrf.mxu0
        %1208 = vdwg.mxu0
        %v1209 = vpack.c.bf16 %v1206, %v1206
        %s1210 = scalar_lea.vmem %s9, 8
        %v1211 = vld [vmem:[%s1210] sm:$0xf]
        %v1213 = vsel %vm932, %v1209, 0
        %v1216 = vsel %vm967, %v1211, 0
        %1218 = vmatpush.bf16.msra.mxu0 0
        %1219 = vmatpush.bf16.msra.mxu0 0
        %1220 = vmatpush.bf16.msra.mxu0 0
        %1221 = vmatpush.bf16.msra.mxu0 0
        %1222 = vmatpush.bf16.msra.mxu0 0
        %1223 = vmatpush.bf16.msra.mxu0 0
        %1224 = vmatpush.bf16.msra.mxu0 0
        %1225 = vmatpush.bf16.msra.mxu0 %v1216
        %1226 = vmatmul.bf16.gmra.mxu0 %v1213
        %v1227 = vpop.f32.mrf.mxu0
        %v1228 = vadd.f32 0.0, %v1227
        %v1229 = vpop.f32.mrf.mxu0
        %1230 = vdwg.mxu0
        %v1231 = vadd.f32 %v1115, %v1228
        %s1232 = scalar_lea.vmem %s3, 48
        %v1233 = vld [vmem:[%s1232] sm:$0xf]
        %v1234 = vld [vmem:[%s1232 + $0x4] sm:$0xf]
        %v1235 = vld [vmem:[%s1232 + $0x8] sm:$0xf]
        %v1236 = vld [vmem:[%s1232 + $0xc] sm:$0xf]
        %s1237 = scalar_lea.vmem %s6, 3
        %v1238 = vld [vmem:[%s1237] sm:$0x1]
        %v1240 = vperm.slane %v1238, 0
        %v1246 = vunpack.c.l.b16 %v1233
        %v1247 = vunpack.c.l.b16 %v1234
        %v1248 = vunpack.c.l.b16 %v1235
        %v1249 = vunpack.c.l.b16 %v1236
        %v1250 = vpack.c.b16 %v1247, %v1246
        %v1251 = vpack.c.b16 %v1249, %v1248
        %1254 = vmatpush.bf16.msra.mxu0 0
        %1255 = vmatpush.bf16.msra.mxu0 0
        %1256 = vmatpush.bf16.msra.mxu0 0
        %1257 = vmatpush.bf16.msra.mxu0 0
        %1258 = vmatpush.bf16.msra.mxu0 0
        %1259 = vmatpush.bf16.msra.mxu0 0
        %1260 = vmatpush.bf16.msra.mxu0 %v1251
        %1261 = vmatpush.bf16.msra.mxu0 %v1250
        %1262 = vmatmul.bf16.gmra.mxu0 %v910
        %v1263 = vpop.f32.mrf.mxu0
        %v1264 = vadd.f32 %v1240, %v1263
        %v1265 = vpop.f32.mrf.mxu0
        %1266 = vdwg.mxu0
        %v1267 = vmul.f32 %v1264, 0.35355338
        %s1268 = scalar_lea.vmem [#allocation2], 12
        %v1269 = vld [vmem:[%s1268] sm:$0xf]
        %s1270 = scalar_lea.vmem [#allocation3], 12
        %v1271 = vld [vmem:[%s1270] sm:$0xf]
        %v1272 = vpack.c.bf16 %v1267, %v1267
        %v1274 = vsel %vm932, %v1272, 0
        %v1277 = vsel %vm932, %v1269, 0
        %1279 = vmatpush.bf16.xpose.msra.mxu0 0
        %1280 = vmatpush.bf16.xpose.msra.mxu0 0
        %1281 = vmatpush.bf16.xpose.msra.mxu0 0
        %1282 = vmatpush.bf16.xpose.msra.mxu0 0
        %1283 = vmatpush.bf16.xpose.msra.mxu0 0
        %1284 = vmatpush.bf16.xpose.msra.mxu0 0
        %1285 = vmatpush.bf16.xpose.msra.mxu0 0
        %1286 = vmatpush.bf16.xpose.msra.mxu0 %v1277
        %1287 = vmatmul.bf16.gmra.mxu0 %v1274
        %v1288 = vpop.f32.mrf.mxu0
        %v1289 = vadd.f32 %v930, %v1288
        %v1290 = vpop.f32.mrf.mxu0
        %1291 = vdwg.mxu0
        %v1292 = vsel %vm932, %v1289, -inf
        %1293 = vmax.xlane.f32.xlu0 %v1292
        %v1294 = vpop.xlane.xlu0 %1293
        %v1295 = vsub.f32 %v1289, %v1294
        %v1296 = vmul.f32 %v1295, 1.442695
        %v1297 = vpow.pop %v1296
        %v1298 = vsel %vm932, %v1297, 0.0
        %1299 = vadd.xlane.f32.xlu0 %v1298
        %v1300 = vpop.xlane.xlu0 %1299
        %v1301 = vrcp.pop %v1300
        %v1302 = vmul.f32 %v1297, %v1301
        %v1303 = vpack.c.bf16 %v1302, %v1302
        %v1305 = vsel %vm932, %v1303, 0
        %v1308 = vsel %vm967, %v1271, 0
        %1310 = vmatpush.bf16.msra.mxu0 0
        %1311 = vmatpush.bf16.msra.mxu0 0
        %1312 = vmatpush.bf16.msra.mxu0 0
        %1313 = vmatpush.bf16.msra.mxu0 0
        %1314 = vmatpush.bf16.msra.mxu0 0
        %1315 = vmatpush.bf16.msra.mxu0 0
        %1316 = vmatpush.bf16.msra.mxu0 0
        %1317 = vmatpush.bf16.msra.mxu0 %v1308
        %1318 = vmatmul.bf16.gmra.mxu0 %v1305
        %v1319 = vpop.f32.mrf.mxu0
        %v1320 = vadd.f32 0.0, %v1319
        %v1321 = vpop.f32.mrf.mxu0
        %1322 = vdwg.mxu0
        %v1323 = vpack.c.bf16 %v1320, %v1320
        %s1324 = scalar_lea.vmem %s9, 12
        %v1325 = vld [vmem:[%s1324] sm:$0xf]
        %v1327 = vsel %vm932, %v1323, 0
        %v1330 = vsel %vm967, %v1325, 0
        %1332 = vmatpush.bf16.msra.mxu0 0
        %1333 = vmatpush.bf16.msra.mxu0 0
        %1334 = vmatpush.bf16.msra.mxu0 0
        %1335 = vmatpush.bf16.msra.mxu0 0
        %1336 = vmatpush.bf16.msra.mxu0 0
        %1337 = vmatpush.bf16.msra.mxu0 0
        %1338 = vmatpush.bf16.msra.mxu0 0
        %1339 = vmatpush.bf16.msra.mxu0 %v1330
        %1340 = vmatmul.bf16.gmra.mxu0 %v1327
        %v1341 = vpop.f32.mrf.mxu0
        %v1342 = vadd.f32 0.0, %v1341
        %v1343 = vpop.f32.mrf.mxu0
        %1344 = vdwg.mxu0
        %v1345 = vadd.f32 %v1231, %v1342
        %v1346 = vld [vmem:[%s10] sm:$0x1]
        %v1348 = vperm.slane %v1346, 0
        %v1350 = vadd.f32 %v1345, %v1348
        %v1351 = vld [vmem:[%s15] sm:$0x1]
        %v1352 = vld [vmem:[%s15 + $0x1] sm:$0x1]
        %v1353 = vld [vmem:[%s15 + $0x2] sm:$0x1]
        %v1354 = vld [vmem:[%s15 + $0x3] sm:$0x1]
        %v1355 = vadd.f32 %v883, %v1350
        %v1356 = vsel %vm908, %v1355, 0.0
        %1357 = vadd.xlane.f32.xlu0 %v1356
        %v1358 = vpop.xlane.xlu0 %1357
        %v1359 = vrcp.pop 32.0
        %v1360 = vmul.f32 32.0, %v1359
        %v1361 = vsub.f32 1.0, %v1360
        %v1362 = vmul.f32 %v1359, %v1361
        %v1363 = vadd.f32 %v1359, %v1362
        %vm1364 = vweird.f32 %v1359
        %v1365 = vsel %vm1364, %v1359, %v1363
        %v1366 = vmul.f32 %v1358, %v1365
        %v1367 = vsub.f32 %v1355, %v1366
        %v1368 = vmul.f32 %v1367, %v1367
        %v1369 = vsel %vm908, %v1368, 0.0
        %1370 = vadd.xlane.f32.xlu0 %v1369
        %v1371 = vpop.xlane.xlu0 %1370
        %v1372 = vmul.f32 %v1371, %v1365
        %v1373 = vadd.f32 %v1372, 1e-12
        %v1374 = vrsqrt.pop %v1373
        %v1375 = vmul.f32 %v1374, %v1373
        %v1376 = vmul.f32 %v1375, %v1374
        %v1377 = vmul.f32 0.5, %v1376
        %v1378 = vsub.f32 1.5, %v1377
        %v1379 = vmul.f32 %v1374, %v1378
        %vm1380 = vweird.f32 %v1373
        %vm1381 = vweird.f32 %v1374
        %vm1382 = vmor %vm1380, %vm1381
        %v1383 = vsel %vm1382, %v1374, %v1379
        %v1384 = vmul.f32 %v1367, %v1383
        %v1385 = vperm.slane %v1351, 0
        %v1386 = vmul.f32 %v1384, %v1385
        %v1387 = vperm.slane %v1352, 0
        %v1388 = vadd.f32 %v1386, %v1387
        %v1389 = vpack.c.bf16 %v1388, %v1388
        %v1390 = vld [vmem:[%s11] sm:$0xf]
        %v1391 = vld [vmem:[%s11 + $0x4] sm:$0xf]
        %v1392 = vld [vmem:[%s11 + $0x8] sm:$0xf]
        %v1393 = vld [vmem:[%s11 + $0xc] sm:$0xf]
        %v1394 = vld [vmem:[%s12] sm:$0x1]
        %v1396 = vperm.slane %v1394, 0
        %v1402 = vunpack.c.l.b16 %v1390
        %v1403 = vunpack.c.l.b16 %v1391
        %v1404 = vunpack.c.l.b16 %v1392
        %v1405 = vunpack.c.l.b16 %v1393
        %v1406 = vpack.c.b16 %v1403, %v1402
        %v1407 = vpack.c.b16 %v1405, %v1404
        %v1411 = vsel %vm908, %v1389, 0
        %1413 = vmatpush.bf16.msra.mxu0 0
        %1414 = vmatpush.bf16.msra.mxu0 0
        %1415 = vmatpush.bf16.msra.mxu0 0
        %1416 = vmatpush.bf16.msra.mxu0 0
        %1417 = vmatpush.bf16.msra.mxu0 0
        %1418 = vmatpush.bf16.msra.mxu0 0
        %1419 = vmatpush.bf16.msra.mxu0 %v1407
        %1420 = vmatpush.bf16.msra.mxu0 %v1406
        %1421 = vmatmul.bf16.gmra.mxu0 %v1411
        %v1422 = vpop.f32.mrf.mxu0
        %v1423 = vadd.f32 %v1396, %v1422
        %v1424 = vpop.f32.mrf.mxu0
        %1425 = vdwg.mxu0
        %v1426 = vmul.f32 %v1423, 0.5
        %v1427 = vmul.f32 %v1423, 0.044715
        %v1428 = vmul.f32 %v1427, %v1423
        %v1429 = vmul.f32 %v1428, %v1423
        %v1430 = vadd.f32 %v1423, %v1429
        %v1431 = vmul.f32 %v1430, 0.7978846
        %v1432 = vtanh.pop %v1431
        %v1433 = vadd.f32 %v1432, 1.0
        %v1434 = vmul.f32 %v1426, %v1433
        %v1435 = vpack.c.bf16 %v1434, %v1434
        %v1436 = vld [vmem:[%s13] sm:$0xf]
        %v1437 = vld [vmem:[%s13 + $0x4] sm:$0xf]
        %v1438 = vld [vmem:[%s13 + $0x8] sm:$0xf]
        %v1439 = vld [vmem:[%s13 + $0xc] sm:$0xf]
        %v1440 = vld [vmem:[%s13 + $0x10] sm:$0xf]
        %v1441 = vld [vmem:[%s13 + $0x14] sm:$0xf]
        %v1442 = vld [vmem:[%s13 + $0x18] sm:$0xf]
        %v1443 = vld [vmem:[%s13 + $0x1c] sm:$0xf]
        %v1444 = vld [vmem:[%s13 + $0x20] sm:$0xf]
        %v1445 = vld [vmem:[%s13 + $0x24] sm:$0xf]
        %v1446 = vld [vmem:[%s13 + $0x28] sm:$0xf]
        %v1447 = vld [vmem:[%s13 + $0x2c] sm:$0xf]
        %v1448 = vld [vmem:[%s13 + $0x30] sm:$0xf]
        %v1449 = vld [vmem:[%s13 + $0x34] sm:$0xf]
        %v1450 = vld [vmem:[%s13 + $0x38] sm:$0xf]
        %v1451 = vld [vmem:[%s13 + $0x3c] sm:$0xf]
        %v1452 = vld [vmem:[%s14] sm:$0x1]
        %v1454 = vperm.slane %v1452, 0
        %v1472 = vunpack.c.l.b16 %v1436
        %v1473 = vunpack.c.l.b16 %v1437
        %v1474 = vunpack.c.l.b16 %v1438
        %v1475 = vunpack.c.l.b16 %v1439
        %v1476 = vunpack.c.l.b16 %v1440
        %v1477 = vunpack.c.l.b16 %v1441
        %v1478 = vunpack.c.l.b16 %v1442
        %v1479 = vunpack.c.l.b16 %v1443
        %v1480 = vunpack.c.l.b16 %v1444
        %v1481 = vunpack.c.l.b16 %v1445
        %v1482 = vunpack.c.l.b16 %v1446
        %v1483 = vunpack.c.l.b16 %v1447
        %v1484 = vunpack.c.l.b16 %v1448
        %v1485 = vunpack.c.l.b16 %v1449
        %v1486 = vunpack.c.l.b16 %v1450
        %v1487 = vunpack.c.l.b16 %v1451
        %v1488 = vpack.c.b16 %v1473, %v1472
        %v1489 = vpack.c.b16 %v1475, %v1474
        %v1490 = vpack.c.b16 %v1477, %v1476
        %v1491 = vpack.c.b16 %v1479, %v1478
        %v1492 = vpack.c.b16 %v1481, %v1480
        %v1493 = vpack.c.b16 %v1483, %v1482
        %v1494 = vpack.c.b16 %v1485, %v1484
        %v1495 = vpack.c.b16 %v1487, %v1486
        %1504 = vmatpush.bf16.msra.mxu0 %v1495
        %1505 = vmatpush.bf16.msra.mxu0 %v1494
        %1506 = vmatpush.bf16.msra.mxu0 %v1493
        %1507 = vmatpush.bf16.msra.mxu0 %v1492
        %1508 = vmatpush.bf16.msra.mxu0 %v1491
        %1509 = vmatpush.bf16.msra.mxu0 %v1490
        %1510 = vmatpush.bf16.msra.mxu0 %v1489
        %1511 = vmatpush.bf16.msra.mxu0 %v1488
        %1512 = vmatmul.bf16.gmra.mxu0 %v1435
        %v1513 = vpop.f32.mrf.mxu0
        %v1514 = vadd.f32 %v1454, %v1513
        %v1515 = vpop.f32.mrf.mxu0
        %1516 = vdwg.mxu0
        %v1517 = vadd.f32 %v1388, %v1514
        %v1518 = vsel %vm908, %v1517, 0.0
        %1519 = vadd.xlane.f32.xlu0 %v1518
        %v1520 = vpop.xlane.xlu0 %1519
        %v1521 = vmul.f32 %v1520, %v1365
        %v1522 = vsub.f32 %v1517, %v1521
        %v1523 = vmul.f32 %v1522, %v1522
        %v1524 = vsel %vm908, %v1523, 0.0
        %1525 = vadd.xlane.f32.xlu0 %v1524
        %v1526 = vpop.xlane.xlu0 %1525
        %v1527 = vmul.f32 %v1526, %v1365
        %v1528 = vadd.f32 %v1527, 1e-12
        %v1529 = vrsqrt.pop %v1528
        %v1530 = vmul.f32 %v1529, %v1528
        %v1531 = vmul.f32 %v1530, %v1529
        %v1532 = vmul.f32 0.5, %v1531
        %v1533 = vsub.f32 1.5, %v1532
        %v1534 = vmul.f32 %v1529, %v1533
        %vm1535 = vweird.f32 %v1528
        %vm1536 = vweird.f32 %v1529
        %vm1537 = vmor %vm1535, %vm1536
        %v1538 = vsel %vm1537, %v1529, %v1534
        %v1539 = vmul.f32 %v1522, %v1538
        %v1540 = vperm.slane %v1353, 0
        %v1541 = vmul.f32 %v1539, %v1540
        %v1542 = vperm.slane %v1354, 0
        %v1543 = vadd.f32 %v1541, %v1542
        %1544 = vst.msk [vmem:[%s558] sm:$0xff] %vm908, %v1543
        %s1545 = sand.u32 %s405, 1
        %s1546 = scalar_lea.sflag [#allocation5], %s1545
        %s1547 = sand.u32 %s405, 1
        %s1548 = smul.addr %s1547, 8
        %s1549 = scalar_lea.vmem [#allocation4], %s1548
        // Predicated region
        $region89: #{tpu_custom_call.1} parent=83 // pred_check
          %p1550 = pneg %p415
        $region90: #{tpu_custom_call.1} parent=83 // pred_check_branch
          %1552 = sbr.rel (%p1550) target = $region92
        $region91: #{tpu_custom_call.1} parent=83 // pred_region
          %1554 = vsyncadd %s1546, 0
          %s1555 = sadd.s32 %s35, %s34
          %s1556 = smul.addr %s1555, 8
          %s1557 = scalar_lea.hbm %s16, %s1556
          %s1559 = sshll.u32 %s1549, 4
          %s1560 = int_to_ptr.vmem [resolvable:$true] %s1559
          %s1561 = sshll.u32 %s1557, 4
          %s1562 = int_to_ptr.hbm [resolvable:$true] %s1561
          %1564 = dma.vmem_to_hbm [thread:$0]  %s1560, 128, %s1562, %s1546
        $region92: #{tpu_custom_call.1} parent=83 // pred_fallthru
          _
      $region84: #{tpu_custom_call.1} parent=5 // pred_fallthru
        _
      %p1565 = scmp.le.s32.totalorder 2, %s25
      // Predicated region
      $region93: #{tpu_custom_call.1} parent=5 // pred_check
        %p1566 = pneg %p1565
      $region94: #{tpu_custom_call.1} parent=5 // pred_check_branch
        %1568 = sbr.rel (%p1566) target = $region96
      $region95: #{tpu_custom_call.1} parent=5 // pred_region
        %s1569 = ssub.s32 %s25, 2
        // Predicated region
        $region97: #{tpu_custom_call.1} parent=95 // pred_check
          %p1570 = pneg %p421
        $region98: #{tpu_custom_call.1} parent=95 // pred_check_branch
          %1572 = sbr.rel (%p1570) target = $region100
        $region99: #{tpu_custom_call.1} parent=95 // pred_region
          %s1573 = sand.u32 %s406, 1
          %s1574 = scalar_lea.sflag [#allocation5], %s1573
          %s1575 = sand.u32 %s406, 1
          %s1576 = smul.addr %s1575, 8
          %s1577 = scalar_lea.vmem [#allocation4], %s1576
          %1579 = dma.done %s1574, 128
        $region100: #{tpu_custom_call.1} parent=95 // pred_fallthru
          _
      $region96: #{tpu_custom_call.1} parent=5 // pred_fallthru
        _
    $region6: #{tpu_custom_call.1} parent=1 // loop_footer
      %s29 = sadd.s32 1, %s25
    $region7: #{tpu_custom_call.1} parent=1 // loop_footer_branch
      %24 = sbr.rel target = $region3
    $region8: #{tpu_custom_call.1} parent=1 // loop_exit
      _
    %1580 = vsyncpa [#allocation5], 1
    %s1581 = scalar_lea.sflag [#allocation5], 1
    %1582 = vsyncpa %s1581, 1

</llo_original>
